<compile_context>
chip_gen: v7x
topology: tpu7x:2x2x1
jax: 0.10.0
libtpu: 0.0.40
codegen_flags: <defaults>
</compile_context>

<pallas_src>
import functools

import jax
import jax.numpy as jnp
import numpy as np
from jax.experimental import pallas as pl
from jax.experimental.pallas import tpu as pltpu


# ---------------------------------------------------------------------------
# Bounded-range sine (valid for |y| <~ 1e4; SIREN args are <~ 60).
# ---------------------------------------------------------------------------
_INV_PI = 0.3183098861837907          # 1/pi
_PI_A = 3.140625                      # pi = PI_A + PI_B + PI_C (Cody-Waite,
_PI_B = 0.0009670257568359375         #  k*PI_A and k*PI_B exact in f32 for
_PI_C = 6.277114152908325e-07         #  the small k seen here)
# Odd degree-9 minimax coefficients for sin(r), r in [-pi/2, pi/2].
_S1 = -0.166666597127914428710938
_S2 = 0.00833307858556509017944336
_S3 = -0.000198106907191686332226
_S4 = 2.6083159809786593541503e-06


def _bounded_sin(y):
    """sin(y) via k=round(y/pi) reduction + degree-9 odd polynomial (all VPU)."""
    k = jnp.floor(y * _INV_PI + 0.5)           # nearest integer multiple of pi
    r = y - k * _PI_A                          # 3-term Cody-Waite reduction:
    r = r - k * _PI_B                          #   r in [-pi/2, pi/2]
    r = r - k * _PI_C
    parity = k - 2.0 * jnp.floor(0.5 * k)      # k mod 2 in {0., 1.}
    sign = 1.0 - 2.0 * parity                  # (-1)**k
    r2 = r * r
    s = _S4
    s = s * r2 + _S3
    s = s * r2 + _S2
    s = s * r2 + _S1
    return sign * (r + (r * r2) * s)


# ---------------------------------------------------------------------------
# Fused kernel
# ---------------------------------------------------------------------------
def _siren_fused_kernel(*refs, sins):
    """refs = (x_ref, w0_ref, b0_ref, w1_ref, b1_ref, ..., o_ref).

    x_ref : (in_f, TILE_N)    feature-major activation tile
    wl_ref: (out_f_l, in_f_l) resident weight (omega already folded in for
                              sine layers)
    bl_ref: (out_f_l, 1)      resident bias (omega folded in for sine layers)
    o_ref : (out_f, TILE_N)   lane-dense output tile
    """
    x_ref = refs[0]
    o_ref = refs[-1]
    wb_refs = refs[1:-1]

    h = x_ref[...]                                      # f32 (in_f, TILE_N)
    for l, apply_sin in enumerate(sins):
        w = wb_refs[2 * l][...]                         # (out_f, in_f)
        b = wb_refs[2 * l + 1][...]                     # (out_f, 1) lane-bcast
        # MXU matmul, lane-dense TILE_N result dim, f32 accumulate.
        y = jnp.dot(w, h, preferred_element_type=jnp.float32) + b
        # Sine layers: omega is pre-folded into w/b, so just sin(y).
        h = _bounded_sin(y) if apply_sin else y
    o_ref[...] = h.astype(o_ref.dtype)


def siren_forward(coords, params, *, tile_n=1024):
    """Fused SIREN forward.  coords: (N, in_features) f32 -> (N, out_features)."""
    n, in_f = coords.shape
    out_f = params[-1]["w"].shape[0]

    grid = pl.cdiv(n, tile_n)
    n_pad = grid * tile_n

    xt = coords.astype(jnp.float32).T                   # (in_f, N) feature-major
    if n_pad != n:
        xt = jnp.pad(xt, ((0, 0), (0, n_pad - n)))      # pad ragged tail only

    sins = tuple(bool(p["sin"]) for p in params)

    wb_inputs, wb_specs = [], []
    for p in params:
        w = p["w"].astype(jnp.float32)
        b = p["b"].astype(jnp.float32).reshape(-1, 1)
        if p["sin"]:
            # Fold omega into the tiny resident constants (MXU side has huge
            # slack); removes a full-width vmul per sine layer from the VALU.
            omega = jnp.float32(p["omega"])
            w = w * omega
            b = b * omega
        wb_inputs += [w, b]
        # Constant index_map -> block stays resident in VMEM across the grid.
        wb_specs += [
            pl.BlockSpec(w.shape, lambda i: (0, 0)),
            pl.BlockSpec(b.shape, lambda i: (0, 0)),
        ]

    kernel = functools.partial(_siren_fused_kernel, sins=sins)

    out_t = pl.pallas_call(
        kernel,
        out_shape=jax.ShapeDtypeStruct((out_f, n_pad), jnp.float32),
        grid_spec=pl.GridSpec(
            grid=(grid,),
            in_specs=[pl.BlockSpec((in_f, tile_n), lambda i: (0, i))] + wb_specs,
            out_specs=pl.BlockSpec((out_f, tile_n), lambda i: (0, i)),
        ),
        compiler_params=pltpu.CompilerParams(
            dimension_semantics=("parallel",),
        ),
    )(xt, *wb_inputs)

    return out_t[:, :n].T  # back to (N, out_features); free for out_f == 1


# ---------------------------------------------------------------------------
# Parameter init (matches the PyTorch Siren init) and pure-JAX reference
# ---------------------------------------------------------------------------
def init_siren_params(
    key,
    in_features,
    hidden_features,
    hidden_layers,
    out_features,
    first_omega_0=30.0,
    hidden_omega_0=30.0,
):
    """Matches the PyTorch Siren init ranges. Weights stored (out, in)."""

    def _uniform(k, shape, lo, hi):
        return jax.random.uniform(k, shape, dtype=jnp.float32, minval=lo, maxval=hi)

    params = []

    # first sine layer
    key, kw, kb = jax.random.split(key, 3)
    bound_w = 1.0 / in_features
    bound_b = 1.0 / np.sqrt(in_features)  # nn.Linear default bias init
    params.append(
        dict(
            w=_uniform(kw, (hidden_features, in_features), -bound_w, bound_w),
            b=_uniform(kb, (hidden_features,), -bound_b, bound_b),
            omega=first_omega_0,
            sin=True,
        )
    )

    # hidden sine layers
    for _ in range(hidden_layers):
        key, kw, kb = jax.random.split(key, 3)
        bound_w = np.sqrt(6.0 / hidden_features) / hidden_omega_0
        bound_b = 1.0 / np.sqrt(hidden_features)
        params.append(
            dict(
                w=_uniform(kw, (hidden_features, hidden_features), -bound_w, bound_w),
                b=_uniform(kb, (hidden_features,), -bound_b, bound_b),
                omega=hidden_omega_0,
                sin=True,
            )
        )

    # outermost linear (outermost_linear=True)
    key, kw, kb = jax.random.split(key, 3)
    bound_w = np.sqrt(6.0 / hidden_features) / hidden_omega_0
    bound_b = 1.0 / np.sqrt(hidden_features)
    params.append(
        dict(
            w=_uniform(kw, (out_features, hidden_features), -bound_w, bound_w),
            b=_uniform(kb, (out_features,), -bound_b, bound_b),
            omega=hidden_omega_0,
            sin=False,
        )
    )
    return params


def siren_reference(coords, params):
    x = coords
    for layer in params:
        y = x @ layer["w"].T + layer["b"][None, :]
        x = jnp.sin(layer["omega"] * y) if layer["sin"] else y
    return x


if __name__ == "__main__":
    # SIREN-typical small shapes: 2-D coords -> 32 hidden, 2 hidden layers -> 1 out.
    in_features = 2
    hidden_features = 32
    hidden_layers = 2
    out_features = 1
    n_points = 2000  # not a multiple of tile_n -> exercises padding; grid = 2

    key = jax.random.PRNGKey(0)
    key, kcoords = jax.random.split(key)
    coords = jax.random.uniform(
        kcoords, (n_points, in_features), dtype=jnp.float32, minval=-1.0, maxval=1.0
    )

    params = init_siren_params(
        key,
        in_features,
        hidden_features,
        hidden_layers,
        out_features,
        first_omega_0=30.0,
        hidden_omega_0=30.0,
    )

    out = siren_forward(coords, params, tile_n=1024)
    out = jax.block_until_ready(out)

    ref = siren_reference(coords, params)
    # Tolerance slightly above 1e-5: the omega fold and the custom degree-9
    # sine each introduce ~ulp-level differences vs. the XLA sin path through
    # three sine layers (omega=30 amplifies argument rounding); the final
    # small-weight linear attenuates them back to the ~1e-6 level typically.
    np.testing.assert_allclose(np.asarray(out), np.asarray(ref), rtol=2e-5, atol=2e-5)

    assert out.shape == (n_points, out_features)
    print("KERNEL_OK")
</pallas_src>

<mosaic_0001>
module attributes {stable_mosaic.version = 11 : i64} {
  func.func @_siren_fused_kernel(%arg0: i32, %arg1: memref<2x1024xf32, #tpu.memory_space<vmem>>, %arg2: memref<32x2xf32, #tpu.memory_space<vmem>>, %arg3: memref<32x1xf32, #tpu.memory_space<vmem>>, %arg4: memref<32x32xf32, #tpu.memory_space<vmem>>, %arg5: memref<32x1xf32, #tpu.memory_space<vmem>>, %arg6: memref<32x32xf32, #tpu.memory_space<vmem>>, %arg7: memref<32x1xf32, #tpu.memory_space<vmem>>, %arg8: memref<1x32xf32, #tpu.memory_space<vmem>>, %arg9: memref<1x1xf32, #tpu.memory_space<vmem>>, %arg10: memref<1x1024xf32, #tpu.memory_space<vmem>>) attributes {dimension_semantics = [#tpu.dimension_semantics<parallel>], iteration_bounds = array<i64: 2>, scalar_prefetch = 0 : i64, scratch_operands = 0 : i64, tpu.core_type = #tpu.core_type<tc>, window_params = [{transform_indices = @transform_0, window_bounds = array<i64: 2, 1024>}, {pipeline_mode = #tpu.pipeline_mode<synchronous>, transform_indices = @transform_1, window_bounds = array<i64: 32, 2>}, {pipeline_mode = #tpu.pipeline_mode<synchronous>, transform_indices = @transform_2, window_bounds = array<i64: 32, 1>}, {pipeline_mode = #tpu.pipeline_mode<synchronous>, transform_indices = @transform_3, window_bounds = array<i64: 32, 32>}, {pipeline_mode = #tpu.pipeline_mode<synchronous>, transform_indices = @transform_4, window_bounds = array<i64: 32, 1>}, {pipeline_mode = #tpu.pipeline_mode<synchronous>, transform_indices = @transform_5, window_bounds = array<i64: 32, 32>}, {pipeline_mode = #tpu.pipeline_mode<synchronous>, transform_indices = @transform_6, window_bounds = array<i64: 32, 1>}, {pipeline_mode = #tpu.pipeline_mode<synchronous>, transform_indices = @transform_7, window_bounds = array<i64: 1, 32>}, {pipeline_mode = #tpu.pipeline_mode<synchronous>, transform_indices = @transform_8, window_bounds = array<i64: 1, 1>}, {transform_indices = @transform_9, window_bounds = array<i64: 1, 1024>}]} {
    %c0 = arith.constant 0 : index
    %c0_0 = arith.constant 0 : index
    %0 = vector.load %arg1[%c0, %c0_0] : memref<2x1024xf32, #tpu.memory_space<vmem>>, vector<2x1024xf32>
    %c0_1 = arith.constant 0 : index
    %c0_2 = arith.constant 0 : index
    %1 = vector.load %arg2[%c0_1, %c0_2] : memref<32x2xf32, #tpu.memory_space<vmem>>, vector<32x2xf32>
    %c0_3 = arith.constant 0 : index
    %c0_4 = arith.constant 0 : index
    %2 = vector.load %arg3[%c0_3, %c0_4] : memref<32x1xf32, #tpu.memory_space<vmem>>, vector<32x1xf32>
    %cst = arith.constant dense<0.000000e+00> : vector<32x1024xf32>
    %3 = tpu.matmul %1, %0, %cst {dimension_numbers = #tpu.dot_dimension_numbers<[1], [0], [0], [1], [0, 0, 1, 1], [], []>} : vector<32x2xf32>, vector<2x1024xf32>, vector<32x1024xf32> -> vector<32x1024xf32>
    %4 = vector.broadcast %2 : vector<32x1xf32> to vector<32x1024xf32>
    %5 = arith.addf %3, %4 : vector<32x1024xf32>
    %cst_5 = arith.constant 0.318309873 : f32
    %6 = vector.broadcast %cst_5 : f32 to vector<32x1024xf32>
    %7 = arith.mulf %5, %6 : vector<32x1024xf32>
    %cst_6 = arith.constant 5.000000e-01 : f32
    %8 = vector.broadcast %cst_6 : f32 to vector<32x1024xf32>
    %9 = arith.addf %7, %8 : vector<32x1024xf32>
    %10 = math.floor %9 : vector<32x1024xf32>
    %cst_7 = arith.constant 3.140625 : f32
    %11 = vector.broadcast %cst_7 : f32 to vector<32x1024xf32>
    %12 = arith.mulf %10, %11 : vector<32x1024xf32>
    %13 = arith.subf %5, %12 : vector<32x1024xf32>
    %cst_8 = arith.constant 9.67025756E-4 : f32
    %14 = vector.broadcast %cst_8 : f32 to vector<32x1024xf32>
    %15 = arith.mulf %10, %14 : vector<32x1024xf32>
    %16 = arith.subf %13, %15 : vector<32x1024xf32>
    %cst_9 = arith.constant 6.27711415E-7 : f32
    %17 = vector.broadcast %cst_9 : f32 to vector<32x1024xf32>
    %18 = arith.mulf %10, %17 : vector<32x1024xf32>
    %19 = arith.subf %16, %18 : vector<32x1024xf32>
    %cst_10 = arith.constant 5.000000e-01 : f32
    %20 = vector.broadcast %cst_10 : f32 to vector<32x1024xf32>
    %21 = arith.mulf %20, %10 : vector<32x1024xf32>
    %22 = math.floor %21 : vector<32x1024xf32>
    %cst_11 = arith.constant 2.000000e+00 : f32
    %23 = vector.broadcast %cst_11 : f32 to vector<32x1024xf32>
    %24 = arith.mulf %23, %22 : vector<32x1024xf32>
    %25 = arith.subf %10, %24 : vector<32x1024xf32>
    %cst_12 = arith.constant 2.000000e+00 : f32
    %26 = vector.broadcast %cst_12 : f32 to vector<32x1024xf32>
    %27 = arith.mulf %26, %25 : vector<32x1024xf32>
    %cst_13 = arith.constant 1.000000e+00 : f32
    %28 = vector.broadcast %cst_13 : f32 to vector<32x1024xf32>
    %29 = arith.subf %28, %27 : vector<32x1024xf32>
    %30 = arith.mulf %19, %19 : vector<32x1024xf32>
    %cst_14 = arith.constant 2.60831598E-6 : f32
    %31 = vector.broadcast %cst_14 : f32 to vector<32x1024xf32>
    %32 = arith.mulf %31, %30 : vector<32x1024xf32>
    %cst_15 = arith.constant -1.98106907E-4 : f32
    %33 = vector.broadcast %cst_15 : f32 to vector<32x1024xf32>
    %34 = arith.addf %32, %33 : vector<32x1024xf32>
    %35 = arith.mulf %34, %30 : vector<32x1024xf32>
    %cst_16 = arith.constant 0.00833307859 : f32
    %36 = vector.broadcast %cst_16 : f32 to vector<32x1024xf32>
    %37 = arith.addf %35, %36 : vector<32x1024xf32>
    %38 = arith.mulf %37, %30 : vector<32x1024xf32>
    %cst_17 = arith.constant -0.166666597 : f32
    %39 = vector.broadcast %cst_17 : f32 to vector<32x1024xf32>
    %40 = arith.addf %38, %39 : vector<32x1024xf32>
    %41 = arith.mulf %19, %30 : vector<32x1024xf32>
    %42 = arith.mulf %41, %40 : vector<32x1024xf32>
    %43 = arith.addf %19, %42 : vector<32x1024xf32>
    %44 = arith.mulf %29, %43 : vector<32x1024xf32>
    %c0_18 = arith.constant 0 : index
    %c0_19 = arith.constant 0 : index
    %45 = vector.load %arg4[%c0_18, %c0_19] : memref<32x32xf32, #tpu.memory_space<vmem>>, vector<32x32xf32>
    %c0_20 = arith.constant 0 : index
    %c0_21 = arith.constant 0 : index
    %46 = vector.load %arg5[%c0_20, %c0_21] : memref<32x1xf32, #tpu.memory_space<vmem>>, vector<32x1xf32>
    %cst_22 = arith.constant dense<0.000000e+00> : vector<32x1024xf32>
    %47 = tpu.matmul %45, %44, %cst_22 {dimension_numbers = #tpu.dot_dimension_numbers<[1], [0], [0], [1], [0, 0, 1, 1], [], []>} : vector<32x32xf32>, vector<32x1024xf32>, vector<32x1024xf32> -> vector<32x1024xf32>
    %48 = vector.broadcast %46 : vector<32x1xf32> to vector<32x1024xf32>
    %49 = arith.addf %47, %48 : vector<32x1024xf32>
    %cst_23 = arith.constant 0.318309873 : f32
    %50 = vector.broadcast %cst_23 : f32 to vector<32x1024xf32>
    %51 = arith.mulf %49, %50 : vector<32x1024xf32>
    %cst_24 = arith.constant 5.000000e-01 : f32
    %52 = vector.broadcast %cst_24 : f32 to vector<32x1024xf32>
    %53 = arith.addf %51, %52 : vector<32x1024xf32>
    %54 = math.floor %53 : vector<32x1024xf32>
    %cst_25 = arith.constant 3.140625 : f32
    %55 = vector.broadcast %cst_25 : f32 to vector<32x1024xf32>
    %56 = arith.mulf %54, %55 : vector<32x1024xf32>
    %57 = arith.subf %49, %56 : vector<32x1024xf32>
    %cst_26 = arith.constant 9.67025756E-4 : f32
    %58 = vector.broadcast %cst_26 : f32 to vector<32x1024xf32>
    %59 = arith.mulf %54, %58 : vector<32x1024xf32>
    %60 = arith.subf %57, %59 : vector<32x1024xf32>
    %cst_27 = arith.constant 6.27711415E-7 : f32
    %61 = vector.broadcast %cst_27 : f32 to vector<32x1024xf32>
    %62 = arith.mulf %54, %61 : vector<32x1024xf32>
    %63 = arith.subf %60, %62 : vector<32x1024xf32>
    %cst_28 = arith.constant 5.000000e-01 : f32
    %64 = vector.broadcast %cst_28 : f32 to vector<32x1024xf32>
    %65 = arith.mulf %64, %54 : vector<32x1024xf32>
    %66 = math.floor %65 : vector<32x1024xf32>
    %cst_29 = arith.constant 2.000000e+00 : f32
    %67 = vector.broadcast %cst_29 : f32 to vector<32x1024xf32>
    %68 = arith.mulf %67, %66 : vector<32x1024xf32>
    %69 = arith.subf %54, %68 : vector<32x1024xf32>
    %cst_30 = arith.constant 2.000000e+00 : f32
    %70 = vector.broadcast %cst_30 : f32 to vector<32x1024xf32>
    %71 = arith.mulf %70, %69 : vector<32x1024xf32>
    %cst_31 = arith.constant 1.000000e+00 : f32
    %72 = vector.broadcast %cst_31 : f32 to vector<32x1024xf32>
    %73 = arith.subf %72, %71 : vector<32x1024xf32>
    %74 = arith.mulf %63, %63 : vector<32x1024xf32>
    %cst_32 = arith.constant 2.60831598E-6 : f32
    %75 = vector.broadcast %cst_32 : f32 to vector<32x1024xf32>
    %76 = arith.mulf %75, %74 : vector<32x1024xf32>
    %cst_33 = arith.constant -1.98106907E-4 : f32
    %77 = vector.broadcast %cst_33 : f32 to vector<32x1024xf32>
    %78 = arith.addf %76, %77 : vector<32x1024xf32>
    %79 = arith.mulf %78, %74 : vector<32x1024xf32>
    %cst_34 = arith.constant 0.00833307859 : f32
    %80 = vector.broadcast %cst_34 : f32 to vector<32x1024xf32>
    %81 = arith.addf %79, %80 : vector<32x1024xf32>
    %82 = arith.mulf %81, %74 : vector<32x1024xf32>
    %cst_35 = arith.constant -0.166666597 : f32
    %83 = vector.broadcast %cst_35 : f32 to vector<32x1024xf32>
    %84 = arith.addf %82, %83 : vector<32x1024xf32>
    %85 = arith.mulf %63, %74 : vector<32x1024xf32>
    %86 = arith.mulf %85, %84 : vector<32x1024xf32>
    %87 = arith.addf %63, %86 : vector<32x1024xf32>
    %88 = arith.mulf %73, %87 : vector<32x1024xf32>
    %c0_36 = arith.constant 0 : index
    %c0_37 = arith.constant 0 : index
    %89 = vector.load %arg6[%c0_36, %c0_37] : memref<32x32xf32, #tpu.memory_space<vmem>>, vector<32x32xf32>
    %c0_38 = arith.constant 0 : index
    %c0_39 = arith.constant 0 : index
    %90 = vector.load %arg7[%c0_38, %c0_39] : memref<32x1xf32, #tpu.memory_space<vmem>>, vector<32x1xf32>
    %cst_40 = arith.constant dense<0.000000e+00> : vector<32x1024xf32>
    %91 = tpu.matmul %89, %88, %cst_40 {dimension_numbers = #tpu.dot_dimension_numbers<[1], [0], [0], [1], [0, 0, 1, 1], [], []>} : vector<32x32xf32>, vector<32x1024xf32>, vector<32x1024xf32> -> vector<32x1024xf32>
    %92 = vector.broadcast %90 : vector<32x1xf32> to vector<32x1024xf32>
    %93 = arith.addf %91, %92 : vector<32x1024xf32>
    %cst_41 = arith.constant 0.318309873 : f32
    %94 = vector.broadcast %cst_41 : f32 to vector<32x1024xf32>
    %95 = arith.mulf %93, %94 : vector<32x1024xf32>
    %cst_42 = arith.constant 5.000000e-01 : f32
    %96 = vector.broadcast %cst_42 : f32 to vector<32x1024xf32>
    %97 = arith.addf %95, %96 : vector<32x1024xf32>
    %98 = math.floor %97 : vector<32x1024xf32>
    %cst_43 = arith.constant 3.140625 : f32
    %99 = vector.broadcast %cst_43 : f32 to vector<32x1024xf32>
    %100 = arith.mulf %98, %99 : vector<32x1024xf32>
    %101 = arith.subf %93, %100 : vector<32x1024xf32>
    %cst_44 = arith.constant 9.67025756E-4 : f32
    %102 = vector.broadcast %cst_44 : f32 to vector<32x1024xf32>
    %103 = arith.mulf %98, %102 : vector<32x1024xf32>
    %104 = arith.subf %101, %103 : vector<32x1024xf32>
    %cst_45 = arith.constant 6.27711415E-7 : f32
    %105 = vector.broadcast %cst_45 : f32 to vector<32x1024xf32>
    %106 = arith.mulf %98, %105 : vector<32x1024xf32>
    %107 = arith.subf %104, %106 : vector<32x1024xf32>
    %cst_46 = arith.constant 5.000000e-01 : f32
    %108 = vector.broadcast %cst_46 : f32 to vector<32x1024xf32>
    %109 = arith.mulf %108, %98 : vector<32x1024xf32>
    %110 = math.floor %109 : vector<32x1024xf32>
    %cst_47 = arith.constant 2.000000e+00 : f32
    %111 = vector.broadcast %cst_47 : f32 to vector<32x1024xf32>
    %112 = arith.mulf %111, %110 : vector<32x1024xf32>
    %113 = arith.subf %98, %112 : vector<32x1024xf32>
    %cst_48 = arith.constant 2.000000e+00 : f32
    %114 = vector.broadcast %cst_48 : f32 to vector<32x1024xf32>
    %115 = arith.mulf %114, %113 : vector<32x1024xf32>
    %cst_49 = arith.constant 1.000000e+00 : f32
    %116 = vector.broadcast %cst_49 : f32 to vector<32x1024xf32>
    %117 = arith.subf %116, %115 : vector<32x1024xf32>
    %118 = arith.mulf %107, %107 : vector<32x1024xf32>
    %cst_50 = arith.constant 2.60831598E-6 : f32
    %119 = vector.broadcast %cst_50 : f32 to vector<32x1024xf32>
    %120 = arith.mulf %119, %118 : vector<32x1024xf32>
    %cst_51 = arith.constant -1.98106907E-4 : f32
    %121 = vector.broadcast %cst_51 : f32 to vector<32x1024xf32>
    %122 = arith.addf %120, %121 : vector<32x1024xf32>
    %123 = arith.mulf %122, %118 : vector<32x1024xf32>
    %cst_52 = arith.constant 0.00833307859 : f32
    %124 = vector.broadcast %cst_52 : f32 to vector<32x1024xf32>
    %125 = arith.addf %123, %124 : vector<32x1024xf32>
    %126 = arith.mulf %125, %118 : vector<32x1024xf32>
    %cst_53 = arith.constant -0.166666597 : f32
    %127 = vector.broadcast %cst_53 : f32 to vector<32x1024xf32>
    %128 = arith.addf %126, %127 : vector<32x1024xf32>
    %129 = arith.mulf %107, %118 : vector<32x1024xf32>
    %130 = arith.mulf %129, %128 : vector<32x1024xf32>
    %131 = arith.addf %107, %130 : vector<32x1024xf32>
    %132 = arith.mulf %117, %131 : vector<32x1024xf32>
    %c0_54 = arith.constant 0 : index
    %c0_55 = arith.constant 0 : index
    %133 = vector.load %arg8[%c0_54, %c0_55] : memref<1x32xf32, #tpu.memory_space<vmem>>, vector<1x32xf32>
    %c0_56 = arith.constant 0 : index
    %c0_57 = arith.constant 0 : index
    %134 = vector.load %arg9[%c0_56, %c0_57] : memref<1x1xf32, #tpu.memory_space<vmem>>, vector<1x1xf32>
    %cst_58 = arith.constant dense<0.000000e+00> : vector<1x1024xf32>
    %135 = tpu.matmul %133, %132, %cst_58 {dimension_numbers = #tpu.dot_dimension_numbers<[1], [0], [0], [1], [0, 0, 1, 1], [], []>} : vector<1x32xf32>, vector<32x1024xf32>, vector<1x1024xf32> -> vector<1x1024xf32>
    %136 = vector.broadcast %134 : vector<1x1xf32> to vector<1x1024xf32>
    %137 = arith.addf %135, %136 : vector<1x1024xf32>
    %c0_59 = arith.constant 0 : index
    %c0_60 = arith.constant 0 : index
    %138 = vector.load %arg10[%c0_59, %c0_60] : memref<1x1024xf32, #tpu.memory_space<vmem>>, vector<1x1024xf32>
    tpu.vector_store %arg10[%c0_59, %c0_60], %137 {strides = array<i32>} : memref<1x1024xf32, #tpu.memory_space<vmem>>, vector<1x1024xf32>,
    return
  }
  func.func @transform_0(%arg0: i32) -> (i32, i32) {
    %c0_i32 = arith.constant 0 : i32
    %c0_i32_0 = arith.constant 0 : i32
    return %c0_i32, %arg0 : i32, i32
  }
  func.func @transform_1(%arg0: i32) -> (i32, i32) {
    %c0_i32 = arith.constant 0 : i32
    %c0_i32_0 = arith.constant 0 : i32
    %c0_i32_1 = arith.constant 0 : i32
    return %c0_i32, %c0_i32_0 : i32, i32
  }
  func.func @transform_2(%arg0: i32) -> (i32, i32) {
    %c0_i32 = arith.constant 0 : i32
    %c0_i32_0 = arith.constant 0 : i32
    %c0_i32_1 = arith.constant 0 : i32
    return %c0_i32, %c0_i32_0 : i32, i32
  }
  func.func @transform_3(%arg0: i32) -> (i32, i32) {
    %c0_i32 = arith.constant 0 : i32
    %c0_i32_0 = arith.constant 0 : i32
    %c0_i32_1 = arith.constant 0 : i32
    return %c0_i32, %c0_i32_0 : i32, i32
  }
  func.func @transform_4(%arg0: i32) -> (i32, i32) {
    %c0_i32 = arith.constant 0 : i32
    %c0_i32_0 = arith.constant 0 : i32
    %c0_i32_1 = arith.constant 0 : i32
    return %c0_i32, %c0_i32_0 : i32, i32
  }
  func.func @transform_5(%arg0: i32) -> (i32, i32) {
    %c0_i32 = arith.constant 0 : i32
    %c0_i32_0 = arith.constant 0 : i32
    %c0_i32_1 = arith.constant 0 : i32
    return %c0_i32, %c0_i32_0 : i32, i32
  }
  func.func @transform_6(%arg0: i32) -> (i32, i32) {
    %c0_i32 = arith.constant 0 : i32
    %c0_i32_0 = arith.constant 0 : i32
    %c0_i32_1 = arith.constant 0 : i32
    return %c0_i32, %c0_i32_0 : i32, i32
  }
  func.func @transform_7(%arg0: i32) -> (i32, i32) {
    %c0_i32 = arith.constant 0 : i32
    %c0_i32_0 = arith.constant 0 : i32
    %c0_i32_1 = arith.constant 0 : i32
    return %c0_i32, %c0_i32_0 : i32, i32
  }
  func.func @transform_8(%arg0: i32) -> (i32, i32) {
    %c0_i32 = arith.constant 0 : i32
    %c0_i32_0 = arith.constant 0 : i32
    %c0_i32_1 = arith.constant 0 : i32
    return %c0_i32, %c0_i32_0 : i32, i32
  }
  func.func @transform_9(%arg0: i32) -> (i32, i32) {
    %c0_i32 = arith.constant 0 : i32
    %c0_i32_0 = arith.constant 0 : i32
    return %c0_i32, %arg0 : i32, i32
  }
}

</mosaic_0001>

<llo_original>
// kernel: tpu_custom_call.1
$region0: #{tpu_custom_call.1}
  #allocation0 [shape = 'u32[]', space=smem, size = 0x4, offset = 0x4, fixed_abs, tag = 'smem constant byte address 0x4 - core index']
  #allocation1 [shape = 'u32[144,128]{1,0:T(1,128)}', space=vmem, size = 0x12000, scoped, tag = 'internal scratch']
  #allocation2 [shape = 'f32[1,1]{1,0:T(1,128)S(1)}', space=vmem, size = 0x200, scoped, tag = 'scoped memory for tpu_custom_call.1']
  %s0 = inlined_call_operand.vmem [shape: f32[2,2048], index: 0, kind: input, shape index: {}]
  %s1 = inlined_call_operand.vmem [shape: f32[32,2], index: 1, kind: input, shape index: {}]
  %s2 = inlined_call_operand.vmem [shape: f32[32,1], index: 2, kind: input, shape index: {}]
  %s3 = inlined_call_operand.vmem [shape: f32[32,32], index: 3, kind: input, shape index: {}]
  %s4 = inlined_call_operand.vmem [shape: f32[32,1], index: 4, kind: input, shape index: {}]
  %s5 = inlined_call_operand.vmem [shape: f32[32,32], index: 5, kind: input, shape index: {}]
  %s6 = inlined_call_operand.vmem [shape: f32[32,1], index: 6, kind: input, shape index: {}]
  %s7 = inlined_call_operand.vmem [shape: f32[1,32], index: 7, kind: input, shape index: {}]
  %s8 = inlined_call_operand.<no memory space> [shape: f32[1,1], index: 8, kind: input, shape index: {}]
  %s9 = inlined_call_operand.hbm [shape: f32[1,2048], index: 9, kind: output, shape index: {}]
  %s10 = sld [smem:[#allocation0]]
  $region69: #{tpu_custom_call.1} parent=0
    _
  %s12 = ssub.s32 1, %s10
  %s13 = scalar_select 0, %s12, %s10
  %v14 = vstv %s8
  %15 = vst [vmem:[#allocation2] sm:$0x1] %v14
  $region1: #{tpu_custom_call.1} parent=0
    #allocation3 [shape = 'u8[8192]{0}', space=vmem, size = 0x2000, scoped, tag = 'output window, operand 0']
    #allocation4 [shape = 's32[2]{0}', space=sflag, size = 0x8, scoped, tag = 'scoped memory for tpu_custom_call.1']
    %16 = vsyncpa [#allocation4], 0
    %s17 = scalar_lea.sflag [#allocation4], 1
    %18 = vsyncpa %s17, 0
    loop: start=0, step=1, limit=4
    $region2: #{tpu_custom_call.1} parent=1 // loop_pre_header
      _
    $region3: #{tpu_custom_call.1} parent=1 // loop_header
      %s20 = sphi 0, %s24
      %p21 = scmp.ge.s32.totalorder %s20, 4
      %s30 = sphi 0, %s32
      %s33 = sphi 0, %s30
      %s34 = sphi 0, %s33
      %s50 = sphi 0, %s34
      %s54 = sphi 0, %s54
      %s56 = sphi 0, %s54
      %s57 = sphi 0, %s56
      %s71 = sphi 0, %s57
      %s75 = sphi 0, %s75
      %s77 = sphi 0, %s75
      %s78 = sphi 0, %s77
      %s92 = sphi 0, %s78
      %s96 = sphi 0, %s96
      %s98 = sphi 0, %s96
      %s99 = sphi 0, %s98
      %s113 = sphi 0, %s99
      %s117 = sphi 0, %s117
      %s119 = sphi 0, %s117
      %s120 = sphi 0, %s119
      %s134 = sphi 0, %s120
      %s138 = sphi 0, %s138
      %s140 = sphi 0, %s138
      %s141 = sphi 0, %s140
      %s155 = sphi 0, %s141
      %s159 = sphi 0, %s159
      %s161 = sphi 0, %s159
      %s162 = sphi 0, %s161
      %s176 = sphi 0, %s162
      %s180 = sphi 0, %s180
      %s182 = sphi 0, %s180
      %s183 = sphi 0, %s182
      %s197 = sphi 0, %s183
      %s201 = sphi 0, %s201
      %s203 = sphi 0, %s201
      %s204 = sphi 0, %s203
      %s218 = sphi 0, %s204
      %s224 = sphi 0, %s226
      %s227 = sphi 0, %s224
      %s228 = sphi 0, %s227
      %s244 = sphi 0, %s228
    $region4: #{tpu_custom_call.1} parent=1 // loop_header_branch
      %23 = sbr.rel (%p21) target = $region8
    $region5: #{tpu_custom_call.1} parent=1 // loop_body
      %s25 = ssub.s32 %s20, 1
      %s26 = ssub.s32 %s20, 2
      %s27 = sadd.s32 %s20, 1
      %s28 = ssub.s32 %s20, %s27
      %p29 = scmp.eq.s32.totalorder %s28, 0
      %s31 = sadd.s32 %s30, 1
      %s32 = scalar_select %p29, %s30, %s31
      %p35 = pneg %p29
      %p36 = scmp.eq.s32.totalorder %s20, 1
      %p37 = por %p35, %p36
      %p38 = scmp.ne.s32.totalorder %s30, %s33
      %p39 = scmp.eq.s32.totalorder %s20, 0
      %p40 = por %p38, %p39
      %p41 = scmp.ne.s32.totalorder %s30, %s33
      %p42 = scmp.eq.s32.totalorder %s25, 1
      %p43 = por %p41, %p42
      %p44 = scmp.ne.s32.totalorder %s33, %s34
      %p45 = scmp.eq.s32.totalorder %s25, 0
      %p46 = por %p44, %p45
      %p47 = scmp.ne.s32.totalorder %s33, %s34
      %p48 = scmp.eq.s32.totalorder %s26, 1
      %p49 = por %p47, %p48
      %p51 = scmp.ne.s32.totalorder %s34, %s50
      %p52 = scmp.eq.s32.totalorder %s26, 0
      %p53 = por %p51, %p52
      %s55 = sadd.s32 %s54, 1
      %p58 = scmp.eq.s32.totalorder %s20, 1
      %p59 = scmp.ne.s32.totalorder %s54, %s56
      %p60 = scmp.eq.s32.totalorder %s20, 0
      %p61 = por %p59, %p60
      %p62 = scmp.ne.s32.totalorder %s54, %s56
      %p63 = scmp.eq.s32.totalorder %s25, 1
      %p64 = por %p62, %p63
      %p65 = scmp.ne.s32.totalorder %s56, %s57
      %p66 = scmp.eq.s32.totalorder %s25, 0
      %p67 = por %p65, %p66
      %p68 = scmp.ne.s32.totalorder %s56, %s57
      %p69 = scmp.eq.s32.totalorder %s26, 1
      %p70 = por %p68, %p69
      %p72 = scmp.ne.s32.totalorder %s57, %s71
      %p73 = scmp.eq.s32.totalorder %s26, 0
      %p74 = por %p72, %p73
      %s76 = sadd.s32 %s75, 1
      %p79 = scmp.eq.s32.totalorder %s20, 1
      %p80 = scmp.ne.s32.totalorder %s75, %s77
      %p81 = scmp.eq.s32.totalorder %s20, 0
      %p82 = por %p80, %p81
      %p83 = scmp.ne.s32.totalorder %s75, %s77
      %p84 = scmp.eq.s32.totalorder %s25, 1
      %p85 = por %p83, %p84
      %p86 = scmp.ne.s32.totalorder %s77, %s78
      %p87 = scmp.eq.s32.totalorder %s25, 0
      %p88 = por %p86, %p87
      %p89 = scmp.ne.s32.totalorder %s77, %s78
      %p90 = scmp.eq.s32.totalorder %s26, 1
      %p91 = por %p89, %p90
      %p93 = scmp.ne.s32.totalorder %s78, %s92
      %p94 = scmp.eq.s32.totalorder %s26, 0
      %p95 = por %p93, %p94
      %s97 = sadd.s32 %s96, 1
      %p100 = scmp.eq.s32.totalorder %s20, 1
      %p101 = scmp.ne.s32.totalorder %s96, %s98
      %p102 = scmp.eq.s32.totalorder %s20, 0
      %p103 = por %p101, %p102
      %p104 = scmp.ne.s32.totalorder %s96, %s98
      %p105 = scmp.eq.s32.totalorder %s25, 1
      %p106 = por %p104, %p105
      %p107 = scmp.ne.s32.totalorder %s98, %s99
      %p108 = scmp.eq.s32.totalorder %s25, 0
      %p109 = por %p107, %p108
      %p110 = scmp.ne.s32.totalorder %s98, %s99
      %p111 = scmp.eq.s32.totalorder %s26, 1
      %p112 = por %p110, %p111
      %p114 = scmp.ne.s32.totalorder %s99, %s113
      %p115 = scmp.eq.s32.totalorder %s26, 0
      %p116 = por %p114, %p115
      %s118 = sadd.s32 %s117, 1
      %p121 = scmp.eq.s32.totalorder %s20, 1
      %p122 = scmp.ne.s32.totalorder %s117, %s119
      %p123 = scmp.eq.s32.totalorder %s20, 0
      %p124 = por %p122, %p123
      %p125 = scmp.ne.s32.totalorder %s117, %s119
      %p126 = scmp.eq.s32.totalorder %s25, 1
      %p127 = por %p125, %p126
      %p128 = scmp.ne.s32.totalorder %s119, %s120
      %p129 = scmp.eq.s32.totalorder %s25, 0
      %p130 = por %p128, %p129
      %p131 = scmp.ne.s32.totalorder %s119, %s120
      %p132 = scmp.eq.s32.totalorder %s26, 1
      %p133 = por %p131, %p132
      %p135 = scmp.ne.s32.totalorder %s120, %s134
      %p136 = scmp.eq.s32.totalorder %s26, 0
      %p137 = por %p135, %p136
      %s139 = sadd.s32 %s138, 1
      %p142 = scmp.eq.s32.totalorder %s20, 1
      %p143 = scmp.ne.s32.totalorder %s138, %s140
      %p144 = scmp.eq.s32.totalorder %s20, 0
      %p145 = por %p143, %p144
      %p146 = scmp.ne.s32.totalorder %s138, %s140
      %p147 = scmp.eq.s32.totalorder %s25, 1
      %p148 = por %p146, %p147
      %p149 = scmp.ne.s32.totalorder %s140, %s141
      %p150 = scmp.eq.s32.totalorder %s25, 0
      %p151 = por %p149, %p150
      %p152 = scmp.ne.s32.totalorder %s140, %s141
      %p153 = scmp.eq.s32.totalorder %s26, 1
      %p154 = por %p152, %p153
      %p156 = scmp.ne.s32.totalorder %s141, %s155
      %p157 = scmp.eq.s32.totalorder %s26, 0
      %p158 = por %p156, %p157
      %s160 = sadd.s32 %s159, 1
      %p163 = scmp.eq.s32.totalorder %s20, 1
      %p164 = scmp.ne.s32.totalorder %s159, %s161
      %p165 = scmp.eq.s32.totalorder %s20, 0
      %p166 = por %p164, %p165
      %p167 = scmp.ne.s32.totalorder %s159, %s161
      %p168 = scmp.eq.s32.totalorder %s25, 1
      %p169 = por %p167, %p168
      %p170 = scmp.ne.s32.totalorder %s161, %s162
      %p171 = scmp.eq.s32.totalorder %s25, 0
      %p172 = por %p170, %p171
      %p173 = scmp.ne.s32.totalorder %s161, %s162
      %p174 = scmp.eq.s32.totalorder %s26, 1
      %p175 = por %p173, %p174
      %p177 = scmp.ne.s32.totalorder %s162, %s176
      %p178 = scmp.eq.s32.totalorder %s26, 0
      %p179 = por %p177, %p178
      %s181 = sadd.s32 %s180, 1
      %p184 = scmp.eq.s32.totalorder %s20, 1
      %p185 = scmp.ne.s32.totalorder %s180, %s182
      %p186 = scmp.eq.s32.totalorder %s20, 0
      %p187 = por %p185, %p186
      %p188 = scmp.ne.s32.totalorder %s180, %s182
      %p189 = scmp.eq.s32.totalorder %s25, 1
      %p190 = por %p188, %p189
      %p191 = scmp.ne.s32.totalorder %s182, %s183
      %p192 = scmp.eq.s32.totalorder %s25, 0
      %p193 = por %p191, %p192
      %p194 = scmp.ne.s32.totalorder %s182, %s183
      %p195 = scmp.eq.s32.totalorder %s26, 1
      %p196 = por %p194, %p195
      %p198 = scmp.ne.s32.totalorder %s183, %s197
      %p199 = scmp.eq.s32.totalorder %s26, 0
      %p200 = por %p198, %p199
      %s202 = sadd.s32 %s201, 1
      %p205 = scmp.eq.s32.totalorder %s20, 1
      %p206 = scmp.ne.s32.totalorder %s201, %s203
      %p207 = scmp.eq.s32.totalorder %s20, 0
      %p208 = por %p206, %p207
      %p209 = scmp.ne.s32.totalorder %s201, %s203
      %p210 = scmp.eq.s32.totalorder %s25, 1
      %p211 = por %p209, %p210
      %p212 = scmp.ne.s32.totalorder %s203, %s204
      %p213 = scmp.eq.s32.totalorder %s25, 0
      %p214 = por %p212, %p213
      %p215 = scmp.ne.s32.totalorder %s203, %s204
      %p216 = scmp.eq.s32.totalorder %s26, 1
      %p217 = por %p215, %p216
      %p219 = scmp.ne.s32.totalorder %s204, %s218
      %p220 = scmp.eq.s32.totalorder %s26, 0
      %p221 = por %p219, %p220
      %s222 = ssub.s32 %s20, %s27
      %p223 = scmp.eq.s32.totalorder %s222, 0
      %s225 = sadd.s32 %s224, 1
      %s226 = scalar_select %p223, %s224, %s225
      %p229 = pneg %p223
      %p230 = scmp.eq.s32.totalorder %s20, 1
      %p231 = por %p229, %p230
      %p232 = scmp.ne.s32.totalorder %s224, %s227
      %p233 = scmp.eq.s32.totalorder %s20, 0
      %p234 = por %p232, %p233
      %p235 = scmp.ne.s32.totalorder %s224, %s227
      %p236 = scmp.eq.s32.totalorder %s25, 1
      %p237 = por %p235, %p236
      %p238 = scmp.ne.s32.totalorder %s227, %s228
      %p239 = scmp.eq.s32.totalorder %s25, 0
      %p240 = por %p238, %p239
      %p241 = scmp.ne.s32.totalorder %s227, %s228
      %p242 = scmp.eq.s32.totalorder %s26, 1
      %p243 = por %p241, %p242
      %p245 = scmp.ne.s32.totalorder %s228, %s244
      %p246 = scmp.eq.s32.totalorder %s26, 0
      %p247 = por %p245, %p246
      %p248 = scmp.le.s32.totalorder 1, %s20
      %p249 = scmp.lt.s32.totalorder %s20, 3
      %p250 = pnand %p248, %p249
      %p251 = pneg %p250
      // Predicated region
      $region9: #{tpu_custom_call.1} parent=5 // pred_check
        _
      $region10: #{tpu_custom_call.1} parent=5 // pred_check_branch
        %253 = sbr.rel (%p250) target = $region12
      $region11: #{tpu_custom_call.1} parent=5 // pred_region
        %s254 = ssub.s32 %s20, 1
        // Predicated region
        $region13: #{tpu_custom_call.1} parent=11 // pred_check
          %p255 = pneg %p67
        $region14: #{tpu_custom_call.1} parent=11 // pred_check_branch
          %257 = sbr.rel (%p255) target = $region16
        $region15: #{tpu_custom_call.1} parent=11 // pred_region
          _
        $region16: #{tpu_custom_call.1} parent=11 // pred_fallthru
          _
        // Predicated region
        $region17: #{tpu_custom_call.1} parent=11 // pred_check
          %p258 = pneg %p88
        $region18: #{tpu_custom_call.1} parent=11 // pred_check_branch
          %260 = sbr.rel (%p258) target = $region20
        $region19: #{tpu_custom_call.1} parent=11 // pred_region
          _
        $region20: #{tpu_custom_call.1} parent=11 // pred_fallthru
          _
        // Predicated region
        $region21: #{tpu_custom_call.1} parent=11 // pred_check
          %p261 = pneg %p109
        $region22: #{tpu_custom_call.1} parent=11 // pred_check_branch
          %263 = sbr.rel (%p261) target = $region24
        $region23: #{tpu_custom_call.1} parent=11 // pred_region
          _
        $region24: #{tpu_custom_call.1} parent=11 // pred_fallthru
          _
        // Predicated region
        $region25: #{tpu_custom_call.1} parent=11 // pred_check
          %p264 = pneg %p130
        $region26: #{tpu_custom_call.1} parent=11 // pred_check_branch
          %266 = sbr.rel (%p264) target = $region28
        $region27: #{tpu_custom_call.1} parent=11 // pred_region
          _
        $region28: #{tpu_custom_call.1} parent=11 // pred_fallthru
          _
        // Predicated region
        $region29: #{tpu_custom_call.1} parent=11 // pred_check
          %p267 = pneg %p151
        $region30: #{tpu_custom_call.1} parent=11 // pred_check_branch
          %269 = sbr.rel (%p267) target = $region32
        $region31: #{tpu_custom_call.1} parent=11 // pred_region
          _
        $region32: #{tpu_custom_call.1} parent=11 // pred_fallthru
          _
        // Predicated region
        $region33: #{tpu_custom_call.1} parent=11 // pred_check
          %p270 = pneg %p172
        $region34: #{tpu_custom_call.1} parent=11 // pred_check_branch
          %272 = sbr.rel (%p270) target = $region36
        $region35: #{tpu_custom_call.1} parent=11 // pred_region
          _
        $region36: #{tpu_custom_call.1} parent=11 // pred_fallthru
          _
        // Predicated region
        $region37: #{tpu_custom_call.1} parent=11 // pred_check
          %p273 = pneg %p193
        $region38: #{tpu_custom_call.1} parent=11 // pred_check_branch
          %275 = sbr.rel (%p273) target = $region40
        $region39: #{tpu_custom_call.1} parent=11 // pred_region
          _
        $region40: #{tpu_custom_call.1} parent=11 // pred_fallthru
          _
        // Predicated region
        $region41: #{tpu_custom_call.1} parent=11 // pred_check
          %p276 = pneg %p214
        $region42: #{tpu_custom_call.1} parent=11 // pred_check_branch
          %278 = sbr.rel (%p276) target = $region44
        $region43: #{tpu_custom_call.1} parent=11 // pred_region
          _
        $region44: #{tpu_custom_call.1} parent=11 // pred_fallthru
          _
      $region12: #{tpu_custom_call.1} parent=5 // pred_fallthru
        _
      %p279 = scmp.lt.s32.totalorder %s20, 2
      // Predicated region
      $region45: #{tpu_custom_call.1} parent=5 // pred_check
        %p280 = pneg %p279
      $region46: #{tpu_custom_call.1} parent=5 // pred_check_branch
        %282 = sbr.rel (%p280) target = $region48
      $region47: #{tpu_custom_call.1} parent=5 // pred_region
        // Predicated region
        $region49: #{tpu_custom_call.1} parent=47 // pred_check
          %p283 = pneg %p40
        $region50: #{tpu_custom_call.1} parent=47 // pred_check_branch
          %285 = sbr.rel (%p283) target = $region52
        $region51: #{tpu_custom_call.1} parent=47 // pred_region
          %s286 = smul.u32 8, %s20
          %p287 = scmp.lt.s32.totalorder %s286, 15
          %s288 = scalar_select %p287, %s286, 15
          %s289 = smul.addr %s288, 2
          %s290 = scalar_lea.vmem %s0, %s289
          %s291 = smul.u32 8, %s20
        $region52: #{tpu_custom_call.1} parent=47 // pred_fallthru
          _
      $region48: #{tpu_custom_call.1} parent=5 // pred_fallthru
        _
      %p292 = scmp.le.s32.totalorder 1, %s20
      %p293 = scmp.lt.s32.totalorder %s20, 3
      %p294 = pnand %p292, %p293
      %p295 = pneg %p294
      // Predicated region
      $region53: #{tpu_custom_call.1} parent=5 // pred_check
        _
      $region54: #{tpu_custom_call.1} parent=5 // pred_check_branch
        %297 = sbr.rel (%p294) target = $region56
      $region55: #{tpu_custom_call.1} parent=5 // pred_region
        %s298 = ssub.s32 %s20, 1
        %s299 = smul.u32 8, %s25
        %p300 = scmp.lt.s32.totalorder %s299, 15
        %s301 = scalar_select %p300, %s299, 15
        %s302 = smul.addr %s301, 2
        %s303 = scalar_lea.vmem %s0, %s302
        %p304 = pneg %p46
        %p305 = pneg %p43
        %p306 = pneg %p67
        %p307 = pneg %p64
        %p308 = pneg %p88
        %p309 = pneg %p85
        %p310 = pneg %p109
        %p311 = pneg %p106
        %p312 = pneg %p130
        %p313 = pneg %p127
        %p314 = pneg %p151
        %p315 = pneg %p148
        %p316 = pneg %p172
        %p317 = pneg %p169
        %p318 = pneg %p193
        %p319 = pneg %p190
        %p320 = pneg %p214
        %p321 = pneg %p211
        %p322 = pneg %p240
        %p323 = pneg %p237
        %s324 = sand.u32 %s227, 1
        %s325 = scalar_lea.sflag [#allocation4], %s324
        %s326 = sand.u32 %s227, 1
        %s327 = smul.addr %s326, 8
        %s328 = scalar_lea.vmem [#allocation3], %s327
        %s329 = smul.u32 8, %s25
        %p330 = scmp.lt.s32.totalorder %s329, 15
        %s331 = scalar_select %p330, %s329, 15
        %s332 = smul.addr %s331, 2
        %s333 = scalar_lea.vmem %s0, %s332
        %s334 = smul.u32 8, %s25
        %s335 = smul.u32 8, %s25
        %v336 = vld [vmem:[%s333] sm:$0xff]
        %v337 = vld [vmem:[%s333 + $0x8] sm:$0xff]
        %v338 = vld [vmem:[%s1] sm:$0xff]
        %v339 = vld [vmem:[%s1 + $0x8] sm:$0xff]
        %v340 = vld [vmem:[%s1 + $0x10] sm:$0xff]
        %v341 = vld [vmem:[%s1 + $0x18] sm:$0xff]
        %v342 = vld [vmem:[%s2] sm:$0xff]
        %v343 = vld [vmem:[%s2 + $0x8] sm:$0xff]
        %v344 = vld [vmem:[%s2 + $0x10] sm:$0xff]
        %v345 = vld [vmem:[%s2 + $0x18] sm:$0xff]
        %347 = vset.pattern.permute.xlu0 0
        %348 = vperm.xlu0 %347, %v342
        %v349 = vpop.permute.xlu0 %348
        %352 = vset.pattern.permute.xlu0 0
        %353 = vperm.xlu0 %352, %v343
        %v354 = vpop.permute.xlu0 %353
        %357 = vset.pattern.permute.xlu0 0
        %358 = vperm.xlu0 %357, %v344
        %v359 = vpop.permute.xlu0 %358
        %362 = vset.pattern.permute.xlu0 0
        %363 = vperm.xlu0 %362, %v345
        %v364 = vpop.permute.xlu0 %363
        %v368 = vcombine.high %v336, %v336
        %v370 = vunpack.c.l.s4 1983009808
        %v371 = vunpack.c.0.s8 %v370
        %v372 = vlaneseq
        %v373 = vshrl.u32 %v372, 7
        %v374 = vsub.s32 %v371, %v373
        %v375 = vrot.slane %v336, %v374
        %v377 = vunpack.c.l.s4 1983009808
        %v378 = vunpack.c.0.s8 %v377
        %v379 = vlaneseq
        %v380 = vshrl.u32 %v379, 7
        %v381 = vsub.s32 %v378, %v380
        %v382 = vrot.slane %v368, %v381
        %v383 = vcombine.high %v375, %v375
        %v384 = vcombine.high %v382, %v382
        %v385 = vcombine.high %v337, %v337
        %v387 = vunpack.c.l.s4 1983009808
        %v388 = vunpack.c.0.s8 %v387
        %v389 = vlaneseq
        %v390 = vshrl.u32 %v389, 7
        %v391 = vsub.s32 %v388, %v390
        %v392 = vrot.slane %v337, %v391
        %v394 = vunpack.c.l.s4 1983009808
        %v395 = vunpack.c.0.s8 %v394
        %v396 = vlaneseq
        %v397 = vshrl.u32 %v396, 7
        %v398 = vsub.s32 %v395, %v397
        %v399 = vrot.slane %v385, %v398
        %v400 = vcombine.high %v392, %v392
        %v401 = vcombine.high %v399, %v399
        %vm402 = vcmask 15360
        %v404 = vsel %vm402, %v338, 0
        %v407 = vsel %vm402, %v339, 0
        %v410 = vsel %vm402, %v340, 0
        %v413 = vsel %vm402, %v341, 0
        %vm415 = vcmask 1041408
        %v416 = vsel %vm415, %v375, 0
        %v418 = vsel %vm415, %v383, 0
        %v420 = vsel %vm415, %v382, 0
        %v422 = vsel %vm415, %v384, 0
        %v424 = vsel %vm415, %v392, 0
        %v426 = vsel %vm415, %v400, 0
        %v428 = vsel %vm415, %v399, 0
        %v430 = vsel %vm415, %v401, 0
        %432 = vmatprep.subr.mxu0 %v418
        %433 = vmatpush1.msra.mxu0 %v416
        %434 = vmatprep.subr.mxu0 0.0
        %435 = vmatpush1.msra.mxu0 0.0
        %436 = vmatprep.subr.mxu0 0.0
        %437 = vmatpush1.msra.mxu0 0.0
        %438 = vmatprep.subr.mxu0 0.0
        %439 = vmatpush1.msra.mxu0 0.0
        %440 = vmatprep.subr.mxu0 0.0
        %441 = vmatpush1.msra.mxu0 0.0
        %442 = vmatprep.subr.mxu0 0.0
        %443 = vmatpush1.msra.mxu0 0.0
        %444 = vmatprep.subr.mxu0 0.0
        %445 = vmatpush1.msra.mxu0 0.0
        %446 = vmatprep.subr.mxu0 0.0
        %447 = vmatpush1.msra.mxu0 0.0
        %448 = vmatprep.subr.mxu0 0.0
        %449 = vmatpush1.msra.mxu0 0.0
        %450 = vmatprep.subr.mxu0 0.0
        %451 = vmatpush1.msra.mxu0 0.0
        %452 = vmatprep.subr.mxu0 0.0
        %453 = vmatpush1.msra.mxu0 0.0
        %454 = vmatprep.subr.mxu0 0.0
        %455 = vmatpush1.msra.mxu0 0.0
        %456 = vmatprep.subr.mxu0 0.0
        %457 = vmatpush1.msra.mxu0 0.0
        %458 = vmatprep.subr.mxu0 0.0
        %459 = vmatpush1.msra.mxu0 0.0
        %460 = vmatprep.subr.mxu0 0.0
        %461 = vmatpush1.msra.mxu0 0.0
        %462 = vmatprep.subr.mxu0 0.0
        %463 = vmatpush1.msra.mxu0 0.0
        %464 = vmatprep.subr.mxu0 0.0
        %465 = vmatpush1.msra.mxu0 0.0
        %466 = vmatprep.subr.mxu0 0.0
        %467 = vmatpush1.msra.mxu0 0.0
        %468 = vmatprep.subr.mxu0 0.0
        %469 = vmatpush1.msra.mxu0 0.0
        %470 = vmatprep.subr.mxu0 0.0
        %471 = vmatpush1.msra.mxu0 0.0
        %472 = vmatprep.subr.mxu0 0.0
        %473 = vmatpush1.msra.mxu0 0.0
        %474 = vmatprep.subr.mxu0 0.0
        %475 = vmatpush1.msra.mxu0 0.0
        %476 = vmatprep.subr.mxu0 0.0
        %477 = vmatpush1.msra.mxu0 0.0
        %478 = vmatprep.subr.mxu0 0.0
        %479 = vmatpush1.msra.mxu0 0.0
        %480 = vmatprep.subr.mxu0 0.0
        %481 = vmatpush1.msra.mxu0 0.0
        %482 = vmatprep.subr.mxu0 0.0
        %483 = vmatpush1.msra.mxu0 0.0
        %484 = vmatprep.subr.mxu0 0.0
        %485 = vmatpush1.msra.mxu0 0.0
        %486 = vmatprep.subr.mxu0 0.0
        %487 = vmatpush1.msra.mxu0 0.0
        %488 = vmatprep.subr.mxu0 0.0
        %489 = vmatpush1.msra.mxu0 0.0
        %490 = vmatprep.subr.mxu0 0.0
        %491 = vmatpush1.msra.mxu0 0.0
        %492 = vmatprep.subr.mxu0 0.0
        %493 = vmatpush1.msra.mxu0 0.0
        %494 = vmatprep.subr.mxu0 0.0
        %495 = vmatpush1.msra.mxu0 0.0
        %496 = vmatprep.mubr.f32.mxu0 0.0
        %497 = vmatmul.mubr.f32.gmra.mrb[0].mxu0 %v404
        %v498 = vpop.f32.mrb[0].mxu0
        %v499 = vadd.f32 %v349, %v498
        %v500 = vpop.f32.mrb[0].mxu0
        %v501 = vadd.f32 %v349, %v500
        %502 = vmatprep.mubr.f32.mxu0 0.0
        %503 = vmatmul.mubr.f32.gmra.mrb[0].mxu0 %v407
        %v504 = vpop.f32.mrb[0].mxu0
        %v505 = vadd.f32 %v354, %v504
        %v506 = vpop.f32.mrb[0].mxu0
        %v507 = vadd.f32 %v354, %v506
        %508 = vmatprep.mubr.f32.mxu0 0.0
        %509 = vmatmul.mubr.f32.gmra.mrb[0].mxu0 %v410
        %v510 = vpop.f32.mrb[0].mxu0
        %v511 = vadd.f32 %v359, %v510
        %v512 = vpop.f32.mrb[0].mxu0
        %v513 = vadd.f32 %v359, %v512
        %514 = vmatprep.mubr.f32.mxu0 0.0
        %515 = vmatmul.mubr.f32.gmra.mrb[0].mxu0 %v413
        %v516 = vpop.f32.mrb[0].mxu0
        %v517 = vadd.f32 %v364, %v516
        %v518 = vpop.f32.mrb[0].mxu0
        %v519 = vadd.f32 %v364, %v518
        %520 = vdwg.mxu0
        %521 = vmatprep.subr.mxu0 %v422
        %522 = vmatpush1.msra.mxu0 %v420
        %523 = vmatprep.subr.mxu0 0.0
        %524 = vmatpush1.msra.mxu0 0.0
        %525 = vmatprep.subr.mxu0 0.0
        %526 = vmatpush1.msra.mxu0 0.0
        %527 = vmatprep.subr.mxu0 0.0
        %528 = vmatpush1.msra.mxu0 0.0
        %529 = vmatprep.subr.mxu0 0.0
        %530 = vmatpush1.msra.mxu0 0.0
        %531 = vmatprep.subr.mxu0 0.0
        %532 = vmatpush1.msra.mxu0 0.0
        %533 = vmatprep.subr.mxu0 0.0
        %534 = vmatpush1.msra.mxu0 0.0
        %535 = vmatprep.subr.mxu0 0.0
        %536 = vmatpush1.msra.mxu0 0.0
        %537 = vmatprep.subr.mxu0 0.0
        %538 = vmatpush1.msra.mxu0 0.0
        %539 = vmatprep.subr.mxu0 0.0
        %540 = vmatpush1.msra.mxu0 0.0
        %541 = vmatprep.subr.mxu0 0.0
        %542 = vmatpush1.msra.mxu0 0.0
        %543 = vmatprep.subr.mxu0 0.0
        %544 = vmatpush1.msra.mxu0 0.0
        %545 = vmatprep.subr.mxu0 0.0
        %546 = vmatpush1.msra.mxu0 0.0
        %547 = vmatprep.subr.mxu0 0.0
        %548 = vmatpush1.msra.mxu0 0.0
        %549 = vmatprep.subr.mxu0 0.0
        %550 = vmatpush1.msra.mxu0 0.0
        %551 = vmatprep.subr.mxu0 0.0
        %552 = vmatpush1.msra.mxu0 0.0
        %553 = vmatprep.subr.mxu0 0.0
        %554 = vmatpush1.msra.mxu0 0.0
        %555 = vmatprep.subr.mxu0 0.0
        %556 = vmatpush1.msra.mxu0 0.0
        %557 = vmatprep.subr.mxu0 0.0
        %558 = vmatpush1.msra.mxu0 0.0
        %559 = vmatprep.subr.mxu0 0.0
        %560 = vmatpush1.msra.mxu0 0.0
        %561 = vmatprep.subr.mxu0 0.0
        %562 = vmatpush1.msra.mxu0 0.0
        %563 = vmatprep.subr.mxu0 0.0
        %564 = vmatpush1.msra.mxu0 0.0
        %565 = vmatprep.subr.mxu0 0.0
        %566 = vmatpush1.msra.mxu0 0.0
        %567 = vmatprep.subr.mxu0 0.0
        %568 = vmatpush1.msra.mxu0 0.0
        %569 = vmatprep.subr.mxu0 0.0
        %570 = vmatpush1.msra.mxu0 0.0
        %571 = vmatprep.subr.mxu0 0.0
        %572 = vmatpush1.msra.mxu0 0.0
        %573 = vmatprep.subr.mxu0 0.0
        %574 = vmatpush1.msra.mxu0 0.0
        %575 = vmatprep.subr.mxu0 0.0
        %576 = vmatpush1.msra.mxu0 0.0
        %577 = vmatprep.subr.mxu0 0.0
        %578 = vmatpush1.msra.mxu0 0.0
        %579 = vmatprep.subr.mxu0 0.0
        %580 = vmatpush1.msra.mxu0 0.0
        %581 = vmatprep.subr.mxu0 0.0
        %582 = vmatpush1.msra.mxu0 0.0
        %583 = vmatprep.subr.mxu0 0.0
        %584 = vmatpush1.msra.mxu0 0.0
        %585 = vmatprep.mubr.f32.mxu0 0.0
        %586 = vmatmul.mubr.f32.gmra.mrb[0].mxu0 %v404
        %v587 = vpop.f32.mrb[0].mxu0
        %v588 = vadd.f32 %v349, %v587
        %v589 = vpop.f32.mrb[0].mxu0
        %v590 = vadd.f32 %v349, %v589
        %591 = vmatprep.mubr.f32.mxu0 0.0
        %592 = vmatmul.mubr.f32.gmra.mrb[0].mxu0 %v407
        %v593 = vpop.f32.mrb[0].mxu0
        %v594 = vadd.f32 %v354, %v593
        %v595 = vpop.f32.mrb[0].mxu0
        %v596 = vadd.f32 %v354, %v595
        %597 = vmatprep.mubr.f32.mxu0 0.0
        %598 = vmatmul.mubr.f32.gmra.mrb[0].mxu0 %v410
        %v599 = vpop.f32.mrb[0].mxu0
        %v600 = vadd.f32 %v359, %v599
        %v601 = vpop.f32.mrb[0].mxu0
        %v602 = vadd.f32 %v359, %v601
        %603 = vmatprep.mubr.f32.mxu0 0.0
        %604 = vmatmul.mubr.f32.gmra.mrb[0].mxu0 %v413
        %v605 = vpop.f32.mrb[0].mxu0
        %v606 = vadd.f32 %v364, %v605
        %v607 = vpop.f32.mrb[0].mxu0
        %v608 = vadd.f32 %v364, %v607
        %609 = vdwg.mxu0
        %610 = vmatprep.subr.mxu0 %v426
        %611 = vmatpush1.msra.mxu0 %v424
        %612 = vmatprep.subr.mxu0 0.0
        %613 = vmatpush1.msra.mxu0 0.0
        %614 = vmatprep.subr.mxu0 0.0
        %615 = vmatpush1.msra.mxu0 0.0
        %616 = vmatprep.subr.mxu0 0.0
        %617 = vmatpush1.msra.mxu0 0.0
        %618 = vmatprep.subr.mxu0 0.0
        %619 = vmatpush1.msra.mxu0 0.0
        %620 = vmatprep.subr.mxu0 0.0
        %621 = vmatpush1.msra.mxu0 0.0
        %622 = vmatprep.subr.mxu0 0.0
        %623 = vmatpush1.msra.mxu0 0.0
        %624 = vmatprep.subr.mxu0 0.0
        %625 = vmatpush1.msra.mxu0 0.0
        %626 = vmatprep.subr.mxu0 0.0
        %627 = vmatpush1.msra.mxu0 0.0
        %628 = vmatprep.subr.mxu0 0.0
        %629 = vmatpush1.msra.mxu0 0.0
        %630 = vmatprep.subr.mxu0 0.0
        %631 = vmatpush1.msra.mxu0 0.0
        %632 = vmatprep.subr.mxu0 0.0
        %633 = vmatpush1.msra.mxu0 0.0
        %634 = vmatprep.subr.mxu0 0.0
        %635 = vmatpush1.msra.mxu0 0.0
        %636 = vmatprep.subr.mxu0 0.0
        %637 = vmatpush1.msra.mxu0 0.0
        %638 = vmatprep.subr.mxu0 0.0
        %639 = vmatpush1.msra.mxu0 0.0
        %640 = vmatprep.subr.mxu0 0.0
        %641 = vmatpush1.msra.mxu0 0.0
        %642 = vmatprep.subr.mxu0 0.0
        %643 = vmatpush1.msra.mxu0 0.0
        %644 = vmatprep.subr.mxu0 0.0
        %645 = vmatpush1.msra.mxu0 0.0
        %646 = vmatprep.subr.mxu0 0.0
        %647 = vmatpush1.msra.mxu0 0.0
        %648 = vmatprep.subr.mxu0 0.0
        %649 = vmatpush1.msra.mxu0 0.0
        %650 = vmatprep.subr.mxu0 0.0
        %651 = vmatpush1.msra.mxu0 0.0
        %652 = vmatprep.subr.mxu0 0.0
        %653 = vmatpush1.msra.mxu0 0.0
        %654 = vmatprep.subr.mxu0 0.0
        %655 = vmatpush1.msra.mxu0 0.0
        %656 = vmatprep.subr.mxu0 0.0
        %657 = vmatpush1.msra.mxu0 0.0
        %658 = vmatprep.subr.mxu0 0.0
        %659 = vmatpush1.msra.mxu0 0.0
        %660 = vmatprep.subr.mxu0 0.0
        %661 = vmatpush1.msra.mxu0 0.0
        %662 = vmatprep.subr.mxu0 0.0
        %663 = vmatpush1.msra.mxu0 0.0
        %664 = vmatprep.subr.mxu0 0.0
        %665 = vmatpush1.msra.mxu0 0.0
        %666 = vmatprep.subr.mxu0 0.0
        %667 = vmatpush1.msra.mxu0 0.0
        %668 = vmatprep.subr.mxu0 0.0
        %669 = vmatpush1.msra.mxu0 0.0
        %670 = vmatprep.subr.mxu0 0.0
        %671 = vmatpush1.msra.mxu0 0.0
        %672 = vmatprep.subr.mxu0 0.0
        %673 = vmatpush1.msra.mxu0 0.0
        %674 = vmatprep.mubr.f32.mxu0 0.0
        %675 = vmatmul.mubr.f32.gmra.mrb[0].mxu0 %v404
        %v676 = vpop.f32.mrb[0].mxu0
        %v677 = vadd.f32 %v349, %v676
        %v678 = vpop.f32.mrb[0].mxu0
        %v679 = vadd.f32 %v349, %v678
        %680 = vmatprep.mubr.f32.mxu0 0.0
        %681 = vmatmul.mubr.f32.gmra.mrb[0].mxu0 %v407
        %v682 = vpop.f32.mrb[0].mxu0
        %v683 = vadd.f32 %v354, %v682
        %v684 = vpop.f32.mrb[0].mxu0
        %v685 = vadd.f32 %v354, %v684
        %686 = vmatprep.mubr.f32.mxu0 0.0
        %687 = vmatmul.mubr.f32.gmra.mrb[0].mxu0 %v410
        %v688 = vpop.f32.mrb[0].mxu0
        %v689 = vadd.f32 %v359, %v688
        %v690 = vpop.f32.mrb[0].mxu0
        %v691 = vadd.f32 %v359, %v690
        %692 = vmatprep.mubr.f32.mxu0 0.0
        %693 = vmatmul.mubr.f32.gmra.mrb[0].mxu0 %v413
        %v694 = vpop.f32.mrb[0].mxu0
        %v695 = vadd.f32 %v364, %v694
        %v696 = vpop.f32.mrb[0].mxu0
        %v697 = vadd.f32 %v364, %v696
        %698 = vdwg.mxu0
        %699 = vmatprep.subr.mxu0 %v430
        %700 = vmatpush1.msra.mxu0 %v428
        %701 = vmatprep.subr.mxu0 0.0
        %702 = vmatpush1.msra.mxu0 0.0
        %703 = vmatprep.subr.mxu0 0.0
        %704 = vmatpush1.msra.mxu0 0.0
        %705 = vmatprep.subr.mxu0 0.0
        %706 = vmatpush1.msra.mxu0 0.0
        %707 = vmatprep.subr.mxu0 0.0
        %708 = vmatpush1.msra.mxu0 0.0
        %709 = vmatprep.subr.mxu0 0.0
        %710 = vmatpush1.msra.mxu0 0.0
        %711 = vmatprep.subr.mxu0 0.0
        %712 = vmatpush1.msra.mxu0 0.0
        %713 = vmatprep.subr.mxu0 0.0
        %714 = vmatpush1.msra.mxu0 0.0
        %715 = vmatprep.subr.mxu0 0.0
        %716 = vmatpush1.msra.mxu0 0.0
        %717 = vmatprep.subr.mxu0 0.0
        %718 = vmatpush1.msra.mxu0 0.0
        %719 = vmatprep.subr.mxu0 0.0
        %720 = vmatpush1.msra.mxu0 0.0
        %721 = vmatprep.subr.mxu0 0.0
        %722 = vmatpush1.msra.mxu0 0.0
        %723 = vmatprep.subr.mxu0 0.0
        %724 = vmatpush1.msra.mxu0 0.0
        %725 = vmatprep.subr.mxu0 0.0
        %726 = vmatpush1.msra.mxu0 0.0
        %727 = vmatprep.subr.mxu0 0.0
        %728 = vmatpush1.msra.mxu0 0.0
        %729 = vmatprep.subr.mxu0 0.0
        %730 = vmatpush1.msra.mxu0 0.0
        %731 = vmatprep.subr.mxu0 0.0
        %732 = vmatpush1.msra.mxu0 0.0
        %733 = vmatprep.subr.mxu0 0.0
        %734 = vmatpush1.msra.mxu0 0.0
        %735 = vmatprep.subr.mxu0 0.0
        %736 = vmatpush1.msra.mxu0 0.0
        %737 = vmatprep.subr.mxu0 0.0
        %738 = vmatpush1.msra.mxu0 0.0
        %739 = vmatprep.subr.mxu0 0.0
        %740 = vmatpush1.msra.mxu0 0.0
        %741 = vmatprep.subr.mxu0 0.0
        %742 = vmatpush1.msra.mxu0 0.0
        %743 = vmatprep.subr.mxu0 0.0
        %744 = vmatpush1.msra.mxu0 0.0
        %745 = vmatprep.subr.mxu0 0.0
        %746 = vmatpush1.msra.mxu0 0.0
        %747 = vmatprep.subr.mxu0 0.0
        %748 = vmatpush1.msra.mxu0 0.0
        %749 = vmatprep.subr.mxu0 0.0
        %750 = vmatpush1.msra.mxu0 0.0
        %751 = vmatprep.subr.mxu0 0.0
        %752 = vmatpush1.msra.mxu0 0.0
        %753 = vmatprep.subr.mxu0 0.0
        %754 = vmatpush1.msra.mxu0 0.0
        %755 = vmatprep.subr.mxu0 0.0
        %756 = vmatpush1.msra.mxu0 0.0
        %757 = vmatprep.subr.mxu0 0.0
        %758 = vmatpush1.msra.mxu0 0.0
        %759 = vmatprep.subr.mxu0 0.0
        %760 = vmatpush1.msra.mxu0 0.0
        %761 = vmatprep.subr.mxu0 0.0
        %762 = vmatpush1.msra.mxu0 0.0
        %763 = vmatprep.mubr.f32.mxu0 0.0
        %764 = vmatmul.mubr.f32.gmra.mrb[0].mxu0 %v404
        %v765 = vpop.f32.mrb[0].mxu0
        %v766 = vadd.f32 %v349, %v765
        %v767 = vpop.f32.mrb[0].mxu0
        %v768 = vadd.f32 %v349, %v767
        %769 = vmatprep.mubr.f32.mxu0 0.0
        %770 = vmatmul.mubr.f32.gmra.mrb[0].mxu0 %v407
        %v771 = vpop.f32.mrb[0].mxu0
        %v772 = vadd.f32 %v354, %v771
        %v773 = vpop.f32.mrb[0].mxu0
        %v774 = vadd.f32 %v354, %v773
        %775 = vmatprep.mubr.f32.mxu0 0.0
        %776 = vmatmul.mubr.f32.gmra.mrb[0].mxu0 %v410
        %v777 = vpop.f32.mrb[0].mxu0
        %v778 = vadd.f32 %v359, %v777
        %v779 = vpop.f32.mrb[0].mxu0
        %v780 = vadd.f32 %v359, %v779
        %781 = vmatprep.mubr.f32.mxu0 0.0
        %782 = vmatmul.mubr.f32.gmra.mrb[0].mxu0 %v413
        %v783 = vpop.f32.mrb[0].mxu0
        %v784 = vadd.f32 %v364, %v783
        %v785 = vpop.f32.mrb[0].mxu0
        %v786 = vadd.f32 %v364, %v785
        %787 = vdwg.mxu0
        %v788 = vmul.f32 %v499, 0.31830987
        %v789 = vmul.f32 %v501, 0.31830987
        %v790 = vmul.f32 %v588, 0.31830987
        %v791 = vmul.f32 %v590, 0.31830987
        %v792 = vmul.f32 %v677, 0.31830987
        %v793 = vmul.f32 %v679, 0.31830987
        %v794 = vmul.f32 %v766, 0.31830987
        %v795 = vmul.f32 %v768, 0.31830987
        %v796 = vmul.f32 %v505, 0.31830987
        %v797 = vmul.f32 %v507, 0.31830987
        %v798 = vmul.f32 %v594, 0.31830987
        %v799 = vmul.f32 %v596, 0.31830987
        %v800 = vmul.f32 %v683, 0.31830987
        %v801 = vmul.f32 %v685, 0.31830987
        %v802 = vmul.f32 %v772, 0.31830987
        %v803 = vmul.f32 %v774, 0.31830987
        %v804 = vmul.f32 %v511, 0.31830987
        %v805 = vmul.f32 %v513, 0.31830987
        %v806 = vmul.f32 %v600, 0.31830987
        %v807 = vmul.f32 %v602, 0.31830987
        %v808 = vmul.f32 %v689, 0.31830987
        %v809 = vmul.f32 %v691, 0.31830987
        %v810 = vmul.f32 %v778, 0.31830987
        %v811 = vmul.f32 %v780, 0.31830987
        %v812 = vmul.f32 %v517, 0.31830987
        %v813 = vmul.f32 %v519, 0.31830987
        %v814 = vmul.f32 %v606, 0.31830987
        %v815 = vmul.f32 %v608, 0.31830987
        %v816 = vmul.f32 %v695, 0.31830987
        %v817 = vmul.f32 %v697, 0.31830987
        %v818 = vmul.f32 %v784, 0.31830987
        %v819 = vmul.f32 %v786, 0.31830987
        %v820 = vadd.f32 %v788, 0.5
        %v821 = vadd.f32 %v789, 0.5
        %v822 = vadd.f32 %v790, 0.5
        %v823 = vadd.f32 %v791, 0.5
        %v824 = vadd.f32 %v792, 0.5
        %v825 = vadd.f32 %v793, 0.5
        %v826 = vadd.f32 %v794, 0.5
        %v827 = vadd.f32 %v795, 0.5
        %v828 = vadd.f32 %v796, 0.5
        %v829 = vadd.f32 %v797, 0.5
        %v830 = vadd.f32 %v798, 0.5
        %v831 = vadd.f32 %v799, 0.5
        %v832 = vadd.f32 %v800, 0.5
        %v833 = vadd.f32 %v801, 0.5
        %v834 = vadd.f32 %v802, 0.5
        %v835 = vadd.f32 %v803, 0.5
        %v836 = vadd.f32 %v804, 0.5
        %v837 = vadd.f32 %v805, 0.5
        %v838 = vadd.f32 %v806, 0.5
        %v839 = vadd.f32 %v807, 0.5
        %v840 = vadd.f32 %v808, 0.5
        %v841 = vadd.f32 %v809, 0.5
        %v842 = vadd.f32 %v810, 0.5
        %v843 = vadd.f32 %v811, 0.5
        %v844 = vadd.f32 %v812, 0.5
        %v845 = vadd.f32 %v813, 0.5
        %v846 = vadd.f32 %v814, 0.5
        %v847 = vadd.f32 %v815, 0.5
        %v848 = vadd.f32 %v816, 0.5
        %v849 = vadd.f32 %v817, 0.5
        %v850 = vadd.f32 %v818, 0.5
        %v851 = vadd.f32 %v819, 0.5
        %v852 = vfloor.f32 %v820
        %v853 = vfloor.f32 %v821
        %v854 = vfloor.f32 %v822
        %v855 = vfloor.f32 %v823
        %v856 = vfloor.f32 %v824
        %v857 = vfloor.f32 %v825
        %v858 = vfloor.f32 %v826
        %v859 = vfloor.f32 %v827
        %v860 = vfloor.f32 %v828
        %v861 = vfloor.f32 %v829
        %v862 = vfloor.f32 %v830
        %v863 = vfloor.f32 %v831
        %v864 = vfloor.f32 %v832
        %v865 = vfloor.f32 %v833
        %v866 = vfloor.f32 %v834
        %v867 = vfloor.f32 %v835
        %v868 = vfloor.f32 %v836
        %v869 = vfloor.f32 %v837
        %v870 = vfloor.f32 %v838
        %v871 = vfloor.f32 %v839
        %v872 = vfloor.f32 %v840
        %v873 = vfloor.f32 %v841
        %v874 = vfloor.f32 %v842
        %v875 = vfloor.f32 %v843
        %v876 = vfloor.f32 %v844
        %v877 = vfloor.f32 %v845
        %v878 = vfloor.f32 %v846
        %v879 = vfloor.f32 %v847
        %v880 = vfloor.f32 %v848
        %v881 = vfloor.f32 %v849
        %v882 = vfloor.f32 %v850
        %v883 = vfloor.f32 %v851
        %v884 = vmul.f32 %v852, 3.140625
        %v885 = vmul.f32 %v853, 3.140625
        %v886 = vmul.f32 %v854, 3.140625
        %v887 = vmul.f32 %v855, 3.140625
        %v888 = vmul.f32 %v856, 3.140625
        %v889 = vmul.f32 %v857, 3.140625
        %v890 = vmul.f32 %v858, 3.140625
        %v891 = vmul.f32 %v859, 3.140625
        %v892 = vmul.f32 %v860, 3.140625
        %v893 = vmul.f32 %v861, 3.140625
        %v894 = vmul.f32 %v862, 3.140625
        %v895 = vmul.f32 %v863, 3.140625
        %v896 = vmul.f32 %v864, 3.140625
        %v897 = vmul.f32 %v865, 3.140625
        %v898 = vmul.f32 %v866, 3.140625
        %v899 = vmul.f32 %v867, 3.140625
        %v900 = vmul.f32 %v868, 3.140625
        %v901 = vmul.f32 %v869, 3.140625
        %v902 = vmul.f32 %v870, 3.140625
        %v903 = vmul.f32 %v871, 3.140625
        %v904 = vmul.f32 %v872, 3.140625
        %v905 = vmul.f32 %v873, 3.140625
        %v906 = vmul.f32 %v874, 3.140625
        %v907 = vmul.f32 %v875, 3.140625
        %v908 = vmul.f32 %v876, 3.140625
        %v909 = vmul.f32 %v877, 3.140625
        %v910 = vmul.f32 %v878, 3.140625
        %v911 = vmul.f32 %v879, 3.140625
        %v912 = vmul.f32 %v880, 3.140625
        %v913 = vmul.f32 %v881, 3.140625
        %v914 = vmul.f32 %v882, 3.140625
        %v915 = vmul.f32 %v883, 3.140625
        %v916 = vsub.f32 %v499, %v884
        %v917 = vsub.f32 %v501, %v885
        %v918 = vsub.f32 %v588, %v886
        %v919 = vsub.f32 %v590, %v887
        %v920 = vsub.f32 %v677, %v888
        %v921 = vsub.f32 %v679, %v889
        %v922 = vsub.f32 %v766, %v890
        %v923 = vsub.f32 %v768, %v891
        %v924 = vsub.f32 %v505, %v892
        %v925 = vsub.f32 %v507, %v893
        %v926 = vsub.f32 %v594, %v894
        %v927 = vsub.f32 %v596, %v895
        %v928 = vsub.f32 %v683, %v896
        %v929 = vsub.f32 %v685, %v897
        %v930 = vsub.f32 %v772, %v898
        %v931 = vsub.f32 %v774, %v899
        %v932 = vsub.f32 %v511, %v900
        %v933 = vsub.f32 %v513, %v901
        %v934 = vsub.f32 %v600, %v902
        %v935 = vsub.f32 %v602, %v903
        %v936 = vsub.f32 %v689, %v904
        %v937 = vsub.f32 %v691, %v905
        %v938 = vsub.f32 %v778, %v906
        %v939 = vsub.f32 %v780, %v907
        %v940 = vsub.f32 %v517, %v908
        %v941 = vsub.f32 %v519, %v909
        %v942 = vsub.f32 %v606, %v910
        %v943 = vsub.f32 %v608, %v911
        %v944 = vsub.f32 %v695, %v912
        %v945 = vsub.f32 %v697, %v913
        %v946 = vsub.f32 %v784, %v914
        %v947 = vsub.f32 %v786, %v915
        %v948 = vmul.f32 %v852, 0.00096702576
        %v949 = vmul.f32 %v853, 0.00096702576
        %v950 = vmul.f32 %v854, 0.00096702576
        %v951 = vmul.f32 %v855, 0.00096702576
        %v952 = vmul.f32 %v856, 0.00096702576
        %v953 = vmul.f32 %v857, 0.00096702576
        %v954 = vmul.f32 %v858, 0.00096702576
        %v955 = vmul.f32 %v859, 0.00096702576
        %v956 = vmul.f32 %v860, 0.00096702576
        %v957 = vmul.f32 %v861, 0.00096702576
        %v958 = vmul.f32 %v862, 0.00096702576
        %v959 = vmul.f32 %v863, 0.00096702576
        %v960 = vmul.f32 %v864, 0.00096702576
        %v961 = vmul.f32 %v865, 0.00096702576
        %v962 = vmul.f32 %v866, 0.00096702576
        %v963 = vmul.f32 %v867, 0.00096702576
        %v964 = vmul.f32 %v868, 0.00096702576
        %v965 = vmul.f32 %v869, 0.00096702576
        %v966 = vmul.f32 %v870, 0.00096702576
        %v967 = vmul.f32 %v871, 0.00096702576
        %v968 = vmul.f32 %v872, 0.00096702576
        %v969 = vmul.f32 %v873, 0.00096702576
        %v970 = vmul.f32 %v874, 0.00096702576
        %v971 = vmul.f32 %v875, 0.00096702576
        %v972 = vmul.f32 %v876, 0.00096702576
        %v973 = vmul.f32 %v877, 0.00096702576
        %v974 = vmul.f32 %v878, 0.00096702576
        %v975 = vmul.f32 %v879, 0.00096702576
        %v976 = vmul.f32 %v880, 0.00096702576
        %v977 = vmul.f32 %v881, 0.00096702576
        %v978 = vmul.f32 %v882, 0.00096702576
        %v979 = vmul.f32 %v883, 0.00096702576
        %v980 = vsub.f32 %v916, %v948
        %v981 = vsub.f32 %v917, %v949
        %v982 = vsub.f32 %v918, %v950
        %v983 = vsub.f32 %v919, %v951
        %v984 = vsub.f32 %v920, %v952
        %v985 = vsub.f32 %v921, %v953
        %v986 = vsub.f32 %v922, %v954
        %v987 = vsub.f32 %v923, %v955
        %v988 = vsub.f32 %v924, %v956
        %v989 = vsub.f32 %v925, %v957
        %v990 = vsub.f32 %v926, %v958
        %v991 = vsub.f32 %v927, %v959
        %v992 = vsub.f32 %v928, %v960
        %v993 = vsub.f32 %v929, %v961
        %v994 = vsub.f32 %v930, %v962
        %v995 = vsub.f32 %v931, %v963
        %v996 = vsub.f32 %v932, %v964
        %v997 = vsub.f32 %v933, %v965
        %v998 = vsub.f32 %v934, %v966
        %v999 = vsub.f32 %v935, %v967
        %v1000 = vsub.f32 %v936, %v968
        %v1001 = vsub.f32 %v937, %v969
        %v1002 = vsub.f32 %v938, %v970
        %v1003 = vsub.f32 %v939, %v971
        %v1004 = vsub.f32 %v940, %v972
        %v1005 = vsub.f32 %v941, %v973
        %v1006 = vsub.f32 %v942, %v974
        %v1007 = vsub.f32 %v943, %v975
        %v1008 = vsub.f32 %v944, %v976
        %v1009 = vsub.f32 %v945, %v977
        %v1010 = vsub.f32 %v946, %v978
        %v1011 = vsub.f32 %v947, %v979
        %v1012 = vmul.f32 %v852, 6.277114e-07
        %v1013 = vmul.f32 %v853, 6.277114e-07
        %v1014 = vmul.f32 %v854, 6.277114e-07
        %v1015 = vmul.f32 %v855, 6.277114e-07
        %v1016 = vmul.f32 %v856, 6.277114e-07
        %v1017 = vmul.f32 %v857, 6.277114e-07
        %v1018 = vmul.f32 %v858, 6.277114e-07
        %v1019 = vmul.f32 %v859, 6.277114e-07
        %v1020 = vmul.f32 %v860, 6.277114e-07
        %v1021 = vmul.f32 %v861, 6.277114e-07
        %v1022 = vmul.f32 %v862, 6.277114e-07
        %v1023 = vmul.f32 %v863, 6.277114e-07
        %v1024 = vmul.f32 %v864, 6.277114e-07
        %v1025 = vmul.f32 %v865, 6.277114e-07
        %v1026 = vmul.f32 %v866, 6.277114e-07
        %v1027 = vmul.f32 %v867, 6.277114e-07
        %v1028 = vmul.f32 %v868, 6.277114e-07
        %v1029 = vmul.f32 %v869, 6.277114e-07
        %v1030 = vmul.f32 %v870, 6.277114e-07
        %v1031 = vmul.f32 %v871, 6.277114e-07
        %v1032 = vmul.f32 %v872, 6.277114e-07
        %v1033 = vmul.f32 %v873, 6.277114e-07
        %v1034 = vmul.f32 %v874, 6.277114e-07
        %v1035 = vmul.f32 %v875, 6.277114e-07
        %v1036 = vmul.f32 %v876, 6.277114e-07
        %v1037 = vmul.f32 %v877, 6.277114e-07
        %v1038 = vmul.f32 %v878, 6.277114e-07
        %v1039 = vmul.f32 %v879, 6.277114e-07
        %v1040 = vmul.f32 %v880, 6.277114e-07
        %v1041 = vmul.f32 %v881, 6.277114e-07
        %v1042 = vmul.f32 %v882, 6.277114e-07
        %v1043 = vmul.f32 %v883, 6.277114e-07
        %v1044 = vsub.f32 %v980, %v1012
        %v1045 = vsub.f32 %v981, %v1013
        %v1046 = vsub.f32 %v982, %v1014
        %v1047 = vsub.f32 %v983, %v1015
        %v1048 = vsub.f32 %v984, %v1016
        %v1049 = vsub.f32 %v985, %v1017
        %v1050 = vsub.f32 %v986, %v1018
        %v1051 = vsub.f32 %v987, %v1019
        %v1052 = vsub.f32 %v988, %v1020
        %v1053 = vsub.f32 %v989, %v1021
        %v1054 = vsub.f32 %v990, %v1022
        %v1055 = vsub.f32 %v991, %v1023
        %v1056 = vsub.f32 %v992, %v1024
        %v1057 = vsub.f32 %v993, %v1025
        %v1058 = vsub.f32 %v994, %v1026
        %v1059 = vsub.f32 %v995, %v1027
        %v1060 = vsub.f32 %v996, %v1028
        %v1061 = vsub.f32 %v997, %v1029
        %v1062 = vsub.f32 %v998, %v1030
        %v1063 = vsub.f32 %v999, %v1031
        %v1064 = vsub.f32 %v1000, %v1032
        %v1065 = vsub.f32 %v1001, %v1033
        %v1066 = vsub.f32 %v1002, %v1034
        %v1067 = vsub.f32 %v1003, %v1035
        %v1068 = vsub.f32 %v1004, %v1036
        %v1069 = vsub.f32 %v1005, %v1037
        %v1070 = vsub.f32 %v1006, %v1038
        %v1071 = vsub.f32 %v1007, %v1039
        %v1072 = vsub.f32 %v1008, %v1040
        %v1073 = vsub.f32 %v1009, %v1041
        %v1074 = vsub.f32 %v1010, %v1042
        %v1075 = vsub.f32 %v1011, %v1043
        %v1076 = vmul.f32 %v852, 0.5
        %v1077 = vmul.f32 %v853, 0.5
        %v1078 = vmul.f32 %v854, 0.5
        %v1079 = vmul.f32 %v855, 0.5
        %v1080 = vmul.f32 %v856, 0.5
        %v1081 = vmul.f32 %v857, 0.5
        %v1082 = vmul.f32 %v858, 0.5
        %v1083 = vmul.f32 %v859, 0.5
        %v1084 = vmul.f32 %v860, 0.5
        %v1085 = vmul.f32 %v861, 0.5
        %v1086 = vmul.f32 %v862, 0.5
        %v1087 = vmul.f32 %v863, 0.5
        %v1088 = vmul.f32 %v864, 0.5
        %v1089 = vmul.f32 %v865, 0.5
        %v1090 = vmul.f32 %v866, 0.5
        %v1091 = vmul.f32 %v867, 0.5
        %v1092 = vmul.f32 %v868, 0.5
        %v1093 = vmul.f32 %v869, 0.5
        %v1094 = vmul.f32 %v870, 0.5
        %v1095 = vmul.f32 %v871, 0.5
        %v1096 = vmul.f32 %v872, 0.5
        %v1097 = vmul.f32 %v873, 0.5
        %v1098 = vmul.f32 %v874, 0.5
        %v1099 = vmul.f32 %v875, 0.5
        %v1100 = vmul.f32 %v876, 0.5
        %v1101 = vmul.f32 %v877, 0.5
        %v1102 = vmul.f32 %v878, 0.5
        %v1103 = vmul.f32 %v879, 0.5
        %v1104 = vmul.f32 %v880, 0.5
        %v1105 = vmul.f32 %v881, 0.5
        %v1106 = vmul.f32 %v882, 0.5
        %v1107 = vmul.f32 %v883, 0.5
        %v1108 = vfloor.f32 %v1076
        %v1109 = vfloor.f32 %v1077
        %v1110 = vfloor.f32 %v1078
        %v1111 = vfloor.f32 %v1079
        %v1112 = vfloor.f32 %v1080
        %v1113 = vfloor.f32 %v1081
        %v1114 = vfloor.f32 %v1082
        %v1115 = vfloor.f32 %v1083
        %v1116 = vfloor.f32 %v1084
        %v1117 = vfloor.f32 %v1085
        %v1118 = vfloor.f32 %v1086
        %v1119 = vfloor.f32 %v1087
        %v1120 = vfloor.f32 %v1088
        %v1121 = vfloor.f32 %v1089
        %v1122 = vfloor.f32 %v1090
        %v1123 = vfloor.f32 %v1091
        %v1124 = vfloor.f32 %v1092
        %v1125 = vfloor.f32 %v1093
        %v1126 = vfloor.f32 %v1094
        %v1127 = vfloor.f32 %v1095
        %v1128 = vfloor.f32 %v1096
        %v1129 = vfloor.f32 %v1097
        %v1130 = vfloor.f32 %v1098
        %v1131 = vfloor.f32 %v1099
        %v1132 = vfloor.f32 %v1100
        %v1133 = vfloor.f32 %v1101
        %v1134 = vfloor.f32 %v1102
        %v1135 = vfloor.f32 %v1103
        %v1136 = vfloor.f32 %v1104
        %v1137 = vfloor.f32 %v1105
        %v1138 = vfloor.f32 %v1106
        %v1139 = vfloor.f32 %v1107
        %v1140 = vmul.f32 %v1108, 2.0
        %v1141 = vmul.f32 %v1109, 2.0
        %v1142 = vmul.f32 %v1110, 2.0
        %v1143 = vmul.f32 %v1111, 2.0
        %v1144 = vmul.f32 %v1112, 2.0
        %v1145 = vmul.f32 %v1113, 2.0
        %v1146 = vmul.f32 %v1114, 2.0
        %v1147 = vmul.f32 %v1115, 2.0
        %v1148 = vmul.f32 %v1116, 2.0
        %v1149 = vmul.f32 %v1117, 2.0
        %v1150 = vmul.f32 %v1118, 2.0
        %v1151 = vmul.f32 %v1119, 2.0
        %v1152 = vmul.f32 %v1120, 2.0
        %v1153 = vmul.f32 %v1121, 2.0
        %v1154 = vmul.f32 %v1122, 2.0
        %v1155 = vmul.f32 %v1123, 2.0
        %v1156 = vmul.f32 %v1124, 2.0
        %v1157 = vmul.f32 %v1125, 2.0
        %v1158 = vmul.f32 %v1126, 2.0
        %v1159 = vmul.f32 %v1127, 2.0
        %v1160 = vmul.f32 %v1128, 2.0
        %v1161 = vmul.f32 %v1129, 2.0
        %v1162 = vmul.f32 %v1130, 2.0
        %v1163 = vmul.f32 %v1131, 2.0
        %v1164 = vmul.f32 %v1132, 2.0
        %v1165 = vmul.f32 %v1133, 2.0
        %v1166 = vmul.f32 %v1134, 2.0
        %v1167 = vmul.f32 %v1135, 2.0
        %v1168 = vmul.f32 %v1136, 2.0
        %v1169 = vmul.f32 %v1137, 2.0
        %v1170 = vmul.f32 %v1138, 2.0
        %v1171 = vmul.f32 %v1139, 2.0
        %v1172 = vsub.f32 %v852, %v1140
        %v1173 = vsub.f32 %v853, %v1141
        %v1174 = vsub.f32 %v854, %v1142
        %v1175 = vsub.f32 %v855, %v1143
        %v1176 = vsub.f32 %v856, %v1144
        %v1177 = vsub.f32 %v857, %v1145
        %v1178 = vsub.f32 %v858, %v1146
        %v1179 = vsub.f32 %v859, %v1147
        %v1180 = vsub.f32 %v860, %v1148
        %v1181 = vsub.f32 %v861, %v1149
        %v1182 = vsub.f32 %v862, %v1150
        %v1183 = vsub.f32 %v863, %v1151
        %v1184 = vsub.f32 %v864, %v1152
        %v1185 = vsub.f32 %v865, %v1153
        %v1186 = vsub.f32 %v866, %v1154
        %v1187 = vsub.f32 %v867, %v1155
        %v1188 = vsub.f32 %v868, %v1156
        %v1189 = vsub.f32 %v869, %v1157
        %v1190 = vsub.f32 %v870, %v1158
        %v1191 = vsub.f32 %v871, %v1159
        %v1192 = vsub.f32 %v872, %v1160
        %v1193 = vsub.f32 %v873, %v1161
        %v1194 = vsub.f32 %v874, %v1162
        %v1195 = vsub.f32 %v875, %v1163
        %v1196 = vsub.f32 %v876, %v1164
        %v1197 = vsub.f32 %v877, %v1165
        %v1198 = vsub.f32 %v878, %v1166
        %v1199 = vsub.f32 %v879, %v1167
        %v1200 = vsub.f32 %v880, %v1168
        %v1201 = vsub.f32 %v881, %v1169
        %v1202 = vsub.f32 %v882, %v1170
        %v1203 = vsub.f32 %v883, %v1171
        %v1204 = vmul.f32 %v1172, 2.0
        %v1205 = vmul.f32 %v1173, 2.0
        %v1206 = vmul.f32 %v1174, 2.0
        %v1207 = vmul.f32 %v1175, 2.0
        %v1208 = vmul.f32 %v1176, 2.0
        %v1209 = vmul.f32 %v1177, 2.0
        %v1210 = vmul.f32 %v1178, 2.0
        %v1211 = vmul.f32 %v1179, 2.0
        %v1212 = vmul.f32 %v1180, 2.0
        %v1213 = vmul.f32 %v1181, 2.0
        %v1214 = vmul.f32 %v1182, 2.0
        %v1215 = vmul.f32 %v1183, 2.0
        %v1216 = vmul.f32 %v1184, 2.0
        %v1217 = vmul.f32 %v1185, 2.0
        %v1218 = vmul.f32 %v1186, 2.0
        %v1219 = vmul.f32 %v1187, 2.0
        %v1220 = vmul.f32 %v1188, 2.0
        %v1221 = vmul.f32 %v1189, 2.0
        %v1222 = vmul.f32 %v1190, 2.0
        %v1223 = vmul.f32 %v1191, 2.0
        %v1224 = vmul.f32 %v1192, 2.0
        %v1225 = vmul.f32 %v1193, 2.0
        %v1226 = vmul.f32 %v1194, 2.0
        %v1227 = vmul.f32 %v1195, 2.0
        %v1228 = vmul.f32 %v1196, 2.0
        %v1229 = vmul.f32 %v1197, 2.0
        %v1230 = vmul.f32 %v1198, 2.0
        %v1231 = vmul.f32 %v1199, 2.0
        %v1232 = vmul.f32 %v1200, 2.0
        %v1233 = vmul.f32 %v1201, 2.0
        %v1234 = vmul.f32 %v1202, 2.0
        %v1235 = vmul.f32 %v1203, 2.0
        %v1236 = vsub.f32 1.0, %v1204
        %v1237 = vsub.f32 1.0, %v1205
        %v1238 = vsub.f32 1.0, %v1206
        %v1239 = vsub.f32 1.0, %v1207
        %v1240 = vsub.f32 1.0, %v1208
        %v1241 = vsub.f32 1.0, %v1209
        %v1242 = vsub.f32 1.0, %v1210
        %v1243 = vsub.f32 1.0, %v1211
        %v1244 = vsub.f32 1.0, %v1212
        %v1245 = vsub.f32 1.0, %v1213
        %v1246 = vsub.f32 1.0, %v1214
        %v1247 = vsub.f32 1.0, %v1215
        %v1248 = vsub.f32 1.0, %v1216
        %v1249 = vsub.f32 1.0, %v1217
        %v1250 = vsub.f32 1.0, %v1218
        %v1251 = vsub.f32 1.0, %v1219
        %v1252 = vsub.f32 1.0, %v1220
        %v1253 = vsub.f32 1.0, %v1221
        %v1254 = vsub.f32 1.0, %v1222
        %v1255 = vsub.f32 1.0, %v1223
        %v1256 = vsub.f32 1.0, %v1224
        %v1257 = vsub.f32 1.0, %v1225
        %v1258 = vsub.f32 1.0, %v1226
        %v1259 = vsub.f32 1.0, %v1227
        %v1260 = vsub.f32 1.0, %v1228
        %v1261 = vsub.f32 1.0, %v1229
        %v1262 = vsub.f32 1.0, %v1230
        %v1263 = vsub.f32 1.0, %v1231
        %v1264 = vsub.f32 1.0, %v1232
        %v1265 = vsub.f32 1.0, %v1233
        %v1266 = vsub.f32 1.0, %v1234
        %v1267 = vsub.f32 1.0, %v1235
        %v1268 = vmul.f32 %v1044, %v1044
        %v1269 = vmul.f32 %v1045, %v1045
        %v1270 = vmul.f32 %v1046, %v1046
        %v1271 = vmul.f32 %v1047, %v1047
        %v1272 = vmul.f32 %v1048, %v1048
        %v1273 = vmul.f32 %v1049, %v1049
        %v1274 = vmul.f32 %v1050, %v1050
        %v1275 = vmul.f32 %v1051, %v1051
        %v1276 = vmul.f32 %v1052, %v1052
        %v1277 = vmul.f32 %v1053, %v1053
        %v1278 = vmul.f32 %v1054, %v1054
        %v1279 = vmul.f32 %v1055, %v1055
        %v1280 = vmul.f32 %v1056, %v1056
        %v1281 = vmul.f32 %v1057, %v1057
        %v1282 = vmul.f32 %v1058, %v1058
        %v1283 = vmul.f32 %v1059, %v1059
        %v1284 = vmul.f32 %v1060, %v1060
        %v1285 = vmul.f32 %v1061, %v1061
        %v1286 = vmul.f32 %v1062, %v1062
        %v1287 = vmul.f32 %v1063, %v1063
        %v1288 = vmul.f32 %v1064, %v1064
        %v1289 = vmul.f32 %v1065, %v1065
        %v1290 = vmul.f32 %v1066, %v1066
        %v1291 = vmul.f32 %v1067, %v1067
        %v1292 = vmul.f32 %v1068, %v1068
        %v1293 = vmul.f32 %v1069, %v1069
        %v1294 = vmul.f32 %v1070, %v1070
        %v1295 = vmul.f32 %v1071, %v1071
        %v1296 = vmul.f32 %v1072, %v1072
        %v1297 = vmul.f32 %v1073, %v1073
        %v1298 = vmul.f32 %v1074, %v1074
        %v1299 = vmul.f32 %v1075, %v1075
        %v1300 = vmul.f32 %v1268, 2.608316e-06
        %v1301 = vmul.f32 %v1269, 2.608316e-06
        %v1302 = vmul.f32 %v1270, 2.608316e-06
        %v1303 = vmul.f32 %v1271, 2.608316e-06
        %v1304 = vmul.f32 %v1272, 2.608316e-06
        %v1305 = vmul.f32 %v1273, 2.608316e-06
        %v1306 = vmul.f32 %v1274, 2.608316e-06
        %v1307 = vmul.f32 %v1275, 2.608316e-06
        %v1308 = vmul.f32 %v1276, 2.608316e-06
        %v1309 = vmul.f32 %v1277, 2.608316e-06
        %v1310 = vmul.f32 %v1278, 2.608316e-06
        %v1311 = vmul.f32 %v1279, 2.608316e-06
        %v1312 = vmul.f32 %v1280, 2.608316e-06
        %v1313 = vmul.f32 %v1281, 2.608316e-06
        %v1314 = vmul.f32 %v1282, 2.608316e-06
        %v1315 = vmul.f32 %v1283, 2.608316e-06
        %v1316 = vmul.f32 %v1284, 2.608316e-06
        %v1317 = vmul.f32 %v1285, 2.608316e-06
        %v1318 = vmul.f32 %v1286, 2.608316e-06
        %v1319 = vmul.f32 %v1287, 2.608316e-06
        %v1320 = vmul.f32 %v1288, 2.608316e-06
        %v1321 = vmul.f32 %v1289, 2.608316e-06
        %v1322 = vmul.f32 %v1290, 2.608316e-06
        %v1323 = vmul.f32 %v1291, 2.608316e-06
        %v1324 = vmul.f32 %v1292, 2.608316e-06
        %v1325 = vmul.f32 %v1293, 2.608316e-06
        %v1326 = vmul.f32 %v1294, 2.608316e-06
        %v1327 = vmul.f32 %v1295, 2.608316e-06
        %v1328 = vmul.f32 %v1296, 2.608316e-06
        %v1329 = vmul.f32 %v1297, 2.608316e-06
        %v1330 = vmul.f32 %v1298, 2.608316e-06
        %v1331 = vmul.f32 %v1299, 2.608316e-06
        %v1332 = vadd.f32 %v1300, -0.0001981069
        %v1333 = vadd.f32 %v1301, -0.0001981069
        %v1334 = vadd.f32 %v1302, -0.0001981069
        %v1335 = vadd.f32 %v1303, -0.0001981069
        %v1336 = vadd.f32 %v1304, -0.0001981069
        %v1337 = vadd.f32 %v1305, -0.0001981069
        %v1338 = vadd.f32 %v1306, -0.0001981069
        %v1339 = vadd.f32 %v1307, -0.0001981069
        %v1340 = vadd.f32 %v1308, -0.0001981069
        %v1341 = vadd.f32 %v1309, -0.0001981069
        %v1342 = vadd.f32 %v1310, -0.0001981069
        %v1343 = vadd.f32 %v1311, -0.0001981069
        %v1344 = vadd.f32 %v1312, -0.0001981069
        %v1345 = vadd.f32 %v1313, -0.0001981069
        %v1346 = vadd.f32 %v1314, -0.0001981069
        %v1347 = vadd.f32 %v1315, -0.0001981069
        %v1348 = vadd.f32 %v1316, -0.0001981069
        %v1349 = vadd.f32 %v1317, -0.0001981069
        %v1350 = vadd.f32 %v1318, -0.0001981069
        %v1351 = vadd.f32 %v1319, -0.0001981069
        %v1352 = vadd.f32 %v1320, -0.0001981069
        %v1353 = vadd.f32 %v1321, -0.0001981069
        %v1354 = vadd.f32 %v1322, -0.0001981069
        %v1355 = vadd.f32 %v1323, -0.0001981069
        %v1356 = vadd.f32 %v1324, -0.0001981069
        %v1357 = vadd.f32 %v1325, -0.0001981069
        %v1358 = vadd.f32 %v1326, -0.0001981069
        %v1359 = vadd.f32 %v1327, -0.0001981069
        %v1360 = vadd.f32 %v1328, -0.0001981069
        %v1361 = vadd.f32 %v1329, -0.0001981069
        %v1362 = vadd.f32 %v1330, -0.0001981069
        %v1363 = vadd.f32 %v1331, -0.0001981069
        %v1364 = vmul.f32 %v1332, %v1268
        %v1365 = vmul.f32 %v1333, %v1269
        %v1366 = vmul.f32 %v1334, %v1270
        %v1367 = vmul.f32 %v1335, %v1271
        %v1368 = vmul.f32 %v1336, %v1272
        %v1369 = vmul.f32 %v1337, %v1273
        %v1370 = vmul.f32 %v1338, %v1274
        %v1371 = vmul.f32 %v1339, %v1275
        %v1372 = vmul.f32 %v1340, %v1276
        %v1373 = vmul.f32 %v1341, %v1277
        %v1374 = vmul.f32 %v1342, %v1278
        %v1375 = vmul.f32 %v1343, %v1279
        %v1376 = vmul.f32 %v1344, %v1280
        %v1377 = vmul.f32 %v1345, %v1281
        %v1378 = vmul.f32 %v1346, %v1282
        %v1379 = vmul.f32 %v1347, %v1283
        %v1380 = vmul.f32 %v1348, %v1284
        %v1381 = vmul.f32 %v1349, %v1285
        %v1382 = vmul.f32 %v1350, %v1286
        %v1383 = vmul.f32 %v1351, %v1287
        %v1384 = vmul.f32 %v1352, %v1288
        %v1385 = vmul.f32 %v1353, %v1289
        %v1386 = vmul.f32 %v1354, %v1290
        %v1387 = vmul.f32 %v1355, %v1291
        %v1388 = vmul.f32 %v1356, %v1292
        %v1389 = vmul.f32 %v1357, %v1293
        %v1390 = vmul.f32 %v1358, %v1294
        %v1391 = vmul.f32 %v1359, %v1295
        %v1392 = vmul.f32 %v1360, %v1296
        %v1393 = vmul.f32 %v1361, %v1297
        %v1394 = vmul.f32 %v1362, %v1298
        %v1395 = vmul.f32 %v1363, %v1299
        %v1396 = vadd.f32 %v1364, 0.008333079
        %v1397 = vadd.f32 %v1365, 0.008333079
        %v1398 = vadd.f32 %v1366, 0.008333079
        %v1399 = vadd.f32 %v1367, 0.008333079
        %v1400 = vadd.f32 %v1368, 0.008333079
        %v1401 = vadd.f32 %v1369, 0.008333079
        %v1402 = vadd.f32 %v1370, 0.008333079
        %v1403 = vadd.f32 %v1371, 0.008333079
        %v1404 = vadd.f32 %v1372, 0.008333079
        %v1405 = vadd.f32 %v1373, 0.008333079
        %v1406 = vadd.f32 %v1374, 0.008333079
        %v1407 = vadd.f32 %v1375, 0.008333079
        %v1408 = vadd.f32 %v1376, 0.008333079
        %v1409 = vadd.f32 %v1377, 0.008333079
        %v1410 = vadd.f32 %v1378, 0.008333079
        %v1411 = vadd.f32 %v1379, 0.008333079
        %v1412 = vadd.f32 %v1380, 0.008333079
        %v1413 = vadd.f32 %v1381, 0.008333079
        %v1414 = vadd.f32 %v1382, 0.008333079
        %v1415 = vadd.f32 %v1383, 0.008333079
        %v1416 = vadd.f32 %v1384, 0.008333079
        %v1417 = vadd.f32 %v1385, 0.008333079
        %v1418 = vadd.f32 %v1386, 0.008333079
        %v1419 = vadd.f32 %v1387, 0.008333079
        %v1420 = vadd.f32 %v1388, 0.008333079
        %v1421 = vadd.f32 %v1389, 0.008333079
        %v1422 = vadd.f32 %v1390, 0.008333079
        %v1423 = vadd.f32 %v1391, 0.008333079
        %v1424 = vadd.f32 %v1392, 0.008333079
        %v1425 = vadd.f32 %v1393, 0.008333079
        %v1426 = vadd.f32 %v1394, 0.008333079
        %v1427 = vadd.f32 %v1395, 0.008333079
        %v1428 = vmul.f32 %v1396, %v1268
        %v1429 = vmul.f32 %v1397, %v1269
        %v1430 = vmul.f32 %v1398, %v1270
        %v1431 = vmul.f32 %v1399, %v1271
        %v1432 = vmul.f32 %v1400, %v1272
        %v1433 = vmul.f32 %v1401, %v1273
        %v1434 = vmul.f32 %v1402, %v1274
        %v1435 = vmul.f32 %v1403, %v1275
        %v1436 = vmul.f32 %v1404, %v1276
        %v1437 = vmul.f32 %v1405, %v1277
        %v1438 = vmul.f32 %v1406, %v1278
        %v1439 = vmul.f32 %v1407, %v1279
        %v1440 = vmul.f32 %v1408, %v1280
        %v1441 = vmul.f32 %v1409, %v1281
        %v1442 = vmul.f32 %v1410, %v1282
        %v1443 = vmul.f32 %v1411, %v1283
        %v1444 = vmul.f32 %v1412, %v1284
        %v1445 = vmul.f32 %v1413, %v1285
        %v1446 = vmul.f32 %v1414, %v1286
        %v1447 = vmul.f32 %v1415, %v1287
        %v1448 = vmul.f32 %v1416, %v1288
        %v1449 = vmul.f32 %v1417, %v1289
        %v1450 = vmul.f32 %v1418, %v1290
        %v1451 = vmul.f32 %v1419, %v1291
        %v1452 = vmul.f32 %v1420, %v1292
        %v1453 = vmul.f32 %v1421, %v1293
        %v1454 = vmul.f32 %v1422, %v1294
        %v1455 = vmul.f32 %v1423, %v1295
        %v1456 = vmul.f32 %v1424, %v1296
        %v1457 = vmul.f32 %v1425, %v1297
        %v1458 = vmul.f32 %v1426, %v1298
        %v1459 = vmul.f32 %v1427, %v1299
        %v1460 = vadd.f32 %v1428, -0.1666666
        %v1461 = vadd.f32 %v1429, -0.1666666
        %v1462 = vadd.f32 %v1430, -0.1666666
        %v1463 = vadd.f32 %v1431, -0.1666666
        %v1464 = vadd.f32 %v1432, -0.1666666
        %v1465 = vadd.f32 %v1433, -0.1666666
        %v1466 = vadd.f32 %v1434, -0.1666666
        %v1467 = vadd.f32 %v1435, -0.1666666
        %v1468 = vadd.f32 %v1436, -0.1666666
        %v1469 = vadd.f32 %v1437, -0.1666666
        %v1470 = vadd.f32 %v1438, -0.1666666
        %v1471 = vadd.f32 %v1439, -0.1666666
        %v1472 = vadd.f32 %v1440, -0.1666666
        %v1473 = vadd.f32 %v1441, -0.1666666
        %v1474 = vadd.f32 %v1442, -0.1666666
        %v1475 = vadd.f32 %v1443, -0.1666666
        %v1476 = vadd.f32 %v1444, -0.1666666
        %v1477 = vadd.f32 %v1445, -0.1666666
        %v1478 = vadd.f32 %v1446, -0.1666666
        %v1479 = vadd.f32 %v1447, -0.1666666
        %v1480 = vadd.f32 %v1448, -0.1666666
        %v1481 = vadd.f32 %v1449, -0.1666666
        %v1482 = vadd.f32 %v1450, -0.1666666
        %v1483 = vadd.f32 %v1451, -0.1666666
        %v1484 = vadd.f32 %v1452, -0.1666666
        %v1485 = vadd.f32 %v1453, -0.1666666
        %v1486 = vadd.f32 %v1454, -0.1666666
        %v1487 = vadd.f32 %v1455, -0.1666666
        %v1488 = vadd.f32 %v1456, -0.1666666
        %v1489 = vadd.f32 %v1457, -0.1666666
        %v1490 = vadd.f32 %v1458, -0.1666666
        %v1491 = vadd.f32 %v1459, -0.1666666
        %v1492 = vmul.f32 %v1044, %v1268
        %v1493 = vmul.f32 %v1045, %v1269
        %v1494 = vmul.f32 %v1046, %v1270
        %v1495 = vmul.f32 %v1047, %v1271
        %v1496 = vmul.f32 %v1048, %v1272
        %v1497 = vmul.f32 %v1049, %v1273
        %v1498 = vmul.f32 %v1050, %v1274
        %v1499 = vmul.f32 %v1051, %v1275
        %v1500 = vmul.f32 %v1052, %v1276
        %v1501 = vmul.f32 %v1053, %v1277
        %v1502 = vmul.f32 %v1054, %v1278
        %v1503 = vmul.f32 %v1055, %v1279
        %v1504 = vmul.f32 %v1056, %v1280
        %v1505 = vmul.f32 %v1057, %v1281
        %v1506 = vmul.f32 %v1058, %v1282
        %v1507 = vmul.f32 %v1059, %v1283
        %v1508 = vmul.f32 %v1060, %v1284
        %v1509 = vmul.f32 %v1061, %v1285
        %v1510 = vmul.f32 %v1062, %v1286
        %v1511 = vmul.f32 %v1063, %v1287
        %v1512 = vmul.f32 %v1064, %v1288
        %v1513 = vmul.f32 %v1065, %v1289
        %v1514 = vmul.f32 %v1066, %v1290
        %v1515 = vmul.f32 %v1067, %v1291
        %v1516 = vmul.f32 %v1068, %v1292
        %v1517 = vmul.f32 %v1069, %v1293
        %v1518 = vmul.f32 %v1070, %v1294
        %v1519 = vmul.f32 %v1071, %v1295
        %v1520 = vmul.f32 %v1072, %v1296
        %v1521 = vmul.f32 %v1073, %v1297
        %v1522 = vmul.f32 %v1074, %v1298
        %v1523 = vmul.f32 %v1075, %v1299
        %v1524 = vmul.f32 %v1492, %v1460
        %v1525 = vmul.f32 %v1493, %v1461
        %v1526 = vmul.f32 %v1494, %v1462
        %v1527 = vmul.f32 %v1495, %v1463
        %v1528 = vmul.f32 %v1496, %v1464
        %v1529 = vmul.f32 %v1497, %v1465
        %v1530 = vmul.f32 %v1498, %v1466
        %v1531 = vmul.f32 %v1499, %v1467
        %v1532 = vmul.f32 %v1500, %v1468
        %v1533 = vmul.f32 %v1501, %v1469
        %v1534 = vmul.f32 %v1502, %v1470
        %v1535 = vmul.f32 %v1503, %v1471
        %v1536 = vmul.f32 %v1504, %v1472
        %v1537 = vmul.f32 %v1505, %v1473
        %v1538 = vmul.f32 %v1506, %v1474
        %v1539 = vmul.f32 %v1507, %v1475
        %v1540 = vmul.f32 %v1508, %v1476
        %v1541 = vmul.f32 %v1509, %v1477
        %v1542 = vmul.f32 %v1510, %v1478
        %v1543 = vmul.f32 %v1511, %v1479
        %v1544 = vmul.f32 %v1512, %v1480
        %v1545 = vmul.f32 %v1513, %v1481
        %v1546 = vmul.f32 %v1514, %v1482
        %v1547 = vmul.f32 %v1515, %v1483
        %v1548 = vmul.f32 %v1516, %v1484
        %v1549 = vmul.f32 %v1517, %v1485
        %v1550 = vmul.f32 %v1518, %v1486
        %v1551 = vmul.f32 %v1519, %v1487
        %v1552 = vmul.f32 %v1520, %v1488
        %v1553 = vmul.f32 %v1521, %v1489
        %v1554 = vmul.f32 %v1522, %v1490
        %v1555 = vmul.f32 %v1523, %v1491
        %v1556 = vadd.f32 %v1044, %v1524
        %v1557 = vadd.f32 %v1045, %v1525
        %v1558 = vadd.f32 %v1046, %v1526
        %v1559 = vadd.f32 %v1047, %v1527
        %v1560 = vadd.f32 %v1048, %v1528
        %v1561 = vadd.f32 %v1049, %v1529
        %v1562 = vadd.f32 %v1050, %v1530
        %v1563 = vadd.f32 %v1051, %v1531
        %v1564 = vadd.f32 %v1052, %v1532
        %v1565 = vadd.f32 %v1053, %v1533
        %v1566 = vadd.f32 %v1054, %v1534
        %v1567 = vadd.f32 %v1055, %v1535
        %v1568 = vadd.f32 %v1056, %v1536
        %v1569 = vadd.f32 %v1057, %v1537
        %v1570 = vadd.f32 %v1058, %v1538
        %v1571 = vadd.f32 %v1059, %v1539
        %v1572 = vadd.f32 %v1060, %v1540
        %v1573 = vadd.f32 %v1061, %v1541
        %v1574 = vadd.f32 %v1062, %v1542
        %v1575 = vadd.f32 %v1063, %v1543
        %v1576 = vadd.f32 %v1064, %v1544
        %v1577 = vadd.f32 %v1065, %v1545
        %v1578 = vadd.f32 %v1066, %v1546
        %v1579 = vadd.f32 %v1067, %v1547
        %v1580 = vadd.f32 %v1068, %v1548
        %v1581 = vadd.f32 %v1069, %v1549
        %v1582 = vadd.f32 %v1070, %v1550
        %v1583 = vadd.f32 %v1071, %v1551
        %v1584 = vadd.f32 %v1072, %v1552
        %v1585 = vadd.f32 %v1073, %v1553
        %v1586 = vadd.f32 %v1074, %v1554
        %v1587 = vadd.f32 %v1075, %v1555
        %v1588 = vmul.f32 %v1236, %v1556
        %v1589 = vmul.f32 %v1237, %v1557
        %v1590 = vmul.f32 %v1238, %v1558
        %v1591 = vmul.f32 %v1239, %v1559
        %v1592 = vmul.f32 %v1240, %v1560
        %v1593 = vmul.f32 %v1241, %v1561
        %v1594 = vmul.f32 %v1242, %v1562
        %v1595 = vmul.f32 %v1243, %v1563
        %v1596 = vmul.f32 %v1244, %v1564
        %v1597 = vmul.f32 %v1245, %v1565
        %v1598 = vmul.f32 %v1246, %v1566
        %v1599 = vmul.f32 %v1247, %v1567
        %v1600 = vmul.f32 %v1248, %v1568
        %v1601 = vmul.f32 %v1249, %v1569
        %v1602 = vmul.f32 %v1250, %v1570
        %v1603 = vmul.f32 %v1251, %v1571
        %v1604 = vmul.f32 %v1252, %v1572
        %v1605 = vmul.f32 %v1253, %v1573
        %v1606 = vmul.f32 %v1254, %v1574
        %v1607 = vmul.f32 %v1255, %v1575
        %v1608 = vmul.f32 %v1256, %v1576
        %v1609 = vmul.f32 %v1257, %v1577
        %v1610 = vmul.f32 %v1258, %v1578
        %v1611 = vmul.f32 %v1259, %v1579
        %v1612 = vmul.f32 %v1260, %v1580
        %v1613 = vmul.f32 %v1261, %v1581
        %v1614 = vmul.f32 %v1262, %v1582
        %v1615 = vmul.f32 %v1263, %v1583
        %v1616 = vmul.f32 %v1264, %v1584
        %v1617 = vmul.f32 %v1265, %v1585
        %v1618 = vmul.f32 %v1266, %v1586
        %v1619 = vmul.f32 %v1267, %v1587
        %v1620 = vld [vmem:[%s3] sm:$0xff]
        %v1621 = vld [vmem:[%s3 + $0x8] sm:$0xff]
        %v1622 = vld [vmem:[%s3 + $0x10] sm:$0xff]
        %v1623 = vld [vmem:[%s3 + $0x18] sm:$0xff]
        %v1624 = vld [vmem:[%s4] sm:$0xff]
        %v1625 = vld [vmem:[%s4 + $0x8] sm:$0xff]
        %v1626 = vld [vmem:[%s4 + $0x10] sm:$0xff]
        %v1627 = vld [vmem:[%s4 + $0x18] sm:$0xff]
        %1629 = vset.pattern.permute.xlu0 0
        %1630 = vperm.xlu0 %1629, %v1624
        %v1631 = vpop.permute.xlu0 %1630
        %1634 = vset.pattern.permute.xlu0 0
        %1635 = vperm.xlu0 %1634, %v1625
        %v1636 = vpop.permute.xlu0 %1635
        %1639 = vset.pattern.permute.xlu0 0
        %1640 = vperm.xlu0 %1639, %v1626
        %v1641 = vpop.permute.xlu0 %1640
        %1644 = vset.pattern.permute.xlu0 0
        %1645 = vperm.xlu0 %1644, %v1627
        %v1646 = vpop.permute.xlu0 %1645
        %vm1648 = vcmask 261120
        %v1650 = vsel %vm1648, %v1620, 0
        %v1653 = vsel %vm1648, %v1621, 0
        %v1656 = vsel %vm1648, %v1622, 0
        %v1659 = vsel %vm1648, %v1623, 0
        %1661 = vmatprep.subr.mxu0 %v1589
        %1662 = vmatpush1.msra.mxu0 %v1588
        %1663 = vmatprep.subr.mxu0 %v1597
        %1664 = vmatpush1.msra.mxu0 %v1596
        %1665 = vmatprep.subr.mxu0 %v1605
        %1666 = vmatpush1.msra.mxu0 %v1604
        %1667 = vmatprep.subr.mxu0 %v1613
        %1668 = vmatpush1.msra.mxu0 %v1612
        %1669 = vmatprep.subr.mxu0 0.0
        %1670 = vmatpush1.msra.mxu0 0.0
        %1671 = vmatprep.subr.mxu0 0.0
        %1672 = vmatpush1.msra.mxu0 0.0
        %1673 = vmatprep.subr.mxu0 0.0
        %1674 = vmatpush1.msra.mxu0 0.0
        %1675 = vmatprep.subr.mxu0 0.0
        %1676 = vmatpush1.msra.mxu0 0.0
        %1677 = vmatprep.subr.mxu0 0.0
        %1678 = vmatpush1.msra.mxu0 0.0
        %1679 = vmatprep.subr.mxu0 0.0
        %1680 = vmatpush1.msra.mxu0 0.0
        %1681 = vmatprep.subr.mxu0 0.0
        %1682 = vmatpush1.msra.mxu0 0.0
        %1683 = vmatprep.subr.mxu0 0.0
        %1684 = vmatpush1.msra.mxu0 0.0
        %1685 = vmatprep.subr.mxu0 0.0
        %1686 = vmatpush1.msra.mxu0 0.0
        %1687 = vmatprep.subr.mxu0 0.0
        %1688 = vmatpush1.msra.mxu0 0.0
        %1689 = vmatprep.subr.mxu0 0.0
        %1690 = vmatpush1.msra.mxu0 0.0
        %1691 = vmatprep.subr.mxu0 0.0
        %1692 = vmatpush1.msra.mxu0 0.0
        %1693 = vmatprep.subr.mxu0 0.0
        %1694 = vmatpush1.msra.mxu0 0.0
        %1695 = vmatprep.subr.mxu0 0.0
        %1696 = vmatpush1.msra.mxu0 0.0
        %1697 = vmatprep.subr.mxu0 0.0
        %1698 = vmatpush1.msra.mxu0 0.0
        %1699 = vmatprep.subr.mxu0 0.0
        %1700 = vmatpush1.msra.mxu0 0.0
        %1701 = vmatprep.subr.mxu0 0.0
        %1702 = vmatpush1.msra.mxu0 0.0
        %1703 = vmatprep.subr.mxu0 0.0
        %1704 = vmatpush1.msra.mxu0 0.0
        %1705 = vmatprep.subr.mxu0 0.0
        %1706 = vmatpush1.msra.mxu0 0.0
        %1707 = vmatprep.subr.mxu0 0.0
        %1708 = vmatpush1.msra.mxu0 0.0
        %1709 = vmatprep.subr.mxu0 0.0
        %1710 = vmatpush1.msra.mxu0 0.0
        %1711 = vmatprep.subr.mxu0 0.0
        %1712 = vmatpush1.msra.mxu0 0.0
        %1713 = vmatprep.subr.mxu0 0.0
        %1714 = vmatpush1.msra.mxu0 0.0
        %1715 = vmatprep.subr.mxu0 0.0
        %1716 = vmatpush1.msra.mxu0 0.0
        %1717 = vmatprep.subr.mxu0 0.0
        %1718 = vmatpush1.msra.mxu0 0.0
        %1719 = vmatprep.subr.mxu0 0.0
        %1720 = vmatpush1.msra.mxu0 0.0
        %1721 = vmatprep.subr.mxu0 0.0
        %1722 = vmatpush1.msra.mxu0 0.0
        %1723 = vmatprep.subr.mxu0 0.0
        %1724 = vmatpush1.msra.mxu0 0.0
        %1725 = vmatprep.mubr.f32.mxu0 0.0
        %1726 = vmatmul.mubr.f32.gmra.mrb[0].mxu0 %v1650
        %v1727 = vpop.f32.mrb[0].mxu0
        %v1728 = vadd.f32 %v1631, %v1727
        %v1729 = vpop.f32.mrb[0].mxu0
        %v1730 = vadd.f32 %v1631, %v1729
        %1731 = vmatprep.mubr.f32.mxu0 0.0
        %1732 = vmatmul.mubr.f32.gmra.mrb[0].mxu0 %v1653
        %v1733 = vpop.f32.mrb[0].mxu0
        %v1734 = vadd.f32 %v1636, %v1733
        %v1735 = vpop.f32.mrb[0].mxu0
        %v1736 = vadd.f32 %v1636, %v1735
        %1737 = vmatprep.mubr.f32.mxu0 0.0
        %1738 = vmatmul.mubr.f32.gmra.mrb[0].mxu0 %v1656
        %v1739 = vpop.f32.mrb[0].mxu0
        %v1740 = vadd.f32 %v1641, %v1739
        %v1741 = vpop.f32.mrb[0].mxu0
        %v1742 = vadd.f32 %v1641, %v1741
        %1743 = vmatprep.mubr.f32.mxu0 0.0
        %1744 = vmatmul.mubr.f32.gmra.mrb[0].mxu0 %v1659
        %v1745 = vpop.f32.mrb[0].mxu0
        %v1746 = vadd.f32 %v1646, %v1745
        %v1747 = vpop.f32.mrb[0].mxu0
        %v1748 = vadd.f32 %v1646, %v1747
        %1749 = vdwg.mxu0
        %1750 = vmatprep.subr.mxu0 %v1591
        %1751 = vmatpush1.msra.mxu0 %v1590
        %1752 = vmatprep.subr.mxu0 %v1599
        %1753 = vmatpush1.msra.mxu0 %v1598
        %1754 = vmatprep.subr.mxu0 %v1607
        %1755 = vmatpush1.msra.mxu0 %v1606
        %1756 = vmatprep.subr.mxu0 %v1615
        %1757 = vmatpush1.msra.mxu0 %v1614
        %1758 = vmatprep.subr.mxu0 0.0
        %1759 = vmatpush1.msra.mxu0 0.0
        %1760 = vmatprep.subr.mxu0 0.0
        %1761 = vmatpush1.msra.mxu0 0.0
        %1762 = vmatprep.subr.mxu0 0.0
        %1763 = vmatpush1.msra.mxu0 0.0
        %1764 = vmatprep.subr.mxu0 0.0
        %1765 = vmatpush1.msra.mxu0 0.0
        %1766 = vmatprep.subr.mxu0 0.0
        %1767 = vmatpush1.msra.mxu0 0.0
        %1768 = vmatprep.subr.mxu0 0.0
        %1769 = vmatpush1.msra.mxu0 0.0
        %1770 = vmatprep.subr.mxu0 0.0
        %1771 = vmatpush1.msra.mxu0 0.0
        %1772 = vmatprep.subr.mxu0 0.0
        %1773 = vmatpush1.msra.mxu0 0.0
        %1774 = vmatprep.subr.mxu0 0.0
        %1775 = vmatpush1.msra.mxu0 0.0
        %1776 = vmatprep.subr.mxu0 0.0
        %1777 = vmatpush1.msra.mxu0 0.0
        %1778 = vmatprep.subr.mxu0 0.0
        %1779 = vmatpush1.msra.mxu0 0.0
        %1780 = vmatprep.subr.mxu0 0.0
        %1781 = vmatpush1.msra.mxu0 0.0
        %1782 = vmatprep.subr.mxu0 0.0
        %1783 = vmatpush1.msra.mxu0 0.0
        %1784 = vmatprep.subr.mxu0 0.0
        %1785 = vmatpush1.msra.mxu0 0.0
        %1786 = vmatprep.subr.mxu0 0.0
        %1787 = vmatpush1.msra.mxu0 0.0
        %1788 = vmatprep.subr.mxu0 0.0
        %1789 = vmatpush1.msra.mxu0 0.0
        %1790 = vmatprep.subr.mxu0 0.0
        %1791 = vmatpush1.msra.mxu0 0.0
        %1792 = vmatprep.subr.mxu0 0.0
        %1793 = vmatpush1.msra.mxu0 0.0
        %1794 = vmatprep.subr.mxu0 0.0
        %1795 = vmatpush1.msra.mxu0 0.0
        %1796 = vmatprep.subr.mxu0 0.0
        %1797 = vmatpush1.msra.mxu0 0.0
        %1798 = vmatprep.subr.mxu0 0.0
        %1799 = vmatpush1.msra.mxu0 0.0
        %1800 = vmatprep.subr.mxu0 0.0
        %1801 = vmatpush1.msra.mxu0 0.0
        %1802 = vmatprep.subr.mxu0 0.0
        %1803 = vmatpush1.msra.mxu0 0.0
        %1804 = vmatprep.subr.mxu0 0.0
        %1805 = vmatpush1.msra.mxu0 0.0
        %1806 = vmatprep.subr.mxu0 0.0
        %1807 = vmatpush1.msra.mxu0 0.0
        %1808 = vmatprep.subr.mxu0 0.0
        %1809 = vmatpush1.msra.mxu0 0.0
        %1810 = vmatprep.subr.mxu0 0.0
        %1811 = vmatpush1.msra.mxu0 0.0
        %1812 = vmatprep.subr.mxu0 0.0
        %1813 = vmatpush1.msra.mxu0 0.0
        %1814 = vmatprep.mubr.f32.mxu0 0.0
        %1815 = vmatmul.mubr.f32.gmra.mrb[0].mxu0 %v1650
        %v1816 = vpop.f32.mrb[0].mxu0
        %v1817 = vadd.f32 %v1631, %v1816
        %v1818 = vpop.f32.mrb[0].mxu0
        %v1819 = vadd.f32 %v1631, %v1818
        %1820 = vmatprep.mubr.f32.mxu0 0.0
        %1821 = vmatmul.mubr.f32.gmra.mrb[0].mxu0 %v1653
        %v1822 = vpop.f32.mrb[0].mxu0
        %v1823 = vadd.f32 %v1636, %v1822
        %v1824 = vpop.f32.mrb[0].mxu0
        %v1825 = vadd.f32 %v1636, %v1824
        %1826 = vmatprep.mubr.f32.mxu0 0.0
        %1827 = vmatmul.mubr.f32.gmra.mrb[0].mxu0 %v1656
        %v1828 = vpop.f32.mrb[0].mxu0
        %v1829 = vadd.f32 %v1641, %v1828
        %v1830 = vpop.f32.mrb[0].mxu0
        %v1831 = vadd.f32 %v1641, %v1830
        %1832 = vmatprep.mubr.f32.mxu0 0.0
        %1833 = vmatmul.mubr.f32.gmra.mrb[0].mxu0 %v1659
        %v1834 = vpop.f32.mrb[0].mxu0
        %v1835 = vadd.f32 %v1646, %v1834
        %v1836 = vpop.f32.mrb[0].mxu0
        %v1837 = vadd.f32 %v1646, %v1836
        %1838 = vdwg.mxu0
        %1839 = vmatprep.subr.mxu0 %v1593
        %1840 = vmatpush1.msra.mxu0 %v1592
        %1841 = vmatprep.subr.mxu0 %v1601
        %1842 = vmatpush1.msra.mxu0 %v1600
        %1843 = vmatprep.subr.mxu0 %v1609
        %1844 = vmatpush1.msra.mxu0 %v1608
        %1845 = vmatprep.subr.mxu0 %v1617
        %1846 = vmatpush1.msra.mxu0 %v1616
        %1847 = vmatprep.subr.mxu0 0.0
        %1848 = vmatpush1.msra.mxu0 0.0
        %1849 = vmatprep.subr.mxu0 0.0
        %1850 = vmatpush1.msra.mxu0 0.0
        %1851 = vmatprep.subr.mxu0 0.0
        %1852 = vmatpush1.msra.mxu0 0.0
        %1853 = vmatprep.subr.mxu0 0.0
        %1854 = vmatpush1.msra.mxu0 0.0
        %1855 = vmatprep.subr.mxu0 0.0
        %1856 = vmatpush1.msra.mxu0 0.0
        %1857 = vmatprep.subr.mxu0 0.0
        %1858 = vmatpush1.msra.mxu0 0.0
        %1859 = vmatprep.subr.mxu0 0.0
        %1860 = vmatpush1.msra.mxu0 0.0
        %1861 = vmatprep.subr.mxu0 0.0
        %1862 = vmatpush1.msra.mxu0 0.0
        %1863 = vmatprep.subr.mxu0 0.0
        %1864 = vmatpush1.msra.mxu0 0.0
        %1865 = vmatprep.subr.mxu0 0.0
        %1866 = vmatpush1.msra.mxu0 0.0
        %1867 = vmatprep.subr.mxu0 0.0
        %1868 = vmatpush1.msra.mxu0 0.0
        %1869 = vmatprep.subr.mxu0 0.0
        %1870 = vmatpush1.msra.mxu0 0.0
        %1871 = vmatprep.subr.mxu0 0.0
        %1872 = vmatpush1.msra.mxu0 0.0
        %1873 = vmatprep.subr.mxu0 0.0
        %1874 = vmatpush1.msra.mxu0 0.0
        %1875 = vmatprep.subr.mxu0 0.0
        %1876 = vmatpush1.msra.mxu0 0.0
        %1877 = vmatprep.subr.mxu0 0.0
        %1878 = vmatpush1.msra.mxu0 0.0
        %1879 = vmatprep.subr.mxu0 0.0
        %1880 = vmatpush1.msra.mxu0 0.0
        %1881 = vmatprep.subr.mxu0 0.0
        %1882 = vmatpush1.msra.mxu0 0.0
        %1883 = vmatprep.subr.mxu0 0.0
        %1884 = vmatpush1.msra.mxu0 0.0
        %1885 = vmatprep.subr.mxu0 0.0
        %1886 = vmatpush1.msra.mxu0 0.0
        %1887 = vmatprep.subr.mxu0 0.0
        %1888 = vmatpush1.msra.mxu0 0.0
        %1889 = vmatprep.subr.mxu0 0.0
        %1890 = vmatpush1.msra.mxu0 0.0
        %1891 = vmatprep.subr.mxu0 0.0
        %1892 = vmatpush1.msra.mxu0 0.0
        %1893 = vmatprep.subr.mxu0 0.0
        %1894 = vmatpush1.msra.mxu0 0.0
        %1895 = vmatprep.subr.mxu0 0.0
        %1896 = vmatpush1.msra.mxu0 0.0
        %1897 = vmatprep.subr.mxu0 0.0
        %1898 = vmatpush1.msra.mxu0 0.0
        %1899 = vmatprep.subr.mxu0 0.0
        %1900 = vmatpush1.msra.mxu0 0.0
        %1901 = vmatprep.subr.mxu0 0.0
        %1902 = vmatpush1.msra.mxu0 0.0
        %1903 = vmatprep.mubr.f32.mxu0 0.0
        %1904 = vmatmul.mubr.f32.gmra.mrb[0].mxu0 %v1650
        %v1905 = vpop.f32.mrb[0].mxu0
        %v1906 = vadd.f32 %v1631, %v1905
        %v1907 = vpop.f32.mrb[0].mxu0
        %v1908 = vadd.f32 %v1631, %v1907
        %1909 = vmatprep.mubr.f32.mxu0 0.0
        %1910 = vmatmul.mubr.f32.gmra.mrb[0].mxu0 %v1653
        %v1911 = vpop.f32.mrb[0].mxu0
        %v1912 = vadd.f32 %v1636, %v1911
        %v1913 = vpop.f32.mrb[0].mxu0
        %v1914 = vadd.f32 %v1636, %v1913
        %1915 = vmatprep.mubr.f32.mxu0 0.0
        %1916 = vmatmul.mubr.f32.gmra.mrb[0].mxu0 %v1656
        %v1917 = vpop.f32.mrb[0].mxu0
        %v1918 = vadd.f32 %v1641, %v1917
        %v1919 = vpop.f32.mrb[0].mxu0
        %v1920 = vadd.f32 %v1641, %v1919
        %1921 = vmatprep.mubr.f32.mxu0 0.0
        %1922 = vmatmul.mubr.f32.gmra.mrb[0].mxu0 %v1659
        %v1923 = vpop.f32.mrb[0].mxu0
        %v1924 = vadd.f32 %v1646, %v1923
        %v1925 = vpop.f32.mrb[0].mxu0
        %v1926 = vadd.f32 %v1646, %v1925
        %1927 = vdwg.mxu0
        %1928 = vmatprep.subr.mxu0 %v1595
        %1929 = vmatpush1.msra.mxu0 %v1594
        %1930 = vmatprep.subr.mxu0 %v1603
        %1931 = vmatpush1.msra.mxu0 %v1602
        %1932 = vmatprep.subr.mxu0 %v1611
        %1933 = vmatpush1.msra.mxu0 %v1610
        %1934 = vmatprep.subr.mxu0 %v1619
        %1935 = vmatpush1.msra.mxu0 %v1618
        %1936 = vmatprep.subr.mxu0 0.0
        %1937 = vmatpush1.msra.mxu0 0.0
        %1938 = vmatprep.subr.mxu0 0.0
        %1939 = vmatpush1.msra.mxu0 0.0
        %1940 = vmatprep.subr.mxu0 0.0
        %1941 = vmatpush1.msra.mxu0 0.0
        %1942 = vmatprep.subr.mxu0 0.0
        %1943 = vmatpush1.msra.mxu0 0.0
        %1944 = vmatprep.subr.mxu0 0.0
        %1945 = vmatpush1.msra.mxu0 0.0
        %1946 = vmatprep.subr.mxu0 0.0
        %1947 = vmatpush1.msra.mxu0 0.0
        %1948 = vmatprep.subr.mxu0 0.0
        %1949 = vmatpush1.msra.mxu0 0.0
        %1950 = vmatprep.subr.mxu0 0.0
        %1951 = vmatpush1.msra.mxu0 0.0
        %1952 = vmatprep.subr.mxu0 0.0
        %1953 = vmatpush1.msra.mxu0 0.0
        %1954 = vmatprep.subr.mxu0 0.0
        %1955 = vmatpush1.msra.mxu0 0.0
        %1956 = vmatprep.subr.mxu0 0.0
        %1957 = vmatpush1.msra.mxu0 0.0
        %1958 = vmatprep.subr.mxu0 0.0
        %1959 = vmatpush1.msra.mxu0 0.0
        %1960 = vmatprep.subr.mxu0 0.0
        %1961 = vmatpush1.msra.mxu0 0.0
        %1962 = vmatprep.subr.mxu0 0.0
        %1963 = vmatpush1.msra.mxu0 0.0
        %1964 = vmatprep.subr.mxu0 0.0
        %1965 = vmatpush1.msra.mxu0 0.0
        %1966 = vmatprep.subr.mxu0 0.0
        %1967 = vmatpush1.msra.mxu0 0.0
        %1968 = vmatprep.subr.mxu0 0.0
        %1969 = vmatpush1.msra.mxu0 0.0
        %1970 = vmatprep.subr.mxu0 0.0
        %1971 = vmatpush1.msra.mxu0 0.0
        %1972 = vmatprep.subr.mxu0 0.0
        %1973 = vmatpush1.msra.mxu0 0.0
        %1974 = vmatprep.subr.mxu0 0.0
        %1975 = vmatpush1.msra.mxu0 0.0
        %1976 = vmatprep.subr.mxu0 0.0
        %1977 = vmatpush1.msra.mxu0 0.0
        %1978 = vmatprep.subr.mxu0 0.0
        %1979 = vmatpush1.msra.mxu0 0.0
        %1980 = vmatprep.subr.mxu0 0.0
        %1981 = vmatpush1.msra.mxu0 0.0
        %1982 = vmatprep.subr.mxu0 0.0
        %1983 = vmatpush1.msra.mxu0 0.0
        %1984 = vmatprep.subr.mxu0 0.0
        %1985 = vmatpush1.msra.mxu0 0.0
        %1986 = vmatprep.subr.mxu0 0.0
        %1987 = vmatpush1.msra.mxu0 0.0
        %1988 = vmatprep.subr.mxu0 0.0
        %1989 = vmatpush1.msra.mxu0 0.0
        %1990 = vmatprep.subr.mxu0 0.0
        %1991 = vmatpush1.msra.mxu0 0.0
        %1992 = vmatprep.mubr.f32.mxu0 0.0
        %1993 = vmatmul.mubr.f32.gmra.mrb[0].mxu0 %v1650
        %v1994 = vpop.f32.mrb[0].mxu0
        %v1995 = vadd.f32 %v1631, %v1994
        %v1996 = vpop.f32.mrb[0].mxu0
        %v1997 = vadd.f32 %v1631, %v1996
        %1998 = vmatprep.mubr.f32.mxu0 0.0
        %1999 = vmatmul.mubr.f32.gmra.mrb[0].mxu0 %v1653
        %v2000 = vpop.f32.mrb[0].mxu0
        %v2001 = vadd.f32 %v1636, %v2000
        %v2002 = vpop.f32.mrb[0].mxu0
        %v2003 = vadd.f32 %v1636, %v2002
        %2004 = vmatprep.mubr.f32.mxu0 0.0
        %2005 = vmatmul.mubr.f32.gmra.mrb[0].mxu0 %v1656
        %v2006 = vpop.f32.mrb[0].mxu0
        %v2007 = vadd.f32 %v1641, %v2006
        %v2008 = vpop.f32.mrb[0].mxu0
        %v2009 = vadd.f32 %v1641, %v2008
        %2010 = vmatprep.mubr.f32.mxu0 0.0
        %2011 = vmatmul.mubr.f32.gmra.mrb[0].mxu0 %v1659
        %v2012 = vpop.f32.mrb[0].mxu0
        %v2013 = vadd.f32 %v1646, %v2012
        %v2014 = vpop.f32.mrb[0].mxu0
        %v2015 = vadd.f32 %v1646, %v2014
        %2016 = vdwg.mxu0
        %v2017 = vmul.f32 %v1728, 0.31830987
        %v2018 = vmul.f32 %v1730, 0.31830987
        %v2019 = vmul.f32 %v1817, 0.31830987
        %v2020 = vmul.f32 %v1819, 0.31830987
        %v2021 = vmul.f32 %v1906, 0.31830987
        %v2022 = vmul.f32 %v1908, 0.31830987
        %v2023 = vmul.f32 %v1995, 0.31830987
        %v2024 = vmul.f32 %v1997, 0.31830987
        %v2025 = vmul.f32 %v1734, 0.31830987
        %v2026 = vmul.f32 %v1736, 0.31830987
        %v2027 = vmul.f32 %v1823, 0.31830987
        %v2028 = vmul.f32 %v1825, 0.31830987
        %v2029 = vmul.f32 %v1912, 0.31830987
        %v2030 = vmul.f32 %v1914, 0.31830987
        %v2031 = vmul.f32 %v2001, 0.31830987
        %v2032 = vmul.f32 %v2003, 0.31830987
        %v2033 = vmul.f32 %v1740, 0.31830987
        %v2034 = vmul.f32 %v1742, 0.31830987
        %v2035 = vmul.f32 %v1829, 0.31830987
        %v2036 = vmul.f32 %v1831, 0.31830987
        %v2037 = vmul.f32 %v1918, 0.31830987
        %v2038 = vmul.f32 %v1920, 0.31830987
        %v2039 = vmul.f32 %v2007, 0.31830987
        %v2040 = vmul.f32 %v2009, 0.31830987
        %v2041 = vmul.f32 %v1746, 0.31830987
        %v2042 = vmul.f32 %v1748, 0.31830987
        %v2043 = vmul.f32 %v1835, 0.31830987
        %v2044 = vmul.f32 %v1837, 0.31830987
        %v2045 = vmul.f32 %v1924, 0.31830987
        %v2046 = vmul.f32 %v1926, 0.31830987
        %v2047 = vmul.f32 %v2013, 0.31830987
        %v2048 = vmul.f32 %v2015, 0.31830987
        %v2049 = vadd.f32 %v2017, 0.5
        %v2050 = vadd.f32 %v2018, 0.5
        %v2051 = vadd.f32 %v2019, 0.5
        %v2052 = vadd.f32 %v2020, 0.5
        %v2053 = vadd.f32 %v2021, 0.5
        %v2054 = vadd.f32 %v2022, 0.5
        %v2055 = vadd.f32 %v2023, 0.5
        %v2056 = vadd.f32 %v2024, 0.5
        %v2057 = vadd.f32 %v2025, 0.5
        %v2058 = vadd.f32 %v2026, 0.5
        %v2059 = vadd.f32 %v2027, 0.5
        %v2060 = vadd.f32 %v2028, 0.5
        %v2061 = vadd.f32 %v2029, 0.5
        %v2062 = vadd.f32 %v2030, 0.5
        %v2063 = vadd.f32 %v2031, 0.5
        %v2064 = vadd.f32 %v2032, 0.5
        %v2065 = vadd.f32 %v2033, 0.5
        %v2066 = vadd.f32 %v2034, 0.5
        %v2067 = vadd.f32 %v2035, 0.5
        %v2068 = vadd.f32 %v2036, 0.5
        %v2069 = vadd.f32 %v2037, 0.5
        %v2070 = vadd.f32 %v2038, 0.5
        %v2071 = vadd.f32 %v2039, 0.5
        %v2072 = vadd.f32 %v2040, 0.5
        %v2073 = vadd.f32 %v2041, 0.5
        %v2074 = vadd.f32 %v2042, 0.5
        %v2075 = vadd.f32 %v2043, 0.5
        %v2076 = vadd.f32 %v2044, 0.5
        %v2077 = vadd.f32 %v2045, 0.5
        %v2078 = vadd.f32 %v2046, 0.5
        %v2079 = vadd.f32 %v2047, 0.5
        %v2080 = vadd.f32 %v2048, 0.5
        %v2081 = vfloor.f32 %v2049
        %v2082 = vfloor.f32 %v2050
        %v2083 = vfloor.f32 %v2051
        %v2084 = vfloor.f32 %v2052
        %v2085 = vfloor.f32 %v2053
        %v2086 = vfloor.f32 %v2054
        %v2087 = vfloor.f32 %v2055
        %v2088 = vfloor.f32 %v2056
        %v2089 = vfloor.f32 %v2057
        %v2090 = vfloor.f32 %v2058
        %v2091 = vfloor.f32 %v2059
        %v2092 = vfloor.f32 %v2060
        %v2093 = vfloor.f32 %v2061
        %v2094 = vfloor.f32 %v2062
        %v2095 = vfloor.f32 %v2063
        %v2096 = vfloor.f32 %v2064
        %v2097 = vfloor.f32 %v2065
        %v2098 = vfloor.f32 %v2066
        %v2099 = vfloor.f32 %v2067
        %v2100 = vfloor.f32 %v2068
        %v2101 = vfloor.f32 %v2069
        %v2102 = vfloor.f32 %v2070
        %v2103 = vfloor.f32 %v2071
        %v2104 = vfloor.f32 %v2072
        %v2105 = vfloor.f32 %v2073
        %v2106 = vfloor.f32 %v2074
        %v2107 = vfloor.f32 %v2075
        %v2108 = vfloor.f32 %v2076
        %v2109 = vfloor.f32 %v2077
        %v2110 = vfloor.f32 %v2078
        %v2111 = vfloor.f32 %v2079
        %v2112 = vfloor.f32 %v2080
        %v2113 = vmul.f32 %v2081, 3.140625
        %v2114 = vmul.f32 %v2082, 3.140625
        %v2115 = vmul.f32 %v2083, 3.140625
        %v2116 = vmul.f32 %v2084, 3.140625
        %v2117 = vmul.f32 %v2085, 3.140625
        %v2118 = vmul.f32 %v2086, 3.140625
        %v2119 = vmul.f32 %v2087, 3.140625
        %v2120 = vmul.f32 %v2088, 3.140625
        %v2121 = vmul.f32 %v2089, 3.140625
        %v2122 = vmul.f32 %v2090, 3.140625
        %v2123 = vmul.f32 %v2091, 3.140625
        %v2124 = vmul.f32 %v2092, 3.140625
        %v2125 = vmul.f32 %v2093, 3.140625
        %v2126 = vmul.f32 %v2094, 3.140625
        %v2127 = vmul.f32 %v2095, 3.140625
        %v2128 = vmul.f32 %v2096, 3.140625
        %v2129 = vmul.f32 %v2097, 3.140625
        %v2130 = vmul.f32 %v2098, 3.140625
        %v2131 = vmul.f32 %v2099, 3.140625
        %v2132 = vmul.f32 %v2100, 3.140625
        %v2133 = vmul.f32 %v2101, 3.140625
        %v2134 = vmul.f32 %v2102, 3.140625
        %v2135 = vmul.f32 %v2103, 3.140625
        %v2136 = vmul.f32 %v2104, 3.140625
        %v2137 = vmul.f32 %v2105, 3.140625
        %v2138 = vmul.f32 %v2106, 3.140625
        %v2139 = vmul.f32 %v2107, 3.140625
        %v2140 = vmul.f32 %v2108, 3.140625
        %v2141 = vmul.f32 %v2109, 3.140625
        %v2142 = vmul.f32 %v2110, 3.140625
        %v2143 = vmul.f32 %v2111, 3.140625
        %v2144 = vmul.f32 %v2112, 3.140625
        %v2145 = vsub.f32 %v1728, %v2113
        %v2146 = vsub.f32 %v1730, %v2114
        %v2147 = vsub.f32 %v1817, %v2115
        %v2148 = vsub.f32 %v1819, %v2116
        %v2149 = vsub.f32 %v1906, %v2117
        %v2150 = vsub.f32 %v1908, %v2118
        %v2151 = vsub.f32 %v1995, %v2119
        %v2152 = vsub.f32 %v1997, %v2120
        %v2153 = vsub.f32 %v1734, %v2121
        %v2154 = vsub.f32 %v1736, %v2122
        %v2155 = vsub.f32 %v1823, %v2123
        %v2156 = vsub.f32 %v1825, %v2124
        %v2157 = vsub.f32 %v1912, %v2125
        %v2158 = vsub.f32 %v1914, %v2126
        %v2159 = vsub.f32 %v2001, %v2127
        %v2160 = vsub.f32 %v2003, %v2128
        %v2161 = vsub.f32 %v1740, %v2129
        %v2162 = vsub.f32 %v1742, %v2130
        %v2163 = vsub.f32 %v1829, %v2131
        %v2164 = vsub.f32 %v1831, %v2132
        %v2165 = vsub.f32 %v1918, %v2133
        %v2166 = vsub.f32 %v1920, %v2134
        %v2167 = vsub.f32 %v2007, %v2135
        %v2168 = vsub.f32 %v2009, %v2136
        %v2169 = vsub.f32 %v1746, %v2137
        %v2170 = vsub.f32 %v1748, %v2138
        %v2171 = vsub.f32 %v1835, %v2139
        %v2172 = vsub.f32 %v1837, %v2140
        %v2173 = vsub.f32 %v1924, %v2141
        %v2174 = vsub.f32 %v1926, %v2142
        %v2175 = vsub.f32 %v2013, %v2143
        %v2176 = vsub.f32 %v2015, %v2144
        %v2177 = vmul.f32 %v2081, 0.00096702576
        %v2178 = vmul.f32 %v2082, 0.00096702576
        %v2179 = vmul.f32 %v2083, 0.00096702576
        %v2180 = vmul.f32 %v2084, 0.00096702576
        %v2181 = vmul.f32 %v2085, 0.00096702576
        %v2182 = vmul.f32 %v2086, 0.00096702576
        %v2183 = vmul.f32 %v2087, 0.00096702576
        %v2184 = vmul.f32 %v2088, 0.00096702576
        %v2185 = vmul.f32 %v2089, 0.00096702576
        %v2186 = vmul.f32 %v2090, 0.00096702576
        %v2187 = vmul.f32 %v2091, 0.00096702576
        %v2188 = vmul.f32 %v2092, 0.00096702576
        %v2189 = vmul.f32 %v2093, 0.00096702576
        %v2190 = vmul.f32 %v2094, 0.00096702576
        %v2191 = vmul.f32 %v2095, 0.00096702576
        %v2192 = vmul.f32 %v2096, 0.00096702576
        %v2193 = vmul.f32 %v2097, 0.00096702576
        %v2194 = vmul.f32 %v2098, 0.00096702576
        %v2195 = vmul.f32 %v2099, 0.00096702576
        %v2196 = vmul.f32 %v2100, 0.00096702576
        %v2197 = vmul.f32 %v2101, 0.00096702576
        %v2198 = vmul.f32 %v2102, 0.00096702576
        %v2199 = vmul.f32 %v2103, 0.00096702576
        %v2200 = vmul.f32 %v2104, 0.00096702576
        %v2201 = vmul.f32 %v2105, 0.00096702576
        %v2202 = vmul.f32 %v2106, 0.00096702576
        %v2203 = vmul.f32 %v2107, 0.00096702576
        %v2204 = vmul.f32 %v2108, 0.00096702576
        %v2205 = vmul.f32 %v2109, 0.00096702576
        %v2206 = vmul.f32 %v2110, 0.00096702576
        %v2207 = vmul.f32 %v2111, 0.00096702576
        %v2208 = vmul.f32 %v2112, 0.00096702576
        %v2209 = vsub.f32 %v2145, %v2177
        %v2210 = vsub.f32 %v2146, %v2178
        %v2211 = vsub.f32 %v2147, %v2179
        %v2212 = vsub.f32 %v2148, %v2180
        %v2213 = vsub.f32 %v2149, %v2181
        %v2214 = vsub.f32 %v2150, %v2182
        %v2215 = vsub.f32 %v2151, %v2183
        %v2216 = vsub.f32 %v2152, %v2184
        %v2217 = vsub.f32 %v2153, %v2185
        %v2218 = vsub.f32 %v2154, %v2186
        %v2219 = vsub.f32 %v2155, %v2187
        %v2220 = vsub.f32 %v2156, %v2188
        %v2221 = vsub.f32 %v2157, %v2189
        %v2222 = vsub.f32 %v2158, %v2190
        %v2223 = vsub.f32 %v2159, %v2191
        %v2224 = vsub.f32 %v2160, %v2192
        %v2225 = vsub.f32 %v2161, %v2193
        %v2226 = vsub.f32 %v2162, %v2194
        %v2227 = vsub.f32 %v2163, %v2195
        %v2228 = vsub.f32 %v2164, %v2196
        %v2229 = vsub.f32 %v2165, %v2197
        %v2230 = vsub.f32 %v2166, %v2198
        %v2231 = vsub.f32 %v2167, %v2199
        %v2232 = vsub.f32 %v2168, %v2200
        %v2233 = vsub.f32 %v2169, %v2201
        %v2234 = vsub.f32 %v2170, %v2202
        %v2235 = vsub.f32 %v2171, %v2203
        %v2236 = vsub.f32 %v2172, %v2204
        %v2237 = vsub.f32 %v2173, %v2205
        %v2238 = vsub.f32 %v2174, %v2206
        %v2239 = vsub.f32 %v2175, %v2207
        %v2240 = vsub.f32 %v2176, %v2208
        %v2241 = vmul.f32 %v2081, 6.277114e-07
        %v2242 = vmul.f32 %v2082, 6.277114e-07
        %v2243 = vmul.f32 %v2083, 6.277114e-07
        %v2244 = vmul.f32 %v2084, 6.277114e-07
        %v2245 = vmul.f32 %v2085, 6.277114e-07
        %v2246 = vmul.f32 %v2086, 6.277114e-07
        %v2247 = vmul.f32 %v2087, 6.277114e-07
        %v2248 = vmul.f32 %v2088, 6.277114e-07
        %v2249 = vmul.f32 %v2089, 6.277114e-07
        %v2250 = vmul.f32 %v2090, 6.277114e-07
        %v2251 = vmul.f32 %v2091, 6.277114e-07
        %v2252 = vmul.f32 %v2092, 6.277114e-07
        %v2253 = vmul.f32 %v2093, 6.277114e-07
        %v2254 = vmul.f32 %v2094, 6.277114e-07
        %v2255 = vmul.f32 %v2095, 6.277114e-07
        %v2256 = vmul.f32 %v2096, 6.277114e-07
        %v2257 = vmul.f32 %v2097, 6.277114e-07
        %v2258 = vmul.f32 %v2098, 6.277114e-07
        %v2259 = vmul.f32 %v2099, 6.277114e-07
        %v2260 = vmul.f32 %v2100, 6.277114e-07
        %v2261 = vmul.f32 %v2101, 6.277114e-07
        %v2262 = vmul.f32 %v2102, 6.277114e-07
        %v2263 = vmul.f32 %v2103, 6.277114e-07
        %v2264 = vmul.f32 %v2104, 6.277114e-07
        %v2265 = vmul.f32 %v2105, 6.277114e-07
        %v2266 = vmul.f32 %v2106, 6.277114e-07
        %v2267 = vmul.f32 %v2107, 6.277114e-07
        %v2268 = vmul.f32 %v2108, 6.277114e-07
        %v2269 = vmul.f32 %v2109, 6.277114e-07
        %v2270 = vmul.f32 %v2110, 6.277114e-07
        %v2271 = vmul.f32 %v2111, 6.277114e-07
        %v2272 = vmul.f32 %v2112, 6.277114e-07
        %v2273 = vsub.f32 %v2209, %v2241
        %v2274 = vsub.f32 %v2210, %v2242
        %v2275 = vsub.f32 %v2211, %v2243
        %v2276 = vsub.f32 %v2212, %v2244
        %v2277 = vsub.f32 %v2213, %v2245
        %v2278 = vsub.f32 %v2214, %v2246
        %v2279 = vsub.f32 %v2215, %v2247
        %v2280 = vsub.f32 %v2216, %v2248
        %v2281 = vsub.f32 %v2217, %v2249
        %v2282 = vsub.f32 %v2218, %v2250
        %v2283 = vsub.f32 %v2219, %v2251
        %v2284 = vsub.f32 %v2220, %v2252
        %v2285 = vsub.f32 %v2221, %v2253
        %v2286 = vsub.f32 %v2222, %v2254
        %v2287 = vsub.f32 %v2223, %v2255
        %v2288 = vsub.f32 %v2224, %v2256
        %v2289 = vsub.f32 %v2225, %v2257
        %v2290 = vsub.f32 %v2226, %v2258
        %v2291 = vsub.f32 %v2227, %v2259
        %v2292 = vsub.f32 %v2228, %v2260
        %v2293 = vsub.f32 %v2229, %v2261
        %v2294 = vsub.f32 %v2230, %v2262
        %v2295 = vsub.f32 %v2231, %v2263
        %v2296 = vsub.f32 %v2232, %v2264
        %v2297 = vsub.f32 %v2233, %v2265
        %v2298 = vsub.f32 %v2234, %v2266
        %v2299 = vsub.f32 %v2235, %v2267
        %v2300 = vsub.f32 %v2236, %v2268
        %v2301 = vsub.f32 %v2237, %v2269
        %v2302 = vsub.f32 %v2238, %v2270
        %v2303 = vsub.f32 %v2239, %v2271
        %v2304 = vsub.f32 %v2240, %v2272
        %v2305 = vmul.f32 %v2081, 0.5
        %v2306 = vmul.f32 %v2082, 0.5
        %v2307 = vmul.f32 %v2083, 0.5
        %v2308 = vmul.f32 %v2084, 0.5
        %v2309 = vmul.f32 %v2085, 0.5
        %v2310 = vmul.f32 %v2086, 0.5
        %v2311 = vmul.f32 %v2087, 0.5
        %v2312 = vmul.f32 %v2088, 0.5
        %v2313 = vmul.f32 %v2089, 0.5
        %v2314 = vmul.f32 %v2090, 0.5
        %v2315 = vmul.f32 %v2091, 0.5
        %v2316 = vmul.f32 %v2092, 0.5
        %v2317 = vmul.f32 %v2093, 0.5
        %v2318 = vmul.f32 %v2094, 0.5
        %v2319 = vmul.f32 %v2095, 0.5
        %v2320 = vmul.f32 %v2096, 0.5
        %v2321 = vmul.f32 %v2097, 0.5
        %v2322 = vmul.f32 %v2098, 0.5
        %v2323 = vmul.f32 %v2099, 0.5
        %v2324 = vmul.f32 %v2100, 0.5
        %v2325 = vmul.f32 %v2101, 0.5
        %v2326 = vmul.f32 %v2102, 0.5
        %v2327 = vmul.f32 %v2103, 0.5
        %v2328 = vmul.f32 %v2104, 0.5
        %v2329 = vmul.f32 %v2105, 0.5
        %v2330 = vmul.f32 %v2106, 0.5
        %v2331 = vmul.f32 %v2107, 0.5
        %v2332 = vmul.f32 %v2108, 0.5
        %v2333 = vmul.f32 %v2109, 0.5
        %v2334 = vmul.f32 %v2110, 0.5
        %v2335 = vmul.f32 %v2111, 0.5
        %v2336 = vmul.f32 %v2112, 0.5
        %v2337 = vfloor.f32 %v2305
        %v2338 = vfloor.f32 %v2306
        %v2339 = vfloor.f32 %v2307
        %v2340 = vfloor.f32 %v2308
        %v2341 = vfloor.f32 %v2309
        %v2342 = vfloor.f32 %v2310
        %v2343 = vfloor.f32 %v2311
        %v2344 = vfloor.f32 %v2312
        %v2345 = vfloor.f32 %v2313
        %v2346 = vfloor.f32 %v2314
        %v2347 = vfloor.f32 %v2315
        %v2348 = vfloor.f32 %v2316
        %v2349 = vfloor.f32 %v2317
        %v2350 = vfloor.f32 %v2318
        %v2351 = vfloor.f32 %v2319
        %v2352 = vfloor.f32 %v2320
        %v2353 = vfloor.f32 %v2321
        %v2354 = vfloor.f32 %v2322
        %v2355 = vfloor.f32 %v2323
        %v2356 = vfloor.f32 %v2324
        %v2357 = vfloor.f32 %v2325
        %v2358 = vfloor.f32 %v2326
        %v2359 = vfloor.f32 %v2327
        %v2360 = vfloor.f32 %v2328
        %v2361 = vfloor.f32 %v2329
        %v2362 = vfloor.f32 %v2330
        %v2363 = vfloor.f32 %v2331
        %v2364 = vfloor.f32 %v2332
        %v2365 = vfloor.f32 %v2333
        %v2366 = vfloor.f32 %v2334
        %v2367 = vfloor.f32 %v2335
        %v2368 = vfloor.f32 %v2336
        %v2369 = vmul.f32 %v2337, 2.0
        %v2370 = vmul.f32 %v2338, 2.0
        %v2371 = vmul.f32 %v2339, 2.0
        %v2372 = vmul.f32 %v2340, 2.0
        %v2373 = vmul.f32 %v2341, 2.0
        %v2374 = vmul.f32 %v2342, 2.0
        %v2375 = vmul.f32 %v2343, 2.0
        %v2376 = vmul.f32 %v2344, 2.0
        %v2377 = vmul.f32 %v2345, 2.0
        %v2378 = vmul.f32 %v2346, 2.0
        %v2379 = vmul.f32 %v2347, 2.0
        %v2380 = vmul.f32 %v2348, 2.0
        %v2381 = vmul.f32 %v2349, 2.0
        %v2382 = vmul.f32 %v2350, 2.0
        %v2383 = vmul.f32 %v2351, 2.0
        %v2384 = vmul.f32 %v2352, 2.0
        %v2385 = vmul.f32 %v2353, 2.0
        %v2386 = vmul.f32 %v2354, 2.0
        %v2387 = vmul.f32 %v2355, 2.0
        %v2388 = vmul.f32 %v2356, 2.0
        %v2389 = vmul.f32 %v2357, 2.0
        %v2390 = vmul.f32 %v2358, 2.0
        %v2391 = vmul.f32 %v2359, 2.0
        %v2392 = vmul.f32 %v2360, 2.0
        %v2393 = vmul.f32 %v2361, 2.0
        %v2394 = vmul.f32 %v2362, 2.0
        %v2395 = vmul.f32 %v2363, 2.0
        %v2396 = vmul.f32 %v2364, 2.0
        %v2397 = vmul.f32 %v2365, 2.0
        %v2398 = vmul.f32 %v2366, 2.0
        %v2399 = vmul.f32 %v2367, 2.0
        %v2400 = vmul.f32 %v2368, 2.0
        %v2401 = vsub.f32 %v2081, %v2369
        %v2402 = vsub.f32 %v2082, %v2370
        %v2403 = vsub.f32 %v2083, %v2371
        %v2404 = vsub.f32 %v2084, %v2372
        %v2405 = vsub.f32 %v2085, %v2373
        %v2406 = vsub.f32 %v2086, %v2374
        %v2407 = vsub.f32 %v2087, %v2375
        %v2408 = vsub.f32 %v2088, %v2376
        %v2409 = vsub.f32 %v2089, %v2377
        %v2410 = vsub.f32 %v2090, %v2378
        %v2411 = vsub.f32 %v2091, %v2379
        %v2412 = vsub.f32 %v2092, %v2380
        %v2413 = vsub.f32 %v2093, %v2381
        %v2414 = vsub.f32 %v2094, %v2382
        %v2415 = vsub.f32 %v2095, %v2383
        %v2416 = vsub.f32 %v2096, %v2384
        %v2417 = vsub.f32 %v2097, %v2385
        %v2418 = vsub.f32 %v2098, %v2386
        %v2419 = vsub.f32 %v2099, %v2387
        %v2420 = vsub.f32 %v2100, %v2388
        %v2421 = vsub.f32 %v2101, %v2389
        %v2422 = vsub.f32 %v2102, %v2390
        %v2423 = vsub.f32 %v2103, %v2391
        %v2424 = vsub.f32 %v2104, %v2392
        %v2425 = vsub.f32 %v2105, %v2393
        %v2426 = vsub.f32 %v2106, %v2394
        %v2427 = vsub.f32 %v2107, %v2395
        %v2428 = vsub.f32 %v2108, %v2396
        %v2429 = vsub.f32 %v2109, %v2397
        %v2430 = vsub.f32 %v2110, %v2398
        %v2431 = vsub.f32 %v2111, %v2399
        %v2432 = vsub.f32 %v2112, %v2400
        %v2433 = vmul.f32 %v2401, 2.0
        %v2434 = vmul.f32 %v2402, 2.0
        %v2435 = vmul.f32 %v2403, 2.0
        %v2436 = vmul.f32 %v2404, 2.0
        %v2437 = vmul.f32 %v2405, 2.0
        %v2438 = vmul.f32 %v2406, 2.0
        %v2439 = vmul.f32 %v2407, 2.0
        %v2440 = vmul.f32 %v2408, 2.0
        %v2441 = vmul.f32 %v2409, 2.0
        %v2442 = vmul.f32 %v2410, 2.0
        %v2443 = vmul.f32 %v2411, 2.0
        %v2444 = vmul.f32 %v2412, 2.0
        %v2445 = vmul.f32 %v2413, 2.0
        %v2446 = vmul.f32 %v2414, 2.0
        %v2447 = vmul.f32 %v2415, 2.0
        %v2448 = vmul.f32 %v2416, 2.0
        %v2449 = vmul.f32 %v2417, 2.0
        %v2450 = vmul.f32 %v2418, 2.0
        %v2451 = vmul.f32 %v2419, 2.0
        %v2452 = vmul.f32 %v2420, 2.0
        %v2453 = vmul.f32 %v2421, 2.0
        %v2454 = vmul.f32 %v2422, 2.0
        %v2455 = vmul.f32 %v2423, 2.0
        %v2456 = vmul.f32 %v2424, 2.0
        %v2457 = vmul.f32 %v2425, 2.0
        %v2458 = vmul.f32 %v2426, 2.0
        %v2459 = vmul.f32 %v2427, 2.0
        %v2460 = vmul.f32 %v2428, 2.0
        %v2461 = vmul.f32 %v2429, 2.0
        %v2462 = vmul.f32 %v2430, 2.0
        %v2463 = vmul.f32 %v2431, 2.0
        %v2464 = vmul.f32 %v2432, 2.0
        %v2465 = vsub.f32 1.0, %v2433
        %v2466 = vsub.f32 1.0, %v2434
        %v2467 = vsub.f32 1.0, %v2435
        %v2468 = vsub.f32 1.0, %v2436
        %v2469 = vsub.f32 1.0, %v2437
        %v2470 = vsub.f32 1.0, %v2438
        %v2471 = vsub.f32 1.0, %v2439
        %v2472 = vsub.f32 1.0, %v2440
        %v2473 = vsub.f32 1.0, %v2441
        %v2474 = vsub.f32 1.0, %v2442
        %v2475 = vsub.f32 1.0, %v2443
        %v2476 = vsub.f32 1.0, %v2444
        %v2477 = vsub.f32 1.0, %v2445
        %v2478 = vsub.f32 1.0, %v2446
        %v2479 = vsub.f32 1.0, %v2447
        %v2480 = vsub.f32 1.0, %v2448
        %v2481 = vsub.f32 1.0, %v2449
        %v2482 = vsub.f32 1.0, %v2450
        %v2483 = vsub.f32 1.0, %v2451
        %v2484 = vsub.f32 1.0, %v2452
        %v2485 = vsub.f32 1.0, %v2453
        %v2486 = vsub.f32 1.0, %v2454
        %v2487 = vsub.f32 1.0, %v2455
        %v2488 = vsub.f32 1.0, %v2456
        %v2489 = vsub.f32 1.0, %v2457
        %v2490 = vsub.f32 1.0, %v2458
        %v2491 = vsub.f32 1.0, %v2459
        %v2492 = vsub.f32 1.0, %v2460
        %v2493 = vsub.f32 1.0, %v2461
        %v2494 = vsub.f32 1.0, %v2462
        %v2495 = vsub.f32 1.0, %v2463
        %v2496 = vsub.f32 1.0, %v2464
        %v2497 = vmul.f32 %v2273, %v2273
        %v2498 = vmul.f32 %v2274, %v2274
        %v2499 = vmul.f32 %v2275, %v2275
        %v2500 = vmul.f32 %v2276, %v2276
        %v2501 = vmul.f32 %v2277, %v2277
        %v2502 = vmul.f32 %v2278, %v2278
        %v2503 = vmul.f32 %v2279, %v2279
        %v2504 = vmul.f32 %v2280, %v2280
        %v2505 = vmul.f32 %v2281, %v2281
        %v2506 = vmul.f32 %v2282, %v2282
        %v2507 = vmul.f32 %v2283, %v2283
        %v2508 = vmul.f32 %v2284, %v2284
        %v2509 = vmul.f32 %v2285, %v2285
        %v2510 = vmul.f32 %v2286, %v2286
        %v2511 = vmul.f32 %v2287, %v2287
        %v2512 = vmul.f32 %v2288, %v2288
        %v2513 = vmul.f32 %v2289, %v2289
        %v2514 = vmul.f32 %v2290, %v2290
        %v2515 = vmul.f32 %v2291, %v2291
        %v2516 = vmul.f32 %v2292, %v2292
        %v2517 = vmul.f32 %v2293, %v2293
        %v2518 = vmul.f32 %v2294, %v2294
        %v2519 = vmul.f32 %v2295, %v2295
        %v2520 = vmul.f32 %v2296, %v2296
        %v2521 = vmul.f32 %v2297, %v2297
        %v2522 = vmul.f32 %v2298, %v2298
        %v2523 = vmul.f32 %v2299, %v2299
        %v2524 = vmul.f32 %v2300, %v2300
        %v2525 = vmul.f32 %v2301, %v2301
        %v2526 = vmul.f32 %v2302, %v2302
        %v2527 = vmul.f32 %v2303, %v2303
        %v2528 = vmul.f32 %v2304, %v2304
        %v2529 = vmul.f32 %v2497, 2.608316e-06
        %v2530 = vmul.f32 %v2498, 2.608316e-06
        %v2531 = vmul.f32 %v2499, 2.608316e-06
        %v2532 = vmul.f32 %v2500, 2.608316e-06
        %v2533 = vmul.f32 %v2501, 2.608316e-06
        %v2534 = vmul.f32 %v2502, 2.608316e-06
        %v2535 = vmul.f32 %v2503, 2.608316e-06
        %v2536 = vmul.f32 %v2504, 2.608316e-06
        %v2537 = vmul.f32 %v2505, 2.608316e-06
        %v2538 = vmul.f32 %v2506, 2.608316e-06
        %v2539 = vmul.f32 %v2507, 2.608316e-06
        %v2540 = vmul.f32 %v2508, 2.608316e-06
        %v2541 = vmul.f32 %v2509, 2.608316e-06
        %v2542 = vmul.f32 %v2510, 2.608316e-06
        %v2543 = vmul.f32 %v2511, 2.608316e-06
        %v2544 = vmul.f32 %v2512, 2.608316e-06
        %v2545 = vmul.f32 %v2513, 2.608316e-06
        %v2546 = vmul.f32 %v2514, 2.608316e-06
        %v2547 = vmul.f32 %v2515, 2.608316e-06
        %v2548 = vmul.f32 %v2516, 2.608316e-06
        %v2549 = vmul.f32 %v2517, 2.608316e-06
        %v2550 = vmul.f32 %v2518, 2.608316e-06
        %v2551 = vmul.f32 %v2519, 2.608316e-06
        %v2552 = vmul.f32 %v2520, 2.608316e-06
        %v2553 = vmul.f32 %v2521, 2.608316e-06
        %v2554 = vmul.f32 %v2522, 2.608316e-06
        %v2555 = vmul.f32 %v2523, 2.608316e-06
        %v2556 = vmul.f32 %v2524, 2.608316e-06
        %v2557 = vmul.f32 %v2525, 2.608316e-06
        %v2558 = vmul.f32 %v2526, 2.608316e-06
        %v2559 = vmul.f32 %v2527, 2.608316e-06
        %v2560 = vmul.f32 %v2528, 2.608316e-06
        %v2561 = vadd.f32 %v2529, -0.0001981069
        %v2562 = vadd.f32 %v2530, -0.0001981069
        %v2563 = vadd.f32 %v2531, -0.0001981069
        %v2564 = vadd.f32 %v2532, -0.0001981069
        %v2565 = vadd.f32 %v2533, -0.0001981069
        %v2566 = vadd.f32 %v2534, -0.0001981069
        %v2567 = vadd.f32 %v2535, -0.0001981069
        %v2568 = vadd.f32 %v2536, -0.0001981069
        %v2569 = vadd.f32 %v2537, -0.0001981069
        %v2570 = vadd.f32 %v2538, -0.0001981069
        %v2571 = vadd.f32 %v2539, -0.0001981069
        %v2572 = vadd.f32 %v2540, -0.0001981069
        %v2573 = vadd.f32 %v2541, -0.0001981069
        %v2574 = vadd.f32 %v2542, -0.0001981069
        %v2575 = vadd.f32 %v2543, -0.0001981069
        %v2576 = vadd.f32 %v2544, -0.0001981069
        %v2577 = vadd.f32 %v2545, -0.0001981069
        %v2578 = vadd.f32 %v2546, -0.0001981069
        %v2579 = vadd.f32 %v2547, -0.0001981069
        %v2580 = vadd.f32 %v2548, -0.0001981069
        %v2581 = vadd.f32 %v2549, -0.0001981069
        %v2582 = vadd.f32 %v2550, -0.0001981069
        %v2583 = vadd.f32 %v2551, -0.0001981069
        %v2584 = vadd.f32 %v2552, -0.0001981069
        %v2585 = vadd.f32 %v2553, -0.0001981069
        %v2586 = vadd.f32 %v2554, -0.0001981069
        %v2587 = vadd.f32 %v2555, -0.0001981069
        %v2588 = vadd.f32 %v2556, -0.0001981069
        %v2589 = vadd.f32 %v2557, -0.0001981069
        %v2590 = vadd.f32 %v2558, -0.0001981069
        %v2591 = vadd.f32 %v2559, -0.0001981069
        %v2592 = vadd.f32 %v2560, -0.0001981069
        %v2593 = vmul.f32 %v2561, %v2497
        %v2594 = vmul.f32 %v2562, %v2498
        %v2595 = vmul.f32 %v2563, %v2499
        %v2596 = vmul.f32 %v2564, %v2500
        %v2597 = vmul.f32 %v2565, %v2501
        %v2598 = vmul.f32 %v2566, %v2502
        %v2599 = vmul.f32 %v2567, %v2503
        %v2600 = vmul.f32 %v2568, %v2504
        %v2601 = vmul.f32 %v2569, %v2505
        %v2602 = vmul.f32 %v2570, %v2506
        %v2603 = vmul.f32 %v2571, %v2507
        %v2604 = vmul.f32 %v2572, %v2508
        %v2605 = vmul.f32 %v2573, %v2509
        %v2606 = vmul.f32 %v2574, %v2510
        %v2607 = vmul.f32 %v2575, %v2511
        %v2608 = vmul.f32 %v2576, %v2512
        %v2609 = vmul.f32 %v2577, %v2513
        %v2610 = vmul.f32 %v2578, %v2514
        %v2611 = vmul.f32 %v2579, %v2515
        %v2612 = vmul.f32 %v2580, %v2516
        %v2613 = vmul.f32 %v2581, %v2517
        %v2614 = vmul.f32 %v2582, %v2518
        %v2615 = vmul.f32 %v2583, %v2519
        %v2616 = vmul.f32 %v2584, %v2520
        %v2617 = vmul.f32 %v2585, %v2521
        %v2618 = vmul.f32 %v2586, %v2522
        %v2619 = vmul.f32 %v2587, %v2523
        %v2620 = vmul.f32 %v2588, %v2524
        %v2621 = vmul.f32 %v2589, %v2525
        %v2622 = vmul.f32 %v2590, %v2526
        %v2623 = vmul.f32 %v2591, %v2527
        %v2624 = vmul.f32 %v2592, %v2528
        %v2625 = vadd.f32 %v2593, 0.008333079
        %v2626 = vadd.f32 %v2594, 0.008333079
        %v2627 = vadd.f32 %v2595, 0.008333079
        %v2628 = vadd.f32 %v2596, 0.008333079
        %v2629 = vadd.f32 %v2597, 0.008333079
        %v2630 = vadd.f32 %v2598, 0.008333079
        %v2631 = vadd.f32 %v2599, 0.008333079
        %v2632 = vadd.f32 %v2600, 0.008333079
        %v2633 = vadd.f32 %v2601, 0.008333079
        %v2634 = vadd.f32 %v2602, 0.008333079
        %v2635 = vadd.f32 %v2603, 0.008333079
        %v2636 = vadd.f32 %v2604, 0.008333079
        %v2637 = vadd.f32 %v2605, 0.008333079
        %v2638 = vadd.f32 %v2606, 0.008333079
        %v2639 = vadd.f32 %v2607, 0.008333079
        %v2640 = vadd.f32 %v2608, 0.008333079
        %v2641 = vadd.f32 %v2609, 0.008333079
        %v2642 = vadd.f32 %v2610, 0.008333079
        %v2643 = vadd.f32 %v2611, 0.008333079
        %v2644 = vadd.f32 %v2612, 0.008333079
        %v2645 = vadd.f32 %v2613, 0.008333079
        %v2646 = vadd.f32 %v2614, 0.008333079
        %v2647 = vadd.f32 %v2615, 0.008333079
        %v2648 = vadd.f32 %v2616, 0.008333079
        %v2649 = vadd.f32 %v2617, 0.008333079
        %v2650 = vadd.f32 %v2618, 0.008333079
        %v2651 = vadd.f32 %v2619, 0.008333079
        %v2652 = vadd.f32 %v2620, 0.008333079
        %v2653 = vadd.f32 %v2621, 0.008333079
        %v2654 = vadd.f32 %v2622, 0.008333079
        %v2655 = vadd.f32 %v2623, 0.008333079
        %v2656 = vadd.f32 %v2624, 0.008333079
        %v2657 = vmul.f32 %v2625, %v2497
        %v2658 = vmul.f32 %v2626, %v2498
        %v2659 = vmul.f32 %v2627, %v2499
        %v2660 = vmul.f32 %v2628, %v2500
        %v2661 = vmul.f32 %v2629, %v2501
        %v2662 = vmul.f32 %v2630, %v2502
        %v2663 = vmul.f32 %v2631, %v2503
        %v2664 = vmul.f32 %v2632, %v2504
        %v2665 = vmul.f32 %v2633, %v2505
        %v2666 = vmul.f32 %v2634, %v2506
        %v2667 = vmul.f32 %v2635, %v2507
        %v2668 = vmul.f32 %v2636, %v2508
        %v2669 = vmul.f32 %v2637, %v2509
        %v2670 = vmul.f32 %v2638, %v2510
        %v2671 = vmul.f32 %v2639, %v2511
        %v2672 = vmul.f32 %v2640, %v2512
        %v2673 = vmul.f32 %v2641, %v2513
        %v2674 = vmul.f32 %v2642, %v2514
        %v2675 = vmul.f32 %v2643, %v2515
        %v2676 = vmul.f32 %v2644, %v2516
        %v2677 = vmul.f32 %v2645, %v2517
        %v2678 = vmul.f32 %v2646, %v2518
        %v2679 = vmul.f32 %v2647, %v2519
        %v2680 = vmul.f32 %v2648, %v2520
        %v2681 = vmul.f32 %v2649, %v2521
        %v2682 = vmul.f32 %v2650, %v2522
        %v2683 = vmul.f32 %v2651, %v2523
        %v2684 = vmul.f32 %v2652, %v2524
        %v2685 = vmul.f32 %v2653, %v2525
        %v2686 = vmul.f32 %v2654, %v2526
        %v2687 = vmul.f32 %v2655, %v2527
        %v2688 = vmul.f32 %v2656, %v2528
        %v2689 = vadd.f32 %v2657, -0.1666666
        %v2690 = vadd.f32 %v2658, -0.1666666
        %v2691 = vadd.f32 %v2659, -0.1666666
        %v2692 = vadd.f32 %v2660, -0.1666666
        %v2693 = vadd.f32 %v2661, -0.1666666
        %v2694 = vadd.f32 %v2662, -0.1666666
        %v2695 = vadd.f32 %v2663, -0.1666666
        %v2696 = vadd.f32 %v2664, -0.1666666
        %v2697 = vadd.f32 %v2665, -0.1666666
        %v2698 = vadd.f32 %v2666, -0.1666666
        %v2699 = vadd.f32 %v2667, -0.1666666
        %v2700 = vadd.f32 %v2668, -0.1666666
        %v2701 = vadd.f32 %v2669, -0.1666666
        %v2702 = vadd.f32 %v2670, -0.1666666
        %v2703 = vadd.f32 %v2671, -0.1666666
        %v2704 = vadd.f32 %v2672, -0.1666666
        %v2705 = vadd.f32 %v2673, -0.1666666
        %v2706 = vadd.f32 %v2674, -0.1666666
        %v2707 = vadd.f32 %v2675, -0.1666666
        %v2708 = vadd.f32 %v2676, -0.1666666
        %v2709 = vadd.f32 %v2677, -0.1666666
        %v2710 = vadd.f32 %v2678, -0.1666666
        %v2711 = vadd.f32 %v2679, -0.1666666
        %v2712 = vadd.f32 %v2680, -0.1666666
        %v2713 = vadd.f32 %v2681, -0.1666666
        %v2714 = vadd.f32 %v2682, -0.1666666
        %v2715 = vadd.f32 %v2683, -0.1666666
        %v2716 = vadd.f32 %v2684, -0.1666666
        %v2717 = vadd.f32 %v2685, -0.1666666
        %v2718 = vadd.f32 %v2686, -0.1666666
        %v2719 = vadd.f32 %v2687, -0.1666666
        %v2720 = vadd.f32 %v2688, -0.1666666
        %v2721 = vmul.f32 %v2273, %v2497
        %v2722 = vmul.f32 %v2274, %v2498
        %v2723 = vmul.f32 %v2275, %v2499
        %v2724 = vmul.f32 %v2276, %v2500
        %v2725 = vmul.f32 %v2277, %v2501
        %v2726 = vmul.f32 %v2278, %v2502
        %v2727 = vmul.f32 %v2279, %v2503
        %v2728 = vmul.f32 %v2280, %v2504
        %v2729 = vmul.f32 %v2281, %v2505
        %v2730 = vmul.f32 %v2282, %v2506
        %v2731 = vmul.f32 %v2283, %v2507
        %v2732 = vmul.f32 %v2284, %v2508
        %v2733 = vmul.f32 %v2285, %v2509
        %v2734 = vmul.f32 %v2286, %v2510
        %v2735 = vmul.f32 %v2287, %v2511
        %v2736 = vmul.f32 %v2288, %v2512
        %v2737 = vmul.f32 %v2289, %v2513
        %v2738 = vmul.f32 %v2290, %v2514
        %v2739 = vmul.f32 %v2291, %v2515
        %v2740 = vmul.f32 %v2292, %v2516
        %v2741 = vmul.f32 %v2293, %v2517
        %v2742 = vmul.f32 %v2294, %v2518
        %v2743 = vmul.f32 %v2295, %v2519
        %v2744 = vmul.f32 %v2296, %v2520
        %v2745 = vmul.f32 %v2297, %v2521
        %v2746 = vmul.f32 %v2298, %v2522
        %v2747 = vmul.f32 %v2299, %v2523
        %v2748 = vmul.f32 %v2300, %v2524
        %v2749 = vmul.f32 %v2301, %v2525
        %v2750 = vmul.f32 %v2302, %v2526
        %v2751 = vmul.f32 %v2303, %v2527
        %v2752 = vmul.f32 %v2304, %v2528
        %v2753 = vmul.f32 %v2721, %v2689
        %v2754 = vmul.f32 %v2722, %v2690
        %v2755 = vmul.f32 %v2723, %v2691
        %v2756 = vmul.f32 %v2724, %v2692
        %v2757 = vmul.f32 %v2725, %v2693
        %v2758 = vmul.f32 %v2726, %v2694
        %v2759 = vmul.f32 %v2727, %v2695
        %v2760 = vmul.f32 %v2728, %v2696
        %v2761 = vmul.f32 %v2729, %v2697
        %v2762 = vmul.f32 %v2730, %v2698
        %v2763 = vmul.f32 %v2731, %v2699
        %v2764 = vmul.f32 %v2732, %v2700
        %v2765 = vmul.f32 %v2733, %v2701
        %v2766 = vmul.f32 %v2734, %v2702
        %v2767 = vmul.f32 %v2735, %v2703
        %v2768 = vmul.f32 %v2736, %v2704
        %v2769 = vmul.f32 %v2737, %v2705
        %v2770 = vmul.f32 %v2738, %v2706
        %v2771 = vmul.f32 %v2739, %v2707
        %v2772 = vmul.f32 %v2740, %v2708
        %v2773 = vmul.f32 %v2741, %v2709
        %v2774 = vmul.f32 %v2742, %v2710
        %v2775 = vmul.f32 %v2743, %v2711
        %v2776 = vmul.f32 %v2744, %v2712
        %v2777 = vmul.f32 %v2745, %v2713
        %v2778 = vmul.f32 %v2746, %v2714
        %v2779 = vmul.f32 %v2747, %v2715
        %v2780 = vmul.f32 %v2748, %v2716
        %v2781 = vmul.f32 %v2749, %v2717
        %v2782 = vmul.f32 %v2750, %v2718
        %v2783 = vmul.f32 %v2751, %v2719
        %v2784 = vmul.f32 %v2752, %v2720
        %v2785 = vadd.f32 %v2273, %v2753
        %v2786 = vadd.f32 %v2274, %v2754
        %v2787 = vadd.f32 %v2275, %v2755
        %v2788 = vadd.f32 %v2276, %v2756
        %v2789 = vadd.f32 %v2277, %v2757
        %v2790 = vadd.f32 %v2278, %v2758
        %v2791 = vadd.f32 %v2279, %v2759
        %v2792 = vadd.f32 %v2280, %v2760
        %v2793 = vadd.f32 %v2281, %v2761
        %v2794 = vadd.f32 %v2282, %v2762
        %v2795 = vadd.f32 %v2283, %v2763
        %v2796 = vadd.f32 %v2284, %v2764
        %v2797 = vadd.f32 %v2285, %v2765
        %v2798 = vadd.f32 %v2286, %v2766
        %v2799 = vadd.f32 %v2287, %v2767
        %v2800 = vadd.f32 %v2288, %v2768
        %v2801 = vadd.f32 %v2289, %v2769
        %v2802 = vadd.f32 %v2290, %v2770
        %v2803 = vadd.f32 %v2291, %v2771
        %v2804 = vadd.f32 %v2292, %v2772
        %v2805 = vadd.f32 %v2293, %v2773
        %v2806 = vadd.f32 %v2294, %v2774
        %v2807 = vadd.f32 %v2295, %v2775
        %v2808 = vadd.f32 %v2296, %v2776
        %v2809 = vadd.f32 %v2297, %v2777
        %v2810 = vadd.f32 %v2298, %v2778
        %v2811 = vadd.f32 %v2299, %v2779
        %v2812 = vadd.f32 %v2300, %v2780
        %v2813 = vadd.f32 %v2301, %v2781
        %v2814 = vadd.f32 %v2302, %v2782
        %v2815 = vadd.f32 %v2303, %v2783
        %v2816 = vadd.f32 %v2304, %v2784
        %v2817 = vmul.f32 %v2465, %v2785
        %v2818 = vmul.f32 %v2466, %v2786
        %v2819 = vmul.f32 %v2467, %v2787
        %v2820 = vmul.f32 %v2468, %v2788
        %v2821 = vmul.f32 %v2469, %v2789
        %v2822 = vmul.f32 %v2470, %v2790
        %v2823 = vmul.f32 %v2471, %v2791
        %v2824 = vmul.f32 %v2472, %v2792
        %v2825 = vmul.f32 %v2473, %v2793
        %v2826 = vmul.f32 %v2474, %v2794
        %v2827 = vmul.f32 %v2475, %v2795
        %v2828 = vmul.f32 %v2476, %v2796
        %v2829 = vmul.f32 %v2477, %v2797
        %v2830 = vmul.f32 %v2478, %v2798
        %v2831 = vmul.f32 %v2479, %v2799
        %v2832 = vmul.f32 %v2480, %v2800
        %v2833 = vmul.f32 %v2481, %v2801
        %v2834 = vmul.f32 %v2482, %v2802
        %v2835 = vmul.f32 %v2483, %v2803
        %v2836 = vmul.f32 %v2484, %v2804
        %v2837 = vmul.f32 %v2485, %v2805
        %v2838 = vmul.f32 %v2486, %v2806
        %v2839 = vmul.f32 %v2487, %v2807
        %v2840 = vmul.f32 %v2488, %v2808
        %v2841 = vmul.f32 %v2489, %v2809
        %v2842 = vmul.f32 %v2490, %v2810
        %v2843 = vmul.f32 %v2491, %v2811
        %v2844 = vmul.f32 %v2492, %v2812
        %v2845 = vmul.f32 %v2493, %v2813
        %v2846 = vmul.f32 %v2494, %v2814
        %v2847 = vmul.f32 %v2495, %v2815
        %v2848 = vmul.f32 %v2496, %v2816
        %v2849 = vld [vmem:[%s5] sm:$0xff]
        %v2850 = vld [vmem:[%s5 + $0x8] sm:$0xff]
        %v2851 = vld [vmem:[%s5 + $0x10] sm:$0xff]
        %v2852 = vld [vmem:[%s5 + $0x18] sm:$0xff]
        %v2853 = vld [vmem:[%s6] sm:$0xff]
        %v2854 = vld [vmem:[%s6 + $0x8] sm:$0xff]
        %v2855 = vld [vmem:[%s6 + $0x10] sm:$0xff]
        %v2856 = vld [vmem:[%s6 + $0x18] sm:$0xff]
        %2858 = vset.pattern.permute.xlu0 0
        %2859 = vperm.xlu0 %2858, %v2853
        %v2860 = vpop.permute.xlu0 %2859
        %2863 = vset.pattern.permute.xlu0 0
        %2864 = vperm.xlu0 %2863, %v2854
        %v2865 = vpop.permute.xlu0 %2864
        %2868 = vset.pattern.permute.xlu0 0
        %2869 = vperm.xlu0 %2868, %v2855
        %v2870 = vpop.permute.xlu0 %2869
        %2873 = vset.pattern.permute.xlu0 0
        %2874 = vperm.xlu0 %2873, %v2856
        %v2875 = vpop.permute.xlu0 %2874
        %v2878 = vsel %vm1648, %v2849, 0
        %v2881 = vsel %vm1648, %v2850, 0
        %v2884 = vsel %vm1648, %v2851, 0
        %v2887 = vsel %vm1648, %v2852, 0
        %2889 = vmatprep.subr.mxu0 %v2818
        %2890 = vmatpush1.msra.mxu0 %v2817
        %2891 = vmatprep.subr.mxu0 %v2826
        %2892 = vmatpush1.msra.mxu0 %v2825
        %2893 = vmatprep.subr.mxu0 %v2834
        %2894 = vmatpush1.msra.mxu0 %v2833
        %2895 = vmatprep.subr.mxu0 %v2842
        %2896 = vmatpush1.msra.mxu0 %v2841
        %2897 = vmatprep.subr.mxu0 0.0
        %2898 = vmatpush1.msra.mxu0 0.0
        %2899 = vmatprep.subr.mxu0 0.0
        %2900 = vmatpush1.msra.mxu0 0.0
        %2901 = vmatprep.subr.mxu0 0.0
        %2902 = vmatpush1.msra.mxu0 0.0
        %2903 = vmatprep.subr.mxu0 0.0
        %2904 = vmatpush1.msra.mxu0 0.0
        %2905 = vmatprep.subr.mxu0 0.0
        %2906 = vmatpush1.msra.mxu0 0.0
        %2907 = vmatprep.subr.mxu0 0.0
        %2908 = vmatpush1.msra.mxu0 0.0
        %2909 = vmatprep.subr.mxu0 0.0
        %2910 = vmatpush1.msra.mxu0 0.0
        %2911 = vmatprep.subr.mxu0 0.0
        %2912 = vmatpush1.msra.mxu0 0.0
        %2913 = vmatprep.subr.mxu0 0.0
        %2914 = vmatpush1.msra.mxu0 0.0
        %2915 = vmatprep.subr.mxu0 0.0
        %2916 = vmatpush1.msra.mxu0 0.0
        %2917 = vmatprep.subr.mxu0 0.0
        %2918 = vmatpush1.msra.mxu0 0.0
        %2919 = vmatprep.subr.mxu0 0.0
        %2920 = vmatpush1.msra.mxu0 0.0
        %2921 = vmatprep.subr.mxu0 0.0
        %2922 = vmatpush1.msra.mxu0 0.0
        %2923 = vmatprep.subr.mxu0 0.0
        %2924 = vmatpush1.msra.mxu0 0.0
        %2925 = vmatprep.subr.mxu0 0.0
        %2926 = vmatpush1.msra.mxu0 0.0
        %2927 = vmatprep.subr.mxu0 0.0
        %2928 = vmatpush1.msra.mxu0 0.0
        %2929 = vmatprep.subr.mxu0 0.0
        %2930 = vmatpush1.msra.mxu0 0.0
        %2931 = vmatprep.subr.mxu0 0.0
        %2932 = vmatpush1.msra.mxu0 0.0
        %2933 = vmatprep.subr.mxu0 0.0
        %2934 = vmatpush1.msra.mxu0 0.0
        %2935 = vmatprep.subr.mxu0 0.0
        %2936 = vmatpush1.msra.mxu0 0.0
        %2937 = vmatprep.subr.mxu0 0.0
        %2938 = vmatpush1.msra.mxu0 0.0
        %2939 = vmatprep.subr.mxu0 0.0
        %2940 = vmatpush1.msra.mxu0 0.0
        %2941 = vmatprep.subr.mxu0 0.0
        %2942 = vmatpush1.msra.mxu0 0.0
        %2943 = vmatprep.subr.mxu0 0.0
        %2944 = vmatpush1.msra.mxu0 0.0
        %2945 = vmatprep.subr.mxu0 0.0
        %2946 = vmatpush1.msra.mxu0 0.0
        %2947 = vmatprep.subr.mxu0 0.0
        %2948 = vmatpush1.msra.mxu0 0.0
        %2949 = vmatprep.subr.mxu0 0.0
        %2950 = vmatpush1.msra.mxu0 0.0
        %2951 = vmatprep.subr.mxu0 0.0
        %2952 = vmatpush1.msra.mxu0 0.0
        %2953 = vmatprep.mubr.f32.mxu0 0.0
        %2954 = vmatmul.mubr.f32.gmra.mrb[0].mxu0 %v2878
        %v2955 = vpop.f32.mrb[0].mxu0
        %v2956 = vadd.f32 %v2860, %v2955
        %v2957 = vpop.f32.mrb[0].mxu0
        %v2958 = vadd.f32 %v2860, %v2957
        %2959 = vmatprep.mubr.f32.mxu0 0.0
        %2960 = vmatmul.mubr.f32.gmra.mrb[0].mxu0 %v2881
        %v2961 = vpop.f32.mrb[0].mxu0
        %v2962 = vadd.f32 %v2865, %v2961
        %v2963 = vpop.f32.mrb[0].mxu0
        %v2964 = vadd.f32 %v2865, %v2963
        %2965 = vmatprep.mubr.f32.mxu0 0.0
        %2966 = vmatmul.mubr.f32.gmra.mrb[0].mxu0 %v2884
        %v2967 = vpop.f32.mrb[0].mxu0
        %v2968 = vadd.f32 %v2870, %v2967
        %v2969 = vpop.f32.mrb[0].mxu0
        %v2970 = vadd.f32 %v2870, %v2969
        %2971 = vmatprep.mubr.f32.mxu0 0.0
        %2972 = vmatmul.mubr.f32.gmra.mrb[0].mxu0 %v2887
        %v2973 = vpop.f32.mrb[0].mxu0
        %v2974 = vadd.f32 %v2875, %v2973
        %v2975 = vpop.f32.mrb[0].mxu0
        %v2976 = vadd.f32 %v2875, %v2975
        %2977 = vdwg.mxu0
        %2978 = vmatprep.subr.mxu0 %v2820
        %2979 = vmatpush1.msra.mxu0 %v2819
        %2980 = vmatprep.subr.mxu0 %v2828
        %2981 = vmatpush1.msra.mxu0 %v2827
        %2982 = vmatprep.subr.mxu0 %v2836
        %2983 = vmatpush1.msra.mxu0 %v2835
        %2984 = vmatprep.subr.mxu0 %v2844
        %2985 = vmatpush1.msra.mxu0 %v2843
        %2986 = vmatprep.subr.mxu0 0.0
        %2987 = vmatpush1.msra.mxu0 0.0
        %2988 = vmatprep.subr.mxu0 0.0
        %2989 = vmatpush1.msra.mxu0 0.0
        %2990 = vmatprep.subr.mxu0 0.0
        %2991 = vmatpush1.msra.mxu0 0.0
        %2992 = vmatprep.subr.mxu0 0.0
        %2993 = vmatpush1.msra.mxu0 0.0
        %2994 = vmatprep.subr.mxu0 0.0
        %2995 = vmatpush1.msra.mxu0 0.0
        %2996 = vmatprep.subr.mxu0 0.0
        %2997 = vmatpush1.msra.mxu0 0.0
        %2998 = vmatprep.subr.mxu0 0.0
        %2999 = vmatpush1.msra.mxu0 0.0
        %3000 = vmatprep.subr.mxu0 0.0
        %3001 = vmatpush1.msra.mxu0 0.0
        %3002 = vmatprep.subr.mxu0 0.0
        %3003 = vmatpush1.msra.mxu0 0.0
        %3004 = vmatprep.subr.mxu0 0.0
        %3005 = vmatpush1.msra.mxu0 0.0
        %3006 = vmatprep.subr.mxu0 0.0
        %3007 = vmatpush1.msra.mxu0 0.0
        %3008 = vmatprep.subr.mxu0 0.0
        %3009 = vmatpush1.msra.mxu0 0.0
        %3010 = vmatprep.subr.mxu0 0.0
        %3011 = vmatpush1.msra.mxu0 0.0
        %3012 = vmatprep.subr.mxu0 0.0
        %3013 = vmatpush1.msra.mxu0 0.0
        %3014 = vmatprep.subr.mxu0 0.0
        %3015 = vmatpush1.msra.mxu0 0.0
        %3016 = vmatprep.subr.mxu0 0.0
        %3017 = vmatpush1.msra.mxu0 0.0
        %3018 = vmatprep.subr.mxu0 0.0
        %3019 = vmatpush1.msra.mxu0 0.0
        %3020 = vmatprep.subr.mxu0 0.0
        %3021 = vmatpush1.msra.mxu0 0.0
        %3022 = vmatprep.subr.mxu0 0.0
        %3023 = vmatpush1.msra.mxu0 0.0
        %3024 = vmatprep.subr.mxu0 0.0
        %3025 = vmatpush1.msra.mxu0 0.0
        %3026 = vmatprep.subr.mxu0 0.0
        %3027 = vmatpush1.msra.mxu0 0.0
        %3028 = vmatprep.subr.mxu0 0.0
        %3029 = vmatpush1.msra.mxu0 0.0
        %3030 = vmatprep.subr.mxu0 0.0
        %3031 = vmatpush1.msra.mxu0 0.0
        %3032 = vmatprep.subr.mxu0 0.0
        %3033 = vmatpush1.msra.mxu0 0.0
        %3034 = vmatprep.subr.mxu0 0.0
        %3035 = vmatpush1.msra.mxu0 0.0
        %3036 = vmatprep.subr.mxu0 0.0
        %3037 = vmatpush1.msra.mxu0 0.0
        %3038 = vmatprep.subr.mxu0 0.0
        %3039 = vmatpush1.msra.mxu0 0.0
        %3040 = vmatprep.subr.mxu0 0.0
        %3041 = vmatpush1.msra.mxu0 0.0
        %3042 = vmatprep.mubr.f32.mxu0 0.0
        %3043 = vmatmul.mubr.f32.gmra.mrb[0].mxu0 %v2878
        %v3044 = vpop.f32.mrb[0].mxu0
        %v3045 = vadd.f32 %v2860, %v3044
        %v3046 = vpop.f32.mrb[0].mxu0
        %v3047 = vadd.f32 %v2860, %v3046
        %3048 = vmatprep.mubr.f32.mxu0 0.0
        %3049 = vmatmul.mubr.f32.gmra.mrb[0].mxu0 %v2881
        %v3050 = vpop.f32.mrb[0].mxu0
        %v3051 = vadd.f32 %v2865, %v3050
        %v3052 = vpop.f32.mrb[0].mxu0
        %v3053 = vadd.f32 %v2865, %v3052
        %3054 = vmatprep.mubr.f32.mxu0 0.0
        %3055 = vmatmul.mubr.f32.gmra.mrb[0].mxu0 %v2884
        %v3056 = vpop.f32.mrb[0].mxu0
        %v3057 = vadd.f32 %v2870, %v3056
        %v3058 = vpop.f32.mrb[0].mxu0
        %v3059 = vadd.f32 %v2870, %v3058
        %3060 = vmatprep.mubr.f32.mxu0 0.0
        %3061 = vmatmul.mubr.f32.gmra.mrb[0].mxu0 %v2887
        %v3062 = vpop.f32.mrb[0].mxu0
        %v3063 = vadd.f32 %v2875, %v3062
        %v3064 = vpop.f32.mrb[0].mxu0
        %v3065 = vadd.f32 %v2875, %v3064
        %3066 = vdwg.mxu0
        %3067 = vmatprep.subr.mxu0 %v2822
        %3068 = vmatpush1.msra.mxu0 %v2821
        %3069 = vmatprep.subr.mxu0 %v2830
        %3070 = vmatpush1.msra.mxu0 %v2829
        %3071 = vmatprep.subr.mxu0 %v2838
        %3072 = vmatpush1.msra.mxu0 %v2837
        %3073 = vmatprep.subr.mxu0 %v2846
        %3074 = vmatpush1.msra.mxu0 %v2845
        %3075 = vmatprep.subr.mxu0 0.0
        %3076 = vmatpush1.msra.mxu0 0.0
        %3077 = vmatprep.subr.mxu0 0.0
        %3078 = vmatpush1.msra.mxu0 0.0
        %3079 = vmatprep.subr.mxu0 0.0
        %3080 = vmatpush1.msra.mxu0 0.0
        %3081 = vmatprep.subr.mxu0 0.0
        %3082 = vmatpush1.msra.mxu0 0.0
        %3083 = vmatprep.subr.mxu0 0.0
        %3084 = vmatpush1.msra.mxu0 0.0
        %3085 = vmatprep.subr.mxu0 0.0
        %3086 = vmatpush1.msra.mxu0 0.0
        %3087 = vmatprep.subr.mxu0 0.0
        %3088 = vmatpush1.msra.mxu0 0.0
        %3089 = vmatprep.subr.mxu0 0.0
        %3090 = vmatpush1.msra.mxu0 0.0
        %3091 = vmatprep.subr.mxu0 0.0
        %3092 = vmatpush1.msra.mxu0 0.0
        %3093 = vmatprep.subr.mxu0 0.0
        %3094 = vmatpush1.msra.mxu0 0.0
        %3095 = vmatprep.subr.mxu0 0.0
        %3096 = vmatpush1.msra.mxu0 0.0
        %3097 = vmatprep.subr.mxu0 0.0
        %3098 = vmatpush1.msra.mxu0 0.0
        %3099 = vmatprep.subr.mxu0 0.0
        %3100 = vmatpush1.msra.mxu0 0.0
        %3101 = vmatprep.subr.mxu0 0.0
        %3102 = vmatpush1.msra.mxu0 0.0
        %3103 = vmatprep.subr.mxu0 0.0
        %3104 = vmatpush1.msra.mxu0 0.0
        %3105 = vmatprep.subr.mxu0 0.0
        %3106 = vmatpush1.msra.mxu0 0.0
        %3107 = vmatprep.subr.mxu0 0.0
        %3108 = vmatpush1.msra.mxu0 0.0
        %3109 = vmatprep.subr.mxu0 0.0
        %3110 = vmatpush1.msra.mxu0 0.0
        %3111 = vmatprep.subr.mxu0 0.0
        %3112 = vmatpush1.msra.mxu0 0.0
        %3113 = vmatprep.subr.mxu0 0.0
        %3114 = vmatpush1.msra.mxu0 0.0
        %3115 = vmatprep.subr.mxu0 0.0
        %3116 = vmatpush1.msra.mxu0 0.0
        %3117 = vmatprep.subr.mxu0 0.0
        %3118 = vmatpush1.msra.mxu0 0.0
        %3119 = vmatprep.subr.mxu0 0.0
        %3120 = vmatpush1.msra.mxu0 0.0
        %3121 = vmatprep.subr.mxu0 0.0
        %3122 = vmatpush1.msra.mxu0 0.0
        %3123 = vmatprep.subr.mxu0 0.0
        %3124 = vmatpush1.msra.mxu0 0.0
        %3125 = vmatprep.subr.mxu0 0.0
        %3126 = vmatpush1.msra.mxu0 0.0
        %3127 = vmatprep.subr.mxu0 0.0
        %3128 = vmatpush1.msra.mxu0 0.0
        %3129 = vmatprep.subr.mxu0 0.0
        %3130 = vmatpush1.msra.mxu0 0.0
        %3131 = vmatprep.mubr.f32.mxu0 0.0
        %3132 = vmatmul.mubr.f32.gmra.mrb[0].mxu0 %v2878
        %v3133 = vpop.f32.mrb[0].mxu0
        %v3134 = vadd.f32 %v2860, %v3133
        %v3135 = vpop.f32.mrb[0].mxu0
        %v3136 = vadd.f32 %v2860, %v3135
        %3137 = vmatprep.mubr.f32.mxu0 0.0
        %3138 = vmatmul.mubr.f32.gmra.mrb[0].mxu0 %v2881
        %v3139 = vpop.f32.mrb[0].mxu0
        %v3140 = vadd.f32 %v2865, %v3139
        %v3141 = vpop.f32.mrb[0].mxu0
        %v3142 = vadd.f32 %v2865, %v3141
        %3143 = vmatprep.mubr.f32.mxu0 0.0
        %3144 = vmatmul.mubr.f32.gmra.mrb[0].mxu0 %v2884
        %v3145 = vpop.f32.mrb[0].mxu0
        %v3146 = vadd.f32 %v2870, %v3145
        %v3147 = vpop.f32.mrb[0].mxu0
        %v3148 = vadd.f32 %v2870, %v3147
        %3149 = vmatprep.mubr.f32.mxu0 0.0
        %3150 = vmatmul.mubr.f32.gmra.mrb[0].mxu0 %v2887
        %v3151 = vpop.f32.mrb[0].mxu0
        %v3152 = vadd.f32 %v2875, %v3151
        %v3153 = vpop.f32.mrb[0].mxu0
        %v3154 = vadd.f32 %v2875, %v3153
        %3155 = vdwg.mxu0
        %3156 = vmatprep.subr.mxu0 %v2824
        %3157 = vmatpush1.msra.mxu0 %v2823
        %3158 = vmatprep.subr.mxu0 %v2832
        %3159 = vmatpush1.msra.mxu0 %v2831
        %3160 = vmatprep.subr.mxu0 %v2840
        %3161 = vmatpush1.msra.mxu0 %v2839
        %3162 = vmatprep.subr.mxu0 %v2848
        %3163 = vmatpush1.msra.mxu0 %v2847
        %3164 = vmatprep.subr.mxu0 0.0
        %3165 = vmatpush1.msra.mxu0 0.0
        %3166 = vmatprep.subr.mxu0 0.0
        %3167 = vmatpush1.msra.mxu0 0.0
        %3168 = vmatprep.subr.mxu0 0.0
        %3169 = vmatpush1.msra.mxu0 0.0
        %3170 = vmatprep.subr.mxu0 0.0
        %3171 = vmatpush1.msra.mxu0 0.0
        %3172 = vmatprep.subr.mxu0 0.0
        %3173 = vmatpush1.msra.mxu0 0.0
        %3174 = vmatprep.subr.mxu0 0.0
        %3175 = vmatpush1.msra.mxu0 0.0
        %3176 = vmatprep.subr.mxu0 0.0
        %3177 = vmatpush1.msra.mxu0 0.0
        %3178 = vmatprep.subr.mxu0 0.0
        %3179 = vmatpush1.msra.mxu0 0.0
        %3180 = vmatprep.subr.mxu0 0.0
        %3181 = vmatpush1.msra.mxu0 0.0
        %3182 = vmatprep.subr.mxu0 0.0
        %3183 = vmatpush1.msra.mxu0 0.0
        %3184 = vmatprep.subr.mxu0 0.0
        %3185 = vmatpush1.msra.mxu0 0.0
        %3186 = vmatprep.subr.mxu0 0.0
        %3187 = vmatpush1.msra.mxu0 0.0
        %3188 = vmatprep.subr.mxu0 0.0
        %3189 = vmatpush1.msra.mxu0 0.0
        %3190 = vmatprep.subr.mxu0 0.0
        %3191 = vmatpush1.msra.mxu0 0.0
        %3192 = vmatprep.subr.mxu0 0.0
        %3193 = vmatpush1.msra.mxu0 0.0
        %3194 = vmatprep.subr.mxu0 0.0
        %3195 = vmatpush1.msra.mxu0 0.0
        %3196 = vmatprep.subr.mxu0 0.0
        %3197 = vmatpush1.msra.mxu0 0.0
        %3198 = vmatprep.subr.mxu0 0.0
        %3199 = vmatpush1.msra.mxu0 0.0
        %3200 = vmatprep.subr.mxu0 0.0
        %3201 = vmatpush1.msra.mxu0 0.0
        %3202 = vmatprep.subr.mxu0 0.0
        %3203 = vmatpush1.msra.mxu0 0.0
        %3204 = vmatprep.subr.mxu0 0.0
        %3205 = vmatpush1.msra.mxu0 0.0
        %3206 = vmatprep.subr.mxu0 0.0
        %3207 = vmatpush1.msra.mxu0 0.0
        %3208 = vmatprep.subr.mxu0 0.0
        %3209 = vmatpush1.msra.mxu0 0.0
        %3210 = vmatprep.subr.mxu0 0.0
        %3211 = vmatpush1.msra.mxu0 0.0
        %3212 = vmatprep.subr.mxu0 0.0
        %3213 = vmatpush1.msra.mxu0 0.0
        %3214 = vmatprep.subr.mxu0 0.0
        %3215 = vmatpush1.msra.mxu0 0.0
        %3216 = vmatprep.subr.mxu0 0.0
        %3217 = vmatpush1.msra.mxu0 0.0
        %3218 = vmatprep.subr.mxu0 0.0
        %3219 = vmatpush1.msra.mxu0 0.0
        %3220 = vmatprep.mubr.f32.mxu0 0.0
        %3221 = vmatmul.mubr.f32.gmra.mrb[0].mxu0 %v2878
        %v3222 = vpop.f32.mrb[0].mxu0
        %v3223 = vadd.f32 %v2860, %v3222
        %v3224 = vpop.f32.mrb[0].mxu0
        %v3225 = vadd.f32 %v2860, %v3224
        %3226 = vmatprep.mubr.f32.mxu0 0.0
        %3227 = vmatmul.mubr.f32.gmra.mrb[0].mxu0 %v2881
        %v3228 = vpop.f32.mrb[0].mxu0
        %v3229 = vadd.f32 %v2865, %v3228
        %v3230 = vpop.f32.mrb[0].mxu0
        %v3231 = vadd.f32 %v2865, %v3230
        %3232 = vmatprep.mubr.f32.mxu0 0.0
        %3233 = vmatmul.mubr.f32.gmra.mrb[0].mxu0 %v2884
        %v3234 = vpop.f32.mrb[0].mxu0
        %v3235 = vadd.f32 %v2870, %v3234
        %v3236 = vpop.f32.mrb[0].mxu0
        %v3237 = vadd.f32 %v2870, %v3236
        %3238 = vmatprep.mubr.f32.mxu0 0.0
        %3239 = vmatmul.mubr.f32.gmra.mrb[0].mxu0 %v2887
        %v3240 = vpop.f32.mrb[0].mxu0
        %v3241 = vadd.f32 %v2875, %v3240
        %v3242 = vpop.f32.mrb[0].mxu0
        %v3243 = vadd.f32 %v2875, %v3242
        %3244 = vdwg.mxu0
        %v3245 = vmul.f32 %v2956, 0.31830987
        %v3246 = vmul.f32 %v2958, 0.31830987
        %v3247 = vmul.f32 %v3045, 0.31830987
        %v3248 = vmul.f32 %v3047, 0.31830987
        %v3249 = vmul.f32 %v3134, 0.31830987
        %v3250 = vmul.f32 %v3136, 0.31830987
        %v3251 = vmul.f32 %v3223, 0.31830987
        %v3252 = vmul.f32 %v3225, 0.31830987
        %v3253 = vmul.f32 %v2962, 0.31830987
        %v3254 = vmul.f32 %v2964, 0.31830987
        %v3255 = vmul.f32 %v3051, 0.31830987
        %v3256 = vmul.f32 %v3053, 0.31830987
        %v3257 = vmul.f32 %v3140, 0.31830987
        %v3258 = vmul.f32 %v3142, 0.31830987
        %v3259 = vmul.f32 %v3229, 0.31830987
        %v3260 = vmul.f32 %v3231, 0.31830987
        %v3261 = vmul.f32 %v2968, 0.31830987
        %v3262 = vmul.f32 %v2970, 0.31830987
        %v3263 = vmul.f32 %v3057, 0.31830987
        %v3264 = vmul.f32 %v3059, 0.31830987
        %v3265 = vmul.f32 %v3146, 0.31830987
        %v3266 = vmul.f32 %v3148, 0.31830987
        %v3267 = vmul.f32 %v3235, 0.31830987
        %v3268 = vmul.f32 %v3237, 0.31830987
        %v3269 = vmul.f32 %v2974, 0.31830987
        %v3270 = vmul.f32 %v2976, 0.31830987
        %v3271 = vmul.f32 %v3063, 0.31830987
        %v3272 = vmul.f32 %v3065, 0.31830987
        %v3273 = vmul.f32 %v3152, 0.31830987
        %v3274 = vmul.f32 %v3154, 0.31830987
        %v3275 = vmul.f32 %v3241, 0.31830987
        %v3276 = vmul.f32 %v3243, 0.31830987
        %v3277 = vadd.f32 %v3245, 0.5
        %v3278 = vadd.f32 %v3246, 0.5
        %v3279 = vadd.f32 %v3247, 0.5
        %v3280 = vadd.f32 %v3248, 0.5
        %v3281 = vadd.f32 %v3249, 0.5
        %v3282 = vadd.f32 %v3250, 0.5
        %v3283 = vadd.f32 %v3251, 0.5
        %v3284 = vadd.f32 %v3252, 0.5
        %v3285 = vadd.f32 %v3253, 0.5
        %v3286 = vadd.f32 %v3254, 0.5
        %v3287 = vadd.f32 %v3255, 0.5
        %v3288 = vadd.f32 %v3256, 0.5
        %v3289 = vadd.f32 %v3257, 0.5
        %v3290 = vadd.f32 %v3258, 0.5
        %v3291 = vadd.f32 %v3259, 0.5
        %v3292 = vadd.f32 %v3260, 0.5
        %v3293 = vadd.f32 %v3261, 0.5
        %v3294 = vadd.f32 %v3262, 0.5
        %v3295 = vadd.f32 %v3263, 0.5
        %v3296 = vadd.f32 %v3264, 0.5
        %v3297 = vadd.f32 %v3265, 0.5
        %v3298 = vadd.f32 %v3266, 0.5
        %v3299 = vadd.f32 %v3267, 0.5
        %v3300 = vadd.f32 %v3268, 0.5
        %v3301 = vadd.f32 %v3269, 0.5
        %v3302 = vadd.f32 %v3270, 0.5
        %v3303 = vadd.f32 %v3271, 0.5
        %v3304 = vadd.f32 %v3272, 0.5
        %v3305 = vadd.f32 %v3273, 0.5
        %v3306 = vadd.f32 %v3274, 0.5
        %v3307 = vadd.f32 %v3275, 0.5
        %v3308 = vadd.f32 %v3276, 0.5
        %v3309 = vfloor.f32 %v3277
        %v3310 = vfloor.f32 %v3278
        %v3311 = vfloor.f32 %v3279
        %v3312 = vfloor.f32 %v3280
        %v3313 = vfloor.f32 %v3281
        %v3314 = vfloor.f32 %v3282
        %v3315 = vfloor.f32 %v3283
        %v3316 = vfloor.f32 %v3284
        %v3317 = vfloor.f32 %v3285
        %v3318 = vfloor.f32 %v3286
        %v3319 = vfloor.f32 %v3287
        %v3320 = vfloor.f32 %v3288
        %v3321 = vfloor.f32 %v3289
        %v3322 = vfloor.f32 %v3290
        %v3323 = vfloor.f32 %v3291
        %v3324 = vfloor.f32 %v3292
        %v3325 = vfloor.f32 %v3293
        %v3326 = vfloor.f32 %v3294
        %v3327 = vfloor.f32 %v3295
        %v3328 = vfloor.f32 %v3296
        %v3329 = vfloor.f32 %v3297
        %v3330 = vfloor.f32 %v3298
        %v3331 = vfloor.f32 %v3299
        %v3332 = vfloor.f32 %v3300
        %v3333 = vfloor.f32 %v3301
        %v3334 = vfloor.f32 %v3302
        %v3335 = vfloor.f32 %v3303
        %v3336 = vfloor.f32 %v3304
        %v3337 = vfloor.f32 %v3305
        %v3338 = vfloor.f32 %v3306
        %v3339 = vfloor.f32 %v3307
        %v3340 = vfloor.f32 %v3308
        %v3341 = vmul.f32 %v3309, 3.140625
        %v3342 = vmul.f32 %v3310, 3.140625
        %v3343 = vmul.f32 %v3311, 3.140625
        %v3344 = vmul.f32 %v3312, 3.140625
        %v3345 = vmul.f32 %v3313, 3.140625
        %v3346 = vmul.f32 %v3314, 3.140625
        %v3347 = vmul.f32 %v3315, 3.140625
        %v3348 = vmul.f32 %v3316, 3.140625
        %v3349 = vmul.f32 %v3317, 3.140625
        %v3350 = vmul.f32 %v3318, 3.140625
        %v3351 = vmul.f32 %v3319, 3.140625
        %v3352 = vmul.f32 %v3320, 3.140625
        %v3353 = vmul.f32 %v3321, 3.140625
        %v3354 = vmul.f32 %v3322, 3.140625
        %v3355 = vmul.f32 %v3323, 3.140625
        %v3356 = vmul.f32 %v3324, 3.140625
        %v3357 = vmul.f32 %v3325, 3.140625
        %v3358 = vmul.f32 %v3326, 3.140625
        %v3359 = vmul.f32 %v3327, 3.140625
        %v3360 = vmul.f32 %v3328, 3.140625
        %v3361 = vmul.f32 %v3329, 3.140625
        %v3362 = vmul.f32 %v3330, 3.140625
        %v3363 = vmul.f32 %v3331, 3.140625
        %v3364 = vmul.f32 %v3332, 3.140625
        %v3365 = vmul.f32 %v3333, 3.140625
        %v3366 = vmul.f32 %v3334, 3.140625
        %v3367 = vmul.f32 %v3335, 3.140625
        %v3368 = vmul.f32 %v3336, 3.140625
        %v3369 = vmul.f32 %v3337, 3.140625
        %v3370 = vmul.f32 %v3338, 3.140625
        %v3371 = vmul.f32 %v3339, 3.140625
        %v3372 = vmul.f32 %v3340, 3.140625
        %v3373 = vsub.f32 %v2956, %v3341
        %v3374 = vsub.f32 %v2958, %v3342
        %v3375 = vsub.f32 %v3045, %v3343
        %v3376 = vsub.f32 %v3047, %v3344
        %v3377 = vsub.f32 %v3134, %v3345
        %v3378 = vsub.f32 %v3136, %v3346
        %v3379 = vsub.f32 %v3223, %v3347
        %v3380 = vsub.f32 %v3225, %v3348
        %v3381 = vsub.f32 %v2962, %v3349
        %v3382 = vsub.f32 %v2964, %v3350
        %v3383 = vsub.f32 %v3051, %v3351
        %v3384 = vsub.f32 %v3053, %v3352
        %v3385 = vsub.f32 %v3140, %v3353
        %v3386 = vsub.f32 %v3142, %v3354
        %v3387 = vsub.f32 %v3229, %v3355
        %v3388 = vsub.f32 %v3231, %v3356
        %v3389 = vsub.f32 %v2968, %v3357
        %v3390 = vsub.f32 %v2970, %v3358
        %v3391 = vsub.f32 %v3057, %v3359
        %v3392 = vsub.f32 %v3059, %v3360
        %v3393 = vsub.f32 %v3146, %v3361
        %v3394 = vsub.f32 %v3148, %v3362
        %v3395 = vsub.f32 %v3235, %v3363
        %v3396 = vsub.f32 %v3237, %v3364
        %v3397 = vsub.f32 %v2974, %v3365
        %v3398 = vsub.f32 %v2976, %v3366
        %v3399 = vsub.f32 %v3063, %v3367
        %v3400 = vsub.f32 %v3065, %v3368
        %v3401 = vsub.f32 %v3152, %v3369
        %v3402 = vsub.f32 %v3154, %v3370
        %v3403 = vsub.f32 %v3241, %v3371
        %v3404 = vsub.f32 %v3243, %v3372
        %v3405 = vmul.f32 %v3309, 0.00096702576
        %v3406 = vmul.f32 %v3310, 0.00096702576
        %v3407 = vmul.f32 %v3311, 0.00096702576
        %v3408 = vmul.f32 %v3312, 0.00096702576
        %v3409 = vmul.f32 %v3313, 0.00096702576
        %v3410 = vmul.f32 %v3314, 0.00096702576
        %v3411 = vmul.f32 %v3315, 0.00096702576
        %v3412 = vmul.f32 %v3316, 0.00096702576
        %v3413 = vmul.f32 %v3317, 0.00096702576
        %v3414 = vmul.f32 %v3318, 0.00096702576
        %v3415 = vmul.f32 %v3319, 0.00096702576
        %v3416 = vmul.f32 %v3320, 0.00096702576
        %v3417 = vmul.f32 %v3321, 0.00096702576
        %v3418 = vmul.f32 %v3322, 0.00096702576
        %v3419 = vmul.f32 %v3323, 0.00096702576
        %v3420 = vmul.f32 %v3324, 0.00096702576
        %v3421 = vmul.f32 %v3325, 0.00096702576
        %v3422 = vmul.f32 %v3326, 0.00096702576
        %v3423 = vmul.f32 %v3327, 0.00096702576
        %v3424 = vmul.f32 %v3328, 0.00096702576
        %v3425 = vmul.f32 %v3329, 0.00096702576
        %v3426 = vmul.f32 %v3330, 0.00096702576
        %v3427 = vmul.f32 %v3331, 0.00096702576
        %v3428 = vmul.f32 %v3332, 0.00096702576
        %v3429 = vmul.f32 %v3333, 0.00096702576
        %v3430 = vmul.f32 %v3334, 0.00096702576
        %v3431 = vmul.f32 %v3335, 0.00096702576
        %v3432 = vmul.f32 %v3336, 0.00096702576
        %v3433 = vmul.f32 %v3337, 0.00096702576
        %v3434 = vmul.f32 %v3338, 0.00096702576
        %v3435 = vmul.f32 %v3339, 0.00096702576
        %v3436 = vmul.f32 %v3340, 0.00096702576
        %v3437 = vsub.f32 %v3373, %v3405
        %v3438 = vsub.f32 %v3374, %v3406
        %v3439 = vsub.f32 %v3375, %v3407
        %v3440 = vsub.f32 %v3376, %v3408
        %v3441 = vsub.f32 %v3377, %v3409
        %v3442 = vsub.f32 %v3378, %v3410
        %v3443 = vsub.f32 %v3379, %v3411
        %v3444 = vsub.f32 %v3380, %v3412
        %v3445 = vsub.f32 %v3381, %v3413
        %v3446 = vsub.f32 %v3382, %v3414
        %v3447 = vsub.f32 %v3383, %v3415
        %v3448 = vsub.f32 %v3384, %v3416
        %v3449 = vsub.f32 %v3385, %v3417
        %v3450 = vsub.f32 %v3386, %v3418
        %v3451 = vsub.f32 %v3387, %v3419
        %v3452 = vsub.f32 %v3388, %v3420
        %v3453 = vsub.f32 %v3389, %v3421
        %v3454 = vsub.f32 %v3390, %v3422
        %v3455 = vsub.f32 %v3391, %v3423
        %v3456 = vsub.f32 %v3392, %v3424
        %v3457 = vsub.f32 %v3393, %v3425
        %v3458 = vsub.f32 %v3394, %v3426
        %v3459 = vsub.f32 %v3395, %v3427
        %v3460 = vsub.f32 %v3396, %v3428
        %v3461 = vsub.f32 %v3397, %v3429
        %v3462 = vsub.f32 %v3398, %v3430
        %v3463 = vsub.f32 %v3399, %v3431
        %v3464 = vsub.f32 %v3400, %v3432
        %v3465 = vsub.f32 %v3401, %v3433
        %v3466 = vsub.f32 %v3402, %v3434
        %v3467 = vsub.f32 %v3403, %v3435
        %v3468 = vsub.f32 %v3404, %v3436
        %v3469 = vmul.f32 %v3309, 6.277114e-07
        %v3470 = vmul.f32 %v3310, 6.277114e-07
        %v3471 = vmul.f32 %v3311, 6.277114e-07
        %v3472 = vmul.f32 %v3312, 6.277114e-07
        %v3473 = vmul.f32 %v3313, 6.277114e-07
        %v3474 = vmul.f32 %v3314, 6.277114e-07
        %v3475 = vmul.f32 %v3315, 6.277114e-07
        %v3476 = vmul.f32 %v3316, 6.277114e-07
        %v3477 = vmul.f32 %v3317, 6.277114e-07
        %v3478 = vmul.f32 %v3318, 6.277114e-07
        %v3479 = vmul.f32 %v3319, 6.277114e-07
        %v3480 = vmul.f32 %v3320, 6.277114e-07
        %v3481 = vmul.f32 %v3321, 6.277114e-07
        %v3482 = vmul.f32 %v3322, 6.277114e-07
        %v3483 = vmul.f32 %v3323, 6.277114e-07
        %v3484 = vmul.f32 %v3324, 6.277114e-07
        %v3485 = vmul.f32 %v3325, 6.277114e-07
        %v3486 = vmul.f32 %v3326, 6.277114e-07
        %v3487 = vmul.f32 %v3327, 6.277114e-07
        %v3488 = vmul.f32 %v3328, 6.277114e-07
        %v3489 = vmul.f32 %v3329, 6.277114e-07
        %v3490 = vmul.f32 %v3330, 6.277114e-07
        %v3491 = vmul.f32 %v3331, 6.277114e-07
        %v3492 = vmul.f32 %v3332, 6.277114e-07
        %v3493 = vmul.f32 %v3333, 6.277114e-07
        %v3494 = vmul.f32 %v3334, 6.277114e-07
        %v3495 = vmul.f32 %v3335, 6.277114e-07
        %v3496 = vmul.f32 %v3336, 6.277114e-07
        %v3497 = vmul.f32 %v3337, 6.277114e-07
        %v3498 = vmul.f32 %v3338, 6.277114e-07
        %v3499 = vmul.f32 %v3339, 6.277114e-07
        %v3500 = vmul.f32 %v3340, 6.277114e-07
        %v3501 = vsub.f32 %v3437, %v3469
        %v3502 = vsub.f32 %v3438, %v3470
        %v3503 = vsub.f32 %v3439, %v3471
        %v3504 = vsub.f32 %v3440, %v3472
        %v3505 = vsub.f32 %v3441, %v3473
        %v3506 = vsub.f32 %v3442, %v3474
        %v3507 = vsub.f32 %v3443, %v3475
        %v3508 = vsub.f32 %v3444, %v3476
        %v3509 = vsub.f32 %v3445, %v3477
        %v3510 = vsub.f32 %v3446, %v3478
        %v3511 = vsub.f32 %v3447, %v3479
        %v3512 = vsub.f32 %v3448, %v3480
        %v3513 = vsub.f32 %v3449, %v3481
        %v3514 = vsub.f32 %v3450, %v3482
        %v3515 = vsub.f32 %v3451, %v3483
        %v3516 = vsub.f32 %v3452, %v3484
        %v3517 = vsub.f32 %v3453, %v3485
        %v3518 = vsub.f32 %v3454, %v3486
        %v3519 = vsub.f32 %v3455, %v3487
        %v3520 = vsub.f32 %v3456, %v3488
        %v3521 = vsub.f32 %v3457, %v3489
        %v3522 = vsub.f32 %v3458, %v3490
        %v3523 = vsub.f32 %v3459, %v3491
        %v3524 = vsub.f32 %v3460, %v3492
        %v3525 = vsub.f32 %v3461, %v3493
        %v3526 = vsub.f32 %v3462, %v3494
        %v3527 = vsub.f32 %v3463, %v3495
        %v3528 = vsub.f32 %v3464, %v3496
        %v3529 = vsub.f32 %v3465, %v3497
        %v3530 = vsub.f32 %v3466, %v3498
        %v3531 = vsub.f32 %v3467, %v3499
        %v3532 = vsub.f32 %v3468, %v3500
        %v3533 = vmul.f32 %v3309, 0.5
        %v3534 = vmul.f32 %v3310, 0.5
        %v3535 = vmul.f32 %v3311, 0.5
        %v3536 = vmul.f32 %v3312, 0.5
        %v3537 = vmul.f32 %v3313, 0.5
        %v3538 = vmul.f32 %v3314, 0.5
        %v3539 = vmul.f32 %v3315, 0.5
        %v3540 = vmul.f32 %v3316, 0.5
        %v3541 = vmul.f32 %v3317, 0.5
        %v3542 = vmul.f32 %v3318, 0.5
        %v3543 = vmul.f32 %v3319, 0.5
        %v3544 = vmul.f32 %v3320, 0.5
        %v3545 = vmul.f32 %v3321, 0.5
        %v3546 = vmul.f32 %v3322, 0.5
        %v3547 = vmul.f32 %v3323, 0.5
        %v3548 = vmul.f32 %v3324, 0.5
        %v3549 = vmul.f32 %v3325, 0.5
        %v3550 = vmul.f32 %v3326, 0.5
        %v3551 = vmul.f32 %v3327, 0.5
        %v3552 = vmul.f32 %v3328, 0.5
        %v3553 = vmul.f32 %v3329, 0.5
        %v3554 = vmul.f32 %v3330, 0.5
        %v3555 = vmul.f32 %v3331, 0.5
        %v3556 = vmul.f32 %v3332, 0.5
        %v3557 = vmul.f32 %v3333, 0.5
        %v3558 = vmul.f32 %v3334, 0.5
        %v3559 = vmul.f32 %v3335, 0.5
        %v3560 = vmul.f32 %v3336, 0.5
        %v3561 = vmul.f32 %v3337, 0.5
        %v3562 = vmul.f32 %v3338, 0.5
        %v3563 = vmul.f32 %v3339, 0.5
        %v3564 = vmul.f32 %v3340, 0.5
        %v3565 = vfloor.f32 %v3533
        %v3566 = vfloor.f32 %v3534
        %v3567 = vfloor.f32 %v3535
        %v3568 = vfloor.f32 %v3536
        %v3569 = vfloor.f32 %v3537
        %v3570 = vfloor.f32 %v3538
        %v3571 = vfloor.f32 %v3539
        %v3572 = vfloor.f32 %v3540
        %v3573 = vfloor.f32 %v3541
        %v3574 = vfloor.f32 %v3542
        %v3575 = vfloor.f32 %v3543
        %v3576 = vfloor.f32 %v3544
        %v3577 = vfloor.f32 %v3545
        %v3578 = vfloor.f32 %v3546
        %v3579 = vfloor.f32 %v3547
        %v3580 = vfloor.f32 %v3548
        %v3581 = vfloor.f32 %v3549
        %v3582 = vfloor.f32 %v3550
        %v3583 = vfloor.f32 %v3551
        %v3584 = vfloor.f32 %v3552
        %v3585 = vfloor.f32 %v3553
        %v3586 = vfloor.f32 %v3554
        %v3587 = vfloor.f32 %v3555
        %v3588 = vfloor.f32 %v3556
        %v3589 = vfloor.f32 %v3557
        %v3590 = vfloor.f32 %v3558
        %v3591 = vfloor.f32 %v3559
        %v3592 = vfloor.f32 %v3560
        %v3593 = vfloor.f32 %v3561
        %v3594 = vfloor.f32 %v3562
        %v3595 = vfloor.f32 %v3563
        %v3596 = vfloor.f32 %v3564
        %v3597 = vmul.f32 %v3565, 2.0
        %v3598 = vmul.f32 %v3566, 2.0
        %v3599 = vmul.f32 %v3567, 2.0
        %v3600 = vmul.f32 %v3568, 2.0
        %v3601 = vmul.f32 %v3569, 2.0
        %v3602 = vmul.f32 %v3570, 2.0
        %v3603 = vmul.f32 %v3571, 2.0
        %v3604 = vmul.f32 %v3572, 2.0
        %v3605 = vmul.f32 %v3573, 2.0
        %v3606 = vmul.f32 %v3574, 2.0
        %v3607 = vmul.f32 %v3575, 2.0
        %v3608 = vmul.f32 %v3576, 2.0
        %v3609 = vmul.f32 %v3577, 2.0
        %v3610 = vmul.f32 %v3578, 2.0
        %v3611 = vmul.f32 %v3579, 2.0
        %v3612 = vmul.f32 %v3580, 2.0
        %v3613 = vmul.f32 %v3581, 2.0
        %v3614 = vmul.f32 %v3582, 2.0
        %v3615 = vmul.f32 %v3583, 2.0
        %v3616 = vmul.f32 %v3584, 2.0
        %v3617 = vmul.f32 %v3585, 2.0
        %v3618 = vmul.f32 %v3586, 2.0
        %v3619 = vmul.f32 %v3587, 2.0
        %v3620 = vmul.f32 %v3588, 2.0
        %v3621 = vmul.f32 %v3589, 2.0
        %v3622 = vmul.f32 %v3590, 2.0
        %v3623 = vmul.f32 %v3591, 2.0
        %v3624 = vmul.f32 %v3592, 2.0
        %v3625 = vmul.f32 %v3593, 2.0
        %v3626 = vmul.f32 %v3594, 2.0
        %v3627 = vmul.f32 %v3595, 2.0
        %v3628 = vmul.f32 %v3596, 2.0
        %v3629 = vsub.f32 %v3309, %v3597
        %v3630 = vsub.f32 %v3310, %v3598
        %v3631 = vsub.f32 %v3311, %v3599
        %v3632 = vsub.f32 %v3312, %v3600
        %v3633 = vsub.f32 %v3313, %v3601
        %v3634 = vsub.f32 %v3314, %v3602
        %v3635 = vsub.f32 %v3315, %v3603
        %v3636 = vsub.f32 %v3316, %v3604
        %v3637 = vsub.f32 %v3317, %v3605
        %v3638 = vsub.f32 %v3318, %v3606
        %v3639 = vsub.f32 %v3319, %v3607
        %v3640 = vsub.f32 %v3320, %v3608
        %v3641 = vsub.f32 %v3321, %v3609
        %v3642 = vsub.f32 %v3322, %v3610
        %v3643 = vsub.f32 %v3323, %v3611
        %v3644 = vsub.f32 %v3324, %v3612
        %v3645 = vsub.f32 %v3325, %v3613
        %v3646 = vsub.f32 %v3326, %v3614
        %v3647 = vsub.f32 %v3327, %v3615
        %v3648 = vsub.f32 %v3328, %v3616
        %v3649 = vsub.f32 %v3329, %v3617
        %v3650 = vsub.f32 %v3330, %v3618
        %v3651 = vsub.f32 %v3331, %v3619
        %v3652 = vsub.f32 %v3332, %v3620
        %v3653 = vsub.f32 %v3333, %v3621
        %v3654 = vsub.f32 %v3334, %v3622
        %v3655 = vsub.f32 %v3335, %v3623
        %v3656 = vsub.f32 %v3336, %v3624
        %v3657 = vsub.f32 %v3337, %v3625
        %v3658 = vsub.f32 %v3338, %v3626
        %v3659 = vsub.f32 %v3339, %v3627
        %v3660 = vsub.f32 %v3340, %v3628
        %v3661 = vmul.f32 %v3629, 2.0
        %v3662 = vmul.f32 %v3630, 2.0
        %v3663 = vmul.f32 %v3631, 2.0
        %v3664 = vmul.f32 %v3632, 2.0
        %v3665 = vmul.f32 %v3633, 2.0
        %v3666 = vmul.f32 %v3634, 2.0
        %v3667 = vmul.f32 %v3635, 2.0
        %v3668 = vmul.f32 %v3636, 2.0
        %v3669 = vmul.f32 %v3637, 2.0
        %v3670 = vmul.f32 %v3638, 2.0
        %v3671 = vmul.f32 %v3639, 2.0
        %v3672 = vmul.f32 %v3640, 2.0
        %v3673 = vmul.f32 %v3641, 2.0
        %v3674 = vmul.f32 %v3642, 2.0
        %v3675 = vmul.f32 %v3643, 2.0
        %v3676 = vmul.f32 %v3644, 2.0
        %v3677 = vmul.f32 %v3645, 2.0
        %v3678 = vmul.f32 %v3646, 2.0
        %v3679 = vmul.f32 %v3647, 2.0
        %v3680 = vmul.f32 %v3648, 2.0
        %v3681 = vmul.f32 %v3649, 2.0
        %v3682 = vmul.f32 %v3650, 2.0
        %v3683 = vmul.f32 %v3651, 2.0
        %v3684 = vmul.f32 %v3652, 2.0
        %v3685 = vmul.f32 %v3653, 2.0
        %v3686 = vmul.f32 %v3654, 2.0
        %v3687 = vmul.f32 %v3655, 2.0
        %v3688 = vmul.f32 %v3656, 2.0
        %v3689 = vmul.f32 %v3657, 2.0
        %v3690 = vmul.f32 %v3658, 2.0
        %v3691 = vmul.f32 %v3659, 2.0
        %v3692 = vmul.f32 %v3660, 2.0
        %v3693 = vsub.f32 1.0, %v3661
        %v3694 = vsub.f32 1.0, %v3662
        %v3695 = vsub.f32 1.0, %v3663
        %v3696 = vsub.f32 1.0, %v3664
        %v3697 = vsub.f32 1.0, %v3665
        %v3698 = vsub.f32 1.0, %v3666
        %v3699 = vsub.f32 1.0, %v3667
        %v3700 = vsub.f32 1.0, %v3668
        %v3701 = vsub.f32 1.0, %v3669
        %v3702 = vsub.f32 1.0, %v3670
        %v3703 = vsub.f32 1.0, %v3671
        %v3704 = vsub.f32 1.0, %v3672
        %v3705 = vsub.f32 1.0, %v3673
        %v3706 = vsub.f32 1.0, %v3674
        %v3707 = vsub.f32 1.0, %v3675
        %v3708 = vsub.f32 1.0, %v3676
        %v3709 = vsub.f32 1.0, %v3677
        %v3710 = vsub.f32 1.0, %v3678
        %v3711 = vsub.f32 1.0, %v3679
        %v3712 = vsub.f32 1.0, %v3680
        %v3713 = vsub.f32 1.0, %v3681
        %v3714 = vsub.f32 1.0, %v3682
        %v3715 = vsub.f32 1.0, %v3683
        %v3716 = vsub.f32 1.0, %v3684
        %v3717 = vsub.f32 1.0, %v3685
        %v3718 = vsub.f32 1.0, %v3686
        %v3719 = vsub.f32 1.0, %v3687
        %v3720 = vsub.f32 1.0, %v3688
        %v3721 = vsub.f32 1.0, %v3689
        %v3722 = vsub.f32 1.0, %v3690
        %v3723 = vsub.f32 1.0, %v3691
        %v3724 = vsub.f32 1.0, %v3692
        %v3725 = vmul.f32 %v3501, %v3501
        %v3726 = vmul.f32 %v3502, %v3502
        %v3727 = vmul.f32 %v3503, %v3503
        %v3728 = vmul.f32 %v3504, %v3504
        %v3729 = vmul.f32 %v3505, %v3505
        %v3730 = vmul.f32 %v3506, %v3506
        %v3731 = vmul.f32 %v3507, %v3507
        %v3732 = vmul.f32 %v3508, %v3508
        %v3733 = vmul.f32 %v3509, %v3509
        %v3734 = vmul.f32 %v3510, %v3510
        %v3735 = vmul.f32 %v3511, %v3511
        %v3736 = vmul.f32 %v3512, %v3512
        %v3737 = vmul.f32 %v3513, %v3513
        %v3738 = vmul.f32 %v3514, %v3514
        %v3739 = vmul.f32 %v3515, %v3515
        %v3740 = vmul.f32 %v3516, %v3516
        %v3741 = vmul.f32 %v3517, %v3517
        %v3742 = vmul.f32 %v3518, %v3518
        %v3743 = vmul.f32 %v3519, %v3519
        %v3744 = vmul.f32 %v3520, %v3520
        %v3745 = vmul.f32 %v3521, %v3521
        %v3746 = vmul.f32 %v3522, %v3522
        %v3747 = vmul.f32 %v3523, %v3523
        %v3748 = vmul.f32 %v3524, %v3524
        %v3749 = vmul.f32 %v3525, %v3525
        %v3750 = vmul.f32 %v3526, %v3526
        %v3751 = vmul.f32 %v3527, %v3527
        %v3752 = vmul.f32 %v3528, %v3528
        %v3753 = vmul.f32 %v3529, %v3529
        %v3754 = vmul.f32 %v3530, %v3530
        %v3755 = vmul.f32 %v3531, %v3531
        %v3756 = vmul.f32 %v3532, %v3532
        %v3757 = vmul.f32 %v3725, 2.608316e-06
        %v3758 = vmul.f32 %v3726, 2.608316e-06
        %v3759 = vmul.f32 %v3727, 2.608316e-06
        %v3760 = vmul.f32 %v3728, 2.608316e-06
        %v3761 = vmul.f32 %v3729, 2.608316e-06
        %v3762 = vmul.f32 %v3730, 2.608316e-06
        %v3763 = vmul.f32 %v3731, 2.608316e-06
        %v3764 = vmul.f32 %v3732, 2.608316e-06
        %v3765 = vmul.f32 %v3733, 2.608316e-06
        %v3766 = vmul.f32 %v3734, 2.608316e-06
        %v3767 = vmul.f32 %v3735, 2.608316e-06
        %v3768 = vmul.f32 %v3736, 2.608316e-06
        %v3769 = vmul.f32 %v3737, 2.608316e-06
        %v3770 = vmul.f32 %v3738, 2.608316e-06
        %v3771 = vmul.f32 %v3739, 2.608316e-06
        %v3772 = vmul.f32 %v3740, 2.608316e-06
        %v3773 = vmul.f32 %v3741, 2.608316e-06
        %v3774 = vmul.f32 %v3742, 2.608316e-06
        %v3775 = vmul.f32 %v3743, 2.608316e-06
        %v3776 = vmul.f32 %v3744, 2.608316e-06
        %v3777 = vmul.f32 %v3745, 2.608316e-06
        %v3778 = vmul.f32 %v3746, 2.608316e-06
        %v3779 = vmul.f32 %v3747, 2.608316e-06
        %v3780 = vmul.f32 %v3748, 2.608316e-06
        %v3781 = vmul.f32 %v3749, 2.608316e-06
        %v3782 = vmul.f32 %v3750, 2.608316e-06
        %v3783 = vmul.f32 %v3751, 2.608316e-06
        %v3784 = vmul.f32 %v3752, 2.608316e-06
        %v3785 = vmul.f32 %v3753, 2.608316e-06
        %v3786 = vmul.f32 %v3754, 2.608316e-06
        %v3787 = vmul.f32 %v3755, 2.608316e-06
        %v3788 = vmul.f32 %v3756, 2.608316e-06
        %v3789 = vadd.f32 %v3757, -0.0001981069
        %v3790 = vadd.f32 %v3758, -0.0001981069
        %v3791 = vadd.f32 %v3759, -0.0001981069
        %v3792 = vadd.f32 %v3760, -0.0001981069
        %v3793 = vadd.f32 %v3761, -0.0001981069
        %v3794 = vadd.f32 %v3762, -0.0001981069
        %v3795 = vadd.f32 %v3763, -0.0001981069
        %v3796 = vadd.f32 %v3764, -0.0001981069
        %v3797 = vadd.f32 %v3765, -0.0001981069
        %v3798 = vadd.f32 %v3766, -0.0001981069
        %v3799 = vadd.f32 %v3767, -0.0001981069
        %v3800 = vadd.f32 %v3768, -0.0001981069
        %v3801 = vadd.f32 %v3769, -0.0001981069
        %v3802 = vadd.f32 %v3770, -0.0001981069
        %v3803 = vadd.f32 %v3771, -0.0001981069
        %v3804 = vadd.f32 %v3772, -0.0001981069
        %v3805 = vadd.f32 %v3773, -0.0001981069
        %v3806 = vadd.f32 %v3774, -0.0001981069
        %v3807 = vadd.f32 %v3775, -0.0001981069
        %v3808 = vadd.f32 %v3776, -0.0001981069
        %v3809 = vadd.f32 %v3777, -0.0001981069
        %v3810 = vadd.f32 %v3778, -0.0001981069
        %v3811 = vadd.f32 %v3779, -0.0001981069
        %v3812 = vadd.f32 %v3780, -0.0001981069
        %v3813 = vadd.f32 %v3781, -0.0001981069
        %v3814 = vadd.f32 %v3782, -0.0001981069
        %v3815 = vadd.f32 %v3783, -0.0001981069
        %v3816 = vadd.f32 %v3784, -0.0001981069
        %v3817 = vadd.f32 %v3785, -0.0001981069
        %v3818 = vadd.f32 %v3786, -0.0001981069
        %v3819 = vadd.f32 %v3787, -0.0001981069
        %v3820 = vadd.f32 %v3788, -0.0001981069
        %v3821 = vmul.f32 %v3789, %v3725
        %v3822 = vmul.f32 %v3790, %v3726
        %v3823 = vmul.f32 %v3791, %v3727
        %v3824 = vmul.f32 %v3792, %v3728
        %v3825 = vmul.f32 %v3793, %v3729
        %v3826 = vmul.f32 %v3794, %v3730
        %v3827 = vmul.f32 %v3795, %v3731
        %v3828 = vmul.f32 %v3796, %v3732
        %v3829 = vmul.f32 %v3797, %v3733
        %v3830 = vmul.f32 %v3798, %v3734
        %v3831 = vmul.f32 %v3799, %v3735
        %v3832 = vmul.f32 %v3800, %v3736
        %v3833 = vmul.f32 %v3801, %v3737
        %v3834 = vmul.f32 %v3802, %v3738
        %v3835 = vmul.f32 %v3803, %v3739
        %v3836 = vmul.f32 %v3804, %v3740
        %v3837 = vmul.f32 %v3805, %v3741
        %v3838 = vmul.f32 %v3806, %v3742
        %v3839 = vmul.f32 %v3807, %v3743
        %v3840 = vmul.f32 %v3808, %v3744
        %v3841 = vmul.f32 %v3809, %v3745
        %v3842 = vmul.f32 %v3810, %v3746
        %v3843 = vmul.f32 %v3811, %v3747
        %v3844 = vmul.f32 %v3812, %v3748
        %v3845 = vmul.f32 %v3813, %v3749
        %v3846 = vmul.f32 %v3814, %v3750
        %v3847 = vmul.f32 %v3815, %v3751
        %v3848 = vmul.f32 %v3816, %v3752
        %v3849 = vmul.f32 %v3817, %v3753
        %v3850 = vmul.f32 %v3818, %v3754
        %v3851 = vmul.f32 %v3819, %v3755
        %v3852 = vmul.f32 %v3820, %v3756
        %v3853 = vadd.f32 %v3821, 0.008333079
        %v3854 = vadd.f32 %v3822, 0.008333079
        %v3855 = vadd.f32 %v3823, 0.008333079
        %v3856 = vadd.f32 %v3824, 0.008333079
        %v3857 = vadd.f32 %v3825, 0.008333079
        %v3858 = vadd.f32 %v3826, 0.008333079
        %v3859 = vadd.f32 %v3827, 0.008333079
        %v3860 = vadd.f32 %v3828, 0.008333079
        %v3861 = vadd.f32 %v3829, 0.008333079
        %v3862 = vadd.f32 %v3830, 0.008333079
        %v3863 = vadd.f32 %v3831, 0.008333079
        %v3864 = vadd.f32 %v3832, 0.008333079
        %v3865 = vadd.f32 %v3833, 0.008333079
        %v3866 = vadd.f32 %v3834, 0.008333079
        %v3867 = vadd.f32 %v3835, 0.008333079
        %v3868 = vadd.f32 %v3836, 0.008333079
        %v3869 = vadd.f32 %v3837, 0.008333079
        %v3870 = vadd.f32 %v3838, 0.008333079
        %v3871 = vadd.f32 %v3839, 0.008333079
        %v3872 = vadd.f32 %v3840, 0.008333079
        %v3873 = vadd.f32 %v3841, 0.008333079
        %v3874 = vadd.f32 %v3842, 0.008333079
        %v3875 = vadd.f32 %v3843, 0.008333079
        %v3876 = vadd.f32 %v3844, 0.008333079
        %v3877 = vadd.f32 %v3845, 0.008333079
        %v3878 = vadd.f32 %v3846, 0.008333079
        %v3879 = vadd.f32 %v3847, 0.008333079
        %v3880 = vadd.f32 %v3848, 0.008333079
        %v3881 = vadd.f32 %v3849, 0.008333079
        %v3882 = vadd.f32 %v3850, 0.008333079
        %v3883 = vadd.f32 %v3851, 0.008333079
        %v3884 = vadd.f32 %v3852, 0.008333079
        %v3885 = vmul.f32 %v3853, %v3725
        %v3886 = vmul.f32 %v3854, %v3726
        %v3887 = vmul.f32 %v3855, %v3727
        %v3888 = vmul.f32 %v3856, %v3728
        %v3889 = vmul.f32 %v3857, %v3729
        %v3890 = vmul.f32 %v3858, %v3730
        %v3891 = vmul.f32 %v3859, %v3731
        %v3892 = vmul.f32 %v3860, %v3732
        %v3893 = vmul.f32 %v3861, %v3733
        %v3894 = vmul.f32 %v3862, %v3734
        %v3895 = vmul.f32 %v3863, %v3735
        %v3896 = vmul.f32 %v3864, %v3736
        %v3897 = vmul.f32 %v3865, %v3737
        %v3898 = vmul.f32 %v3866, %v3738
        %v3899 = vmul.f32 %v3867, %v3739
        %v3900 = vmul.f32 %v3868, %v3740
        %v3901 = vmul.f32 %v3869, %v3741
        %v3902 = vmul.f32 %v3870, %v3742
        %v3903 = vmul.f32 %v3871, %v3743
        %v3904 = vmul.f32 %v3872, %v3744
        %v3905 = vmul.f32 %v3873, %v3745
        %v3906 = vmul.f32 %v3874, %v3746
        %v3907 = vmul.f32 %v3875, %v3747
        %v3908 = vmul.f32 %v3876, %v3748
        %v3909 = vmul.f32 %v3877, %v3749
        %v3910 = vmul.f32 %v3878, %v3750
        %v3911 = vmul.f32 %v3879, %v3751
        %v3912 = vmul.f32 %v3880, %v3752
        %v3913 = vmul.f32 %v3881, %v3753
        %v3914 = vmul.f32 %v3882, %v3754
        %v3915 = vmul.f32 %v3883, %v3755
        %v3916 = vmul.f32 %v3884, %v3756
        %v3917 = vadd.f32 %v3885, -0.1666666
        %v3918 = vadd.f32 %v3886, -0.1666666
        %v3919 = vadd.f32 %v3887, -0.1666666
        %v3920 = vadd.f32 %v3888, -0.1666666
        %v3921 = vadd.f32 %v3889, -0.1666666
        %v3922 = vadd.f32 %v3890, -0.1666666
        %v3923 = vadd.f32 %v3891, -0.1666666
        %v3924 = vadd.f32 %v3892, -0.1666666
        %v3925 = vadd.f32 %v3893, -0.1666666
        %v3926 = vadd.f32 %v3894, -0.1666666
        %v3927 = vadd.f32 %v3895, -0.1666666
        %v3928 = vadd.f32 %v3896, -0.1666666
        %v3929 = vadd.f32 %v3897, -0.1666666
        %v3930 = vadd.f32 %v3898, -0.1666666
        %v3931 = vadd.f32 %v3899, -0.1666666
        %v3932 = vadd.f32 %v3900, -0.1666666
        %v3933 = vadd.f32 %v3901, -0.1666666
        %v3934 = vadd.f32 %v3902, -0.1666666
        %v3935 = vadd.f32 %v3903, -0.1666666
        %v3936 = vadd.f32 %v3904, -0.1666666
        %v3937 = vadd.f32 %v3905, -0.1666666
        %v3938 = vadd.f32 %v3906, -0.1666666
        %v3939 = vadd.f32 %v3907, -0.1666666
        %v3940 = vadd.f32 %v3908, -0.1666666
        %v3941 = vadd.f32 %v3909, -0.1666666
        %v3942 = vadd.f32 %v3910, -0.1666666
        %v3943 = vadd.f32 %v3911, -0.1666666
        %v3944 = vadd.f32 %v3912, -0.1666666
        %v3945 = vadd.f32 %v3913, -0.1666666
        %v3946 = vadd.f32 %v3914, -0.1666666
        %v3947 = vadd.f32 %v3915, -0.1666666
        %v3948 = vadd.f32 %v3916, -0.1666666
        %v3949 = vmul.f32 %v3501, %v3725
        %v3950 = vmul.f32 %v3502, %v3726
        %v3951 = vmul.f32 %v3503, %v3727
        %v3952 = vmul.f32 %v3504, %v3728
        %v3953 = vmul.f32 %v3505, %v3729
        %v3954 = vmul.f32 %v3506, %v3730
        %v3955 = vmul.f32 %v3507, %v3731
        %v3956 = vmul.f32 %v3508, %v3732
        %v3957 = vmul.f32 %v3509, %v3733
        %v3958 = vmul.f32 %v3510, %v3734
        %v3959 = vmul.f32 %v3511, %v3735
        %v3960 = vmul.f32 %v3512, %v3736
        %v3961 = vmul.f32 %v3513, %v3737
        %v3962 = vmul.f32 %v3514, %v3738
        %v3963 = vmul.f32 %v3515, %v3739
        %v3964 = vmul.f32 %v3516, %v3740
        %v3965 = vmul.f32 %v3517, %v3741
        %v3966 = vmul.f32 %v3518, %v3742
        %v3967 = vmul.f32 %v3519, %v3743
        %v3968 = vmul.f32 %v3520, %v3744
        %v3969 = vmul.f32 %v3521, %v3745
        %v3970 = vmul.f32 %v3522, %v3746
        %v3971 = vmul.f32 %v3523, %v3747
        %v3972 = vmul.f32 %v3524, %v3748
        %v3973 = vmul.f32 %v3525, %v3749
        %v3974 = vmul.f32 %v3526, %v3750
        %v3975 = vmul.f32 %v3527, %v3751
        %v3976 = vmul.f32 %v3528, %v3752
        %v3977 = vmul.f32 %v3529, %v3753
        %v3978 = vmul.f32 %v3530, %v3754
        %v3979 = vmul.f32 %v3531, %v3755
        %v3980 = vmul.f32 %v3532, %v3756
        %v3981 = vmul.f32 %v3949, %v3917
        %v3982 = vmul.f32 %v3950, %v3918
        %v3983 = vmul.f32 %v3951, %v3919
        %v3984 = vmul.f32 %v3952, %v3920
        %v3985 = vmul.f32 %v3953, %v3921
        %v3986 = vmul.f32 %v3954, %v3922
        %v3987 = vmul.f32 %v3955, %v3923
        %v3988 = vmul.f32 %v3956, %v3924
        %v3989 = vmul.f32 %v3957, %v3925
        %v3990 = vmul.f32 %v3958, %v3926
        %v3991 = vmul.f32 %v3959, %v3927
        %v3992 = vmul.f32 %v3960, %v3928
        %v3993 = vmul.f32 %v3961, %v3929
        %v3994 = vmul.f32 %v3962, %v3930
        %v3995 = vmul.f32 %v3963, %v3931
        %v3996 = vmul.f32 %v3964, %v3932
        %v3997 = vmul.f32 %v3965, %v3933
        %v3998 = vmul.f32 %v3966, %v3934
        %v3999 = vmul.f32 %v3967, %v3935
        %v4000 = vmul.f32 %v3968, %v3936
        %v4001 = vmul.f32 %v3969, %v3937
        %v4002 = vmul.f32 %v3970, %v3938
        %v4003 = vmul.f32 %v3971, %v3939
        %v4004 = vmul.f32 %v3972, %v3940
        %v4005 = vmul.f32 %v3973, %v3941
        %v4006 = vmul.f32 %v3974, %v3942
        %v4007 = vmul.f32 %v3975, %v3943
        %v4008 = vmul.f32 %v3976, %v3944
        %v4009 = vmul.f32 %v3977, %v3945
        %v4010 = vmul.f32 %v3978, %v3946
        %v4011 = vmul.f32 %v3979, %v3947
        %v4012 = vmul.f32 %v3980, %v3948
        %v4013 = vadd.f32 %v3501, %v3981
        %v4014 = vadd.f32 %v3502, %v3982
        %v4015 = vadd.f32 %v3503, %v3983
        %v4016 = vadd.f32 %v3504, %v3984
        %v4017 = vadd.f32 %v3505, %v3985
        %v4018 = vadd.f32 %v3506, %v3986
        %v4019 = vadd.f32 %v3507, %v3987
        %v4020 = vadd.f32 %v3508, %v3988
        %v4021 = vadd.f32 %v3509, %v3989
        %v4022 = vadd.f32 %v3510, %v3990
        %v4023 = vadd.f32 %v3511, %v3991
        %v4024 = vadd.f32 %v3512, %v3992
        %v4025 = vadd.f32 %v3513, %v3993
        %v4026 = vadd.f32 %v3514, %v3994
        %v4027 = vadd.f32 %v3515, %v3995
        %v4028 = vadd.f32 %v3516, %v3996
        %v4029 = vadd.f32 %v3517, %v3997
        %v4030 = vadd.f32 %v3518, %v3998
        %v4031 = vadd.f32 %v3519, %v3999
        %v4032 = vadd.f32 %v3520, %v4000
        %v4033 = vadd.f32 %v3521, %v4001
        %v4034 = vadd.f32 %v3522, %v4002
        %v4035 = vadd.f32 %v3523, %v4003
        %v4036 = vadd.f32 %v3524, %v4004
        %v4037 = vadd.f32 %v3525, %v4005
        %v4038 = vadd.f32 %v3526, %v4006
        %v4039 = vadd.f32 %v3527, %v4007
        %v4040 = vadd.f32 %v3528, %v4008
        %v4041 = vadd.f32 %v3529, %v4009
        %v4042 = vadd.f32 %v3530, %v4010
        %v4043 = vadd.f32 %v3531, %v4011
        %v4044 = vadd.f32 %v3532, %v4012
        %v4045 = vmul.f32 %v3693, %v4013
        %v4046 = vmul.f32 %v3694, %v4014
        %v4047 = vmul.f32 %v3695, %v4015
        %v4048 = vmul.f32 %v3696, %v4016
        %v4049 = vmul.f32 %v3697, %v4017
        %v4050 = vmul.f32 %v3698, %v4018
        %v4051 = vmul.f32 %v3699, %v4019
        %v4052 = vmul.f32 %v3700, %v4020
        %v4053 = vmul.f32 %v3701, %v4021
        %v4054 = vmul.f32 %v3702, %v4022
        %v4055 = vmul.f32 %v3703, %v4023
        %v4056 = vmul.f32 %v3704, %v4024
        %v4057 = vmul.f32 %v3705, %v4025
        %v4058 = vmul.f32 %v3706, %v4026
        %v4059 = vmul.f32 %v3707, %v4027
        %v4060 = vmul.f32 %v3708, %v4028
        %v4061 = vmul.f32 %v3709, %v4029
        %v4062 = vmul.f32 %v3710, %v4030
        %v4063 = vmul.f32 %v3711, %v4031
        %v4064 = vmul.f32 %v3712, %v4032
        %v4065 = vmul.f32 %v3713, %v4033
        %v4066 = vmul.f32 %v3714, %v4034
        %v4067 = vmul.f32 %v3715, %v4035
        %v4068 = vmul.f32 %v3716, %v4036
        %v4069 = vmul.f32 %v3717, %v4037
        %v4070 = vmul.f32 %v3718, %v4038
        %v4071 = vmul.f32 %v3719, %v4039
        %v4072 = vmul.f32 %v3720, %v4040
        %v4073 = vmul.f32 %v3721, %v4041
        %v4074 = vmul.f32 %v3722, %v4042
        %v4075 = vmul.f32 %v3723, %v4043
        %v4076 = vmul.f32 %v3724, %v4044
        %v4077 = vld [vmem:[%s7] sm:$0x1]
        %v4078 = vld [vmem:[#allocation2] sm:$0x1]
        %4080 = vset.pattern.permute.xlu0 0
        %4081 = vperm.xlu0 %4080, %v4078
        %v4082 = vpop.permute.xlu0 %4081
        %v4084 = vlaneseq
        %v4085 = vshrl.u32 %v4084, 7
        %v4086 = vsub.s32 0, %v4085
        %v4087 = vrot.slane %v4082, %v4086
        %v4089 = vsel %vm1648, %v4077, 0
        %4091 = vmatprep.subr.mxu0 %v4046
        %4092 = vmatpush1.msra.mxu0 %v4045
        %4093 = vmatprep.subr.mxu0 %v4054
        %4094 = vmatpush1.msra.mxu0 %v4053
        %4095 = vmatprep.subr.mxu0 %v4062
        %4096 = vmatpush1.msra.mxu0 %v4061
        %4097 = vmatprep.subr.mxu0 %v4070
        %4098 = vmatpush1.msra.mxu0 %v4069
        %4099 = vmatprep.subr.mxu0 0.0
        %4100 = vmatpush1.msra.mxu0 0.0
        %4101 = vmatprep.subr.mxu0 0.0
        %4102 = vmatpush1.msra.mxu0 0.0
        %4103 = vmatprep.subr.mxu0 0.0
        %4104 = vmatpush1.msra.mxu0 0.0
        %4105 = vmatprep.subr.mxu0 0.0
        %4106 = vmatpush1.msra.mxu0 0.0
        %4107 = vmatprep.subr.mxu0 0.0
        %4108 = vmatpush1.msra.mxu0 0.0
        %4109 = vmatprep.subr.mxu0 0.0
        %4110 = vmatpush1.msra.mxu0 0.0
        %4111 = vmatprep.subr.mxu0 0.0
        %4112 = vmatpush1.msra.mxu0 0.0
        %4113 = vmatprep.subr.mxu0 0.0
        %4114 = vmatpush1.msra.mxu0 0.0
        %4115 = vmatprep.subr.mxu0 0.0
        %4116 = vmatpush1.msra.mxu0 0.0
        %4117 = vmatprep.subr.mxu0 0.0
        %4118 = vmatpush1.msra.mxu0 0.0
        %4119 = vmatprep.subr.mxu0 0.0
        %4120 = vmatpush1.msra.mxu0 0.0
        %4121 = vmatprep.subr.mxu0 0.0
        %4122 = vmatpush1.msra.mxu0 0.0
        %4123 = vmatprep.subr.mxu0 0.0
        %4124 = vmatpush1.msra.mxu0 0.0
        %4125 = vmatprep.subr.mxu0 0.0
        %4126 = vmatpush1.msra.mxu0 0.0
        %4127 = vmatprep.subr.mxu0 0.0
        %4128 = vmatpush1.msra.mxu0 0.0
        %4129 = vmatprep.subr.mxu0 0.0
        %4130 = vmatpush1.msra.mxu0 0.0
        %4131 = vmatprep.subr.mxu0 0.0
        %4132 = vmatpush1.msra.mxu0 0.0
        %4133 = vmatprep.subr.mxu0 0.0
        %4134 = vmatpush1.msra.mxu0 0.0
        %4135 = vmatprep.subr.mxu0 0.0
        %4136 = vmatpush1.msra.mxu0 0.0
        %4137 = vmatprep.subr.mxu0 0.0
        %4138 = vmatpush1.msra.mxu0 0.0
        %4139 = vmatprep.subr.mxu0 0.0
        %4140 = vmatpush1.msra.mxu0 0.0
        %4141 = vmatprep.subr.mxu0 0.0
        %4142 = vmatpush1.msra.mxu0 0.0
        %4143 = vmatprep.subr.mxu0 0.0
        %4144 = vmatpush1.msra.mxu0 0.0
        %4145 = vmatprep.subr.mxu0 0.0
        %4146 = vmatpush1.msra.mxu0 0.0
        %4147 = vmatprep.subr.mxu0 0.0
        %4148 = vmatpush1.msra.mxu0 0.0
        %4149 = vmatprep.subr.mxu0 0.0
        %4150 = vmatpush1.msra.mxu0 0.0
        %4151 = vmatprep.subr.mxu0 0.0
        %4152 = vmatpush1.msra.mxu0 0.0
        %4153 = vmatprep.subr.mxu0 0.0
        %4154 = vmatpush1.msra.mxu0 0.0
        %4155 = vmatprep.mubr.f32.mxu0 0.0
        %4156 = vmatmul.mubr.f32.gmra.mrb[0].mxu0 %v4089
        %v4157 = vpop.f32.mrb[0].mxu0
        %v4158 = vadd.f32 %v4087, %v4157
        %v4159 = vpop.f32.mrb[0].mxu0
        %v4160 = vadd.f32 %v4087, %v4159
        %4161 = vdwg.mxu0
        %4162 = vmatprep.subr.mxu0 %v4048
        %4163 = vmatpush1.msra.mxu0 %v4047
        %4164 = vmatprep.subr.mxu0 %v4056
        %4165 = vmatpush1.msra.mxu0 %v4055
        %4166 = vmatprep.subr.mxu0 %v4064
        %4167 = vmatpush1.msra.mxu0 %v4063
        %4168 = vmatprep.subr.mxu0 %v4072
        %4169 = vmatpush1.msra.mxu0 %v4071
        %4170 = vmatprep.subr.mxu0 0.0
        %4171 = vmatpush1.msra.mxu0 0.0
        %4172 = vmatprep.subr.mxu0 0.0
        %4173 = vmatpush1.msra.mxu0 0.0
        %4174 = vmatprep.subr.mxu0 0.0
        %4175 = vmatpush1.msra.mxu0 0.0
        %4176 = vmatprep.subr.mxu0 0.0
        %4177 = vmatpush1.msra.mxu0 0.0
        %4178 = vmatprep.subr.mxu0 0.0
        %4179 = vmatpush1.msra.mxu0 0.0
        %4180 = vmatprep.subr.mxu0 0.0
        %4181 = vmatpush1.msra.mxu0 0.0
        %4182 = vmatprep.subr.mxu0 0.0
        %4183 = vmatpush1.msra.mxu0 0.0
        %4184 = vmatprep.subr.mxu0 0.0
        %4185 = vmatpush1.msra.mxu0 0.0
        %4186 = vmatprep.subr.mxu0 0.0
        %4187 = vmatpush1.msra.mxu0 0.0
        %4188 = vmatprep.subr.mxu0 0.0
        %4189 = vmatpush1.msra.mxu0 0.0
        %4190 = vmatprep.subr.mxu0 0.0
        %4191 = vmatpush1.msra.mxu0 0.0
        %4192 = vmatprep.subr.mxu0 0.0
        %4193 = vmatpush1.msra.mxu0 0.0
        %4194 = vmatprep.subr.mxu0 0.0
        %4195 = vmatpush1.msra.mxu0 0.0
        %4196 = vmatprep.subr.mxu0 0.0
        %4197 = vmatpush1.msra.mxu0 0.0
        %4198 = vmatprep.subr.mxu0 0.0
        %4199 = vmatpush1.msra.mxu0 0.0
        %4200 = vmatprep.subr.mxu0 0.0
        %4201 = vmatpush1.msra.mxu0 0.0
        %4202 = vmatprep.subr.mxu0 0.0
        %4203 = vmatpush1.msra.mxu0 0.0
        %4204 = vmatprep.subr.mxu0 0.0
        %4205 = vmatpush1.msra.mxu0 0.0
        %4206 = vmatprep.subr.mxu0 0.0
        %4207 = vmatpush1.msra.mxu0 0.0
        %4208 = vmatprep.subr.mxu0 0.0
        %4209 = vmatpush1.msra.mxu0 0.0
        %4210 = vmatprep.subr.mxu0 0.0
        %4211 = vmatpush1.msra.mxu0 0.0
        %4212 = vmatprep.subr.mxu0 0.0
        %4213 = vmatpush1.msra.mxu0 0.0
        %4214 = vmatprep.subr.mxu0 0.0
        %4215 = vmatpush1.msra.mxu0 0.0
        %4216 = vmatprep.subr.mxu0 0.0
        %4217 = vmatpush1.msra.mxu0 0.0
        %4218 = vmatprep.subr.mxu0 0.0
        %4219 = vmatpush1.msra.mxu0 0.0
        %4220 = vmatprep.subr.mxu0 0.0
        %4221 = vmatpush1.msra.mxu0 0.0
        %4222 = vmatprep.subr.mxu0 0.0
        %4223 = vmatpush1.msra.mxu0 0.0
        %4224 = vmatprep.subr.mxu0 0.0
        %4225 = vmatpush1.msra.mxu0 0.0
        %4226 = vmatprep.mubr.f32.mxu0 0.0
        %4227 = vmatmul.mubr.f32.gmra.mrb[0].mxu0 %v4089
        %v4228 = vpop.f32.mrb[0].mxu0
        %v4229 = vadd.f32 %v4087, %v4228
        %v4230 = vpop.f32.mrb[0].mxu0
        %v4231 = vadd.f32 %v4087, %v4230
        %4232 = vdwg.mxu0
        %4233 = vmatprep.subr.mxu0 %v4050
        %4234 = vmatpush1.msra.mxu0 %v4049
        %4235 = vmatprep.subr.mxu0 %v4058
        %4236 = vmatpush1.msra.mxu0 %v4057
        %4237 = vmatprep.subr.mxu0 %v4066
        %4238 = vmatpush1.msra.mxu0 %v4065
        %4239 = vmatprep.subr.mxu0 %v4074
        %4240 = vmatpush1.msra.mxu0 %v4073
        %4241 = vmatprep.subr.mxu0 0.0
        %4242 = vmatpush1.msra.mxu0 0.0
        %4243 = vmatprep.subr.mxu0 0.0
        %4244 = vmatpush1.msra.mxu0 0.0
        %4245 = vmatprep.subr.mxu0 0.0
        %4246 = vmatpush1.msra.mxu0 0.0
        %4247 = vmatprep.subr.mxu0 0.0
        %4248 = vmatpush1.msra.mxu0 0.0
        %4249 = vmatprep.subr.mxu0 0.0
        %4250 = vmatpush1.msra.mxu0 0.0
        %4251 = vmatprep.subr.mxu0 0.0
        %4252 = vmatpush1.msra.mxu0 0.0
        %4253 = vmatprep.subr.mxu0 0.0
        %4254 = vmatpush1.msra.mxu0 0.0
        %4255 = vmatprep.subr.mxu0 0.0
        %4256 = vmatpush1.msra.mxu0 0.0
        %4257 = vmatprep.subr.mxu0 0.0
        %4258 = vmatpush1.msra.mxu0 0.0
        %4259 = vmatprep.subr.mxu0 0.0
        %4260 = vmatpush1.msra.mxu0 0.0
        %4261 = vmatprep.subr.mxu0 0.0
        %4262 = vmatpush1.msra.mxu0 0.0
        %4263 = vmatprep.subr.mxu0 0.0
        %4264 = vmatpush1.msra.mxu0 0.0
        %4265 = vmatprep.subr.mxu0 0.0
        %4266 = vmatpush1.msra.mxu0 0.0
        %4267 = vmatprep.subr.mxu0 0.0
        %4268 = vmatpush1.msra.mxu0 0.0
        %4269 = vmatprep.subr.mxu0 0.0
        %4270 = vmatpush1.msra.mxu0 0.0
        %4271 = vmatprep.subr.mxu0 0.0
        %4272 = vmatpush1.msra.mxu0 0.0
        %4273 = vmatprep.subr.mxu0 0.0
        %4274 = vmatpush1.msra.mxu0 0.0
        %4275 = vmatprep.subr.mxu0 0.0
        %4276 = vmatpush1.msra.mxu0 0.0
        %4277 = vmatprep.subr.mxu0 0.0
        %4278 = vmatpush1.msra.mxu0 0.0
        %4279 = vmatprep.subr.mxu0 0.0
        %4280 = vmatpush1.msra.mxu0 0.0
        %4281 = vmatprep.subr.mxu0 0.0
        %4282 = vmatpush1.msra.mxu0 0.0
        %4283 = vmatprep.subr.mxu0 0.0
        %4284 = vmatpush1.msra.mxu0 0.0
        %4285 = vmatprep.subr.mxu0 0.0
        %4286 = vmatpush1.msra.mxu0 0.0
        %4287 = vmatprep.subr.mxu0 0.0
        %4288 = vmatpush1.msra.mxu0 0.0
        %4289 = vmatprep.subr.mxu0 0.0
        %4290 = vmatpush1.msra.mxu0 0.0
        %4291 = vmatprep.subr.mxu0 0.0
        %4292 = vmatpush1.msra.mxu0 0.0
        %4293 = vmatprep.subr.mxu0 0.0
        %4294 = vmatpush1.msra.mxu0 0.0
        %4295 = vmatprep.subr.mxu0 0.0
        %4296 = vmatpush1.msra.mxu0 0.0
        %4297 = vmatprep.mubr.f32.mxu0 0.0
        %4298 = vmatmul.mubr.f32.gmra.mrb[0].mxu0 %v4089
        %v4299 = vpop.f32.mrb[0].mxu0
        %v4300 = vadd.f32 %v4087, %v4299
        %v4301 = vpop.f32.mrb[0].mxu0
        %v4302 = vadd.f32 %v4087, %v4301
        %4303 = vdwg.mxu0
        %4304 = vmatprep.subr.mxu0 %v4052
        %4305 = vmatpush1.msra.mxu0 %v4051
        %4306 = vmatprep.subr.mxu0 %v4060
        %4307 = vmatpush1.msra.mxu0 %v4059
        %4308 = vmatprep.subr.mxu0 %v4068
        %4309 = vmatpush1.msra.mxu0 %v4067
        %4310 = vmatprep.subr.mxu0 %v4076
        %4311 = vmatpush1.msra.mxu0 %v4075
        %4312 = vmatprep.subr.mxu0 0.0
        %4313 = vmatpush1.msra.mxu0 0.0
        %4314 = vmatprep.subr.mxu0 0.0
        %4315 = vmatpush1.msra.mxu0 0.0
        %4316 = vmatprep.subr.mxu0 0.0
        %4317 = vmatpush1.msra.mxu0 0.0
        %4318 = vmatprep.subr.mxu0 0.0
        %4319 = vmatpush1.msra.mxu0 0.0
        %4320 = vmatprep.subr.mxu0 0.0
        %4321 = vmatpush1.msra.mxu0 0.0
        %4322 = vmatprep.subr.mxu0 0.0
        %4323 = vmatpush1.msra.mxu0 0.0
        %4324 = vmatprep.subr.mxu0 0.0
        %4325 = vmatpush1.msra.mxu0 0.0
        %4326 = vmatprep.subr.mxu0 0.0
        %4327 = vmatpush1.msra.mxu0 0.0
        %4328 = vmatprep.subr.mxu0 0.0
        %4329 = vmatpush1.msra.mxu0 0.0
        %4330 = vmatprep.subr.mxu0 0.0
        %4331 = vmatpush1.msra.mxu0 0.0
        %4332 = vmatprep.subr.mxu0 0.0
        %4333 = vmatpush1.msra.mxu0 0.0
        %4334 = vmatprep.subr.mxu0 0.0
        %4335 = vmatpush1.msra.mxu0 0.0
        %4336 = vmatprep.subr.mxu0 0.0
        %4337 = vmatpush1.msra.mxu0 0.0
        %4338 = vmatprep.subr.mxu0 0.0
        %4339 = vmatpush1.msra.mxu0 0.0
        %4340 = vmatprep.subr.mxu0 0.0
        %4341 = vmatpush1.msra.mxu0 0.0
        %4342 = vmatprep.subr.mxu0 0.0
        %4343 = vmatpush1.msra.mxu0 0.0
        %4344 = vmatprep.subr.mxu0 0.0
        %4345 = vmatpush1.msra.mxu0 0.0
        %4346 = vmatprep.subr.mxu0 0.0
        %4347 = vmatpush1.msra.mxu0 0.0
        %4348 = vmatprep.subr.mxu0 0.0
        %4349 = vmatpush1.msra.mxu0 0.0
        %4350 = vmatprep.subr.mxu0 0.0
        %4351 = vmatpush1.msra.mxu0 0.0
        %4352 = vmatprep.subr.mxu0 0.0
        %4353 = vmatpush1.msra.mxu0 0.0
        %4354 = vmatprep.subr.mxu0 0.0
        %4355 = vmatpush1.msra.mxu0 0.0
        %4356 = vmatprep.subr.mxu0 0.0
        %4357 = vmatpush1.msra.mxu0 0.0
        %4358 = vmatprep.subr.mxu0 0.0
        %4359 = vmatpush1.msra.mxu0 0.0
        %4360 = vmatprep.subr.mxu0 0.0
        %4361 = vmatpush1.msra.mxu0 0.0
        %4362 = vmatprep.subr.mxu0 0.0
        %4363 = vmatpush1.msra.mxu0 0.0
        %4364 = vmatprep.subr.mxu0 0.0
        %4365 = vmatpush1.msra.mxu0 0.0
        %4366 = vmatprep.subr.mxu0 0.0
        %4367 = vmatpush1.msra.mxu0 0.0
        %4368 = vmatprep.mubr.f32.mxu0 0.0
        %4369 = vmatmul.mubr.f32.gmra.mrb[0].mxu0 %v4089
        %v4370 = vpop.f32.mrb[0].mxu0
        %v4371 = vadd.f32 %v4087, %v4370
        %v4372 = vpop.f32.mrb[0].mxu0
        %v4373 = vadd.f32 %v4087, %v4372
        %4374 = vdwg.mxu0
        %v4383 = vcombine.low %v4158, %v4160
        %v4384 = vcombine.low %v4229, %v4231
        %v4385 = vcombine.low %v4300, %v4302
        %v4386 = vcombine.low %v4371, %v4373
        %v4388 = vunpack.c.l.s4 1966171168
        %v4389 = vunpack.c.0.s8 %v4388
        %v4390 = vlaneseq
        %v4391 = vshrl.u32 %v4390, 7
        %v4392 = vsub.s32 %v4389, %v4391
        %v4393 = vrot.slane %v4383, %v4392
        %v4395 = vunpack.c.l.s4 1966171168
        %v4396 = vunpack.c.0.s8 %v4395
        %v4397 = vlaneseq
        %v4398 = vshrl.u32 %v4397, 7
        %v4399 = vsub.s32 %v4396, %v4398
        %v4400 = vrot.slane %v4384, %v4399
        %v4402 = vunpack.c.l.s4 1966171168
        %v4403 = vunpack.c.0.s8 %v4402
        %v4404 = vlaneseq
        %v4405 = vshrl.u32 %v4404, 7
        %v4406 = vsub.s32 %v4403, %v4405
        %v4407 = vrot.slane %v4385, %v4406
        %v4409 = vunpack.c.l.s4 1966171168
        %v4410 = vunpack.c.0.s8 %v4409
        %v4411 = vlaneseq
        %v4412 = vshrl.u32 %v4411, 7
        %v4413 = vsub.s32 %v4410, %v4412
        %v4414 = vrot.slane %v4386, %v4413
        %v4415 = vcombine.low %v4393, %v4400
        %v4416 = vcombine.low %v4407, %v4414
        %v4418 = vunpack.c.l.s4 1966171168
        %v4419 = vunpack.c.0.s8 %v4418
        %v4420 = vlaneseq
        %v4421 = vshrl.u32 %v4420, 7
        %v4422 = vsub.s32 %v4419, %v4421
        %v4423 = vrot.slane %v4415, %v4422
        %v4425 = vunpack.c.l.s4 1966171168
        %v4426 = vunpack.c.0.s8 %v4425
        %v4427 = vlaneseq
        %v4428 = vshrl.u32 %v4427, 7
        %v4429 = vsub.s32 %v4426, %v4428
        %v4430 = vrot.slane %v4416, %v4429
        %v4431 = vcombine.low %v4423, %v4430
        %4433 = vst [vmem:[%s328] sm:$0xff] %v4431
        %s4434 = sand.u32 %s227, 1
        %s4435 = scalar_lea.sflag [#allocation4], %s4434
        %s4436 = sand.u32 %s227, 1
        %s4437 = smul.addr %s4436, 8
        %s4438 = scalar_lea.vmem [#allocation3], %s4437
        // Predicated region
        $region57: #{tpu_custom_call.1} parent=55 // pred_check
          %p4439 = pneg %p237
        $region58: #{tpu_custom_call.1} parent=55 // pred_check_branch
          %4441 = sbr.rel (%p4439) target = $region60
        $region59: #{tpu_custom_call.1} parent=55 // pred_region
          %s4442 = smul.u32 8, %s25
          %s4444 = ssub.s32 128, 128
          %4445 = vsyncadd %s4435, %s4444
          %s4446 = smul.addr %s4442, 16
          %s4447 = scalar_lea.hbm %s9, %s4446
          %s4449 = sshll.u32 %s4438, 4
          %s4450 = int_to_ptr.vmem [resolvable:$true] %s4449
          %4452 = dma.vmem_to_hbm [thread:$0]  %s4450, 128, %s4447, %s4435
        $region60: #{tpu_custom_call.1} parent=55 // pred_fallthru
          _
      $region56: #{tpu_custom_call.1} parent=5 // pred_fallthru
        _
      %p4453 = scmp.le.s32.totalorder 2, %s20
      // Predicated region
      $region61: #{tpu_custom_call.1} parent=5 // pred_check
        %p4454 = pneg %p4453
      $region62: #{tpu_custom_call.1} parent=5 // pred_check_branch
        %4456 = sbr.rel (%p4454) target = $region64
      $region63: #{tpu_custom_call.1} parent=5 // pred_region
        %s4457 = ssub.s32 %s20, 2
        // Predicated region
        $region65: #{tpu_custom_call.1} parent=63 // pred_check
          %p4458 = pneg %p243
        $region66: #{tpu_custom_call.1} parent=63 // pred_check_branch
          %4460 = sbr.rel (%p4458) target = $region68
        $region67: #{tpu_custom_call.1} parent=63 // pred_region
          %s4461 = sand.u32 %s228, 1
          %s4462 = scalar_lea.sflag [#allocation4], %s4461
          %s4463 = sand.u32 %s228, 1
          %s4464 = smul.addr %s4463, 8
          %s4465 = scalar_lea.vmem [#allocation3], %s4464
          %4466 = dma.done %s4462, 128
        $region68: #{tpu_custom_call.1} parent=63 // pred_fallthru
          _
      $region64: #{tpu_custom_call.1} parent=5 // pred_fallthru
        _
    $region6: #{tpu_custom_call.1} parent=1 // loop_footer
      %s24 = sadd.s32 1, %s20
    $region7: #{tpu_custom_call.1} parent=1 // loop_footer_branch
      %19 = sbr.rel target = $region3
    $region8: #{tpu_custom_call.1} parent=1 // loop_exit
      _
    %4467 = vsyncpa [#allocation4], 1
    %s4468 = scalar_lea.sflag [#allocation4], 1
    %4469 = vsyncpa %s4468, 1

</llo_original>
